<compile_context>
chip_gen: v5e
topology: v5e:2x2
jax: 0.10.0
libtpu: 0.0.40
codegen_flags: <defaults>
</compile_context>

<pallas_src>
import jax
import jax.numpy as jnp
from jax.experimental import pallas as pl
from jax.experimental.pallas import tpu as pltpu

EPS = 1e-5
ST0_MEAN = 140.37047
ST0_STD = 18.81198

# Small, module-consistent dims.
X_DIM = 12
H_DIM = 32
Z_DIM = 16
N_LAYERS = 1      # TODO(synk): kernel implements the n_layers=1 GRU case only.
T_STEPS = 8
BATCH = 2         # logical batch
BATCH_PAD = 8     # padded to one full sublane group; pad rows masked out of losses
NR = T_STEPS * BATCH_PAD

SLAB_W = 128      # packed output lane width (120 used + 8 pad); also weight-slab width

# ------------------------------------------------------------------ raw weights
WEIGHT_NAMES = [
    "phi_x_w1", "phi_x_b1", "phi_x_w2", "phi_x_b2",
    "phi_z_w", "phi_z_b",
    "enc_w1x", "enc_w1h", "enc_b1", "enc_w2", "enc_b2",
    "enc_mean_w", "enc_mean_b", "enc_std_w", "enc_std_b",
    "prior_w", "prior_b", "prior_mean_w", "prior_mean_b", "prior_std_w", "prior_std_b",
    "dec_w1z", "dec_w1h", "dec_b1", "dec_w2", "dec_b2",
    "dec_std_w", "dec_std_b",
    "dec_mean_w1", "dec_mean_b1", "dec_mean_w2", "dec_mean_b2",
    "gru_wxr", "gru_wxz", "gru_wxn",
    "gru_wzr", "gru_wzz", "gru_wzn",
    "gru_whr", "gru_whz", "gru_whn",
]


def init_weights(key):
    shapes = {
        "phi_x_w1": (X_DIM, H_DIM), "phi_x_b1": (1, H_DIM),
        "phi_x_w2": (H_DIM, H_DIM), "phi_x_b2": (1, H_DIM),
        "phi_z_w": (Z_DIM, H_DIM), "phi_z_b": (1, H_DIM),
        "enc_w1x": (H_DIM, H_DIM), "enc_w1h": (H_DIM, H_DIM), "enc_b1": (1, H_DIM),
        "enc_w2": (H_DIM, H_DIM), "enc_b2": (1, H_DIM),
        "enc_mean_w": (H_DIM, Z_DIM), "enc_mean_b": (1, Z_DIM),
        "enc_std_w": (H_DIM, Z_DIM), "enc_std_b": (1, Z_DIM),
        "prior_w": (H_DIM, H_DIM), "prior_b": (1, H_DIM),
        "prior_mean_w": (H_DIM, Z_DIM), "prior_mean_b": (1, Z_DIM),
        "prior_std_w": (H_DIM, Z_DIM), "prior_std_b": (1, Z_DIM),
        "dec_w1z": (H_DIM, H_DIM), "dec_w1h": (H_DIM, H_DIM), "dec_b1": (1, H_DIM),
        "dec_w2": (H_DIM, H_DIM), "dec_b2": (1, H_DIM),
        "dec_std_w": (H_DIM, X_DIM), "dec_std_b": (1, X_DIM),
        "dec_mean_w1": (H_DIM, X_DIM), "dec_mean_b1": (1, X_DIM),
        "dec_mean_w2": (X_DIM, X_DIM), "dec_mean_b2": (1, X_DIM),
        "gru_wxr": (H_DIM, H_DIM), "gru_wxz": (H_DIM, H_DIM), "gru_wxn": (H_DIM, H_DIM),
        "gru_wzr": (H_DIM, H_DIM), "gru_wzz": (H_DIM, H_DIM), "gru_wzn": (H_DIM, H_DIM),
        "gru_whr": (H_DIM, H_DIM), "gru_whz": (H_DIM, H_DIM), "gru_whn": (H_DIM, H_DIM),
    }
    ws = {}
    for name in WEIGHT_NAMES:
        key, sub = jax.random.split(key)
        ws[name] = 0.1 * jax.random.normal(sub, shapes[name], dtype=jnp.float32)
    return ws


# ------------------------------------------------------------------ fused weight slab
# One host-packed (rows, 128) f32 slab; each piece padded to an 8-row boundary.
SLAB_PIECES = [
    ("phi_x_w1", X_DIM, H_DIM), ("phi_x_b1", 1, H_DIM),
    ("phi_x_w2", H_DIM, H_DIM), ("phi_x_b2", 1, H_DIM),
    ("phi_pre_w", H_DIM, 4 * H_DIM),     # [enc_w1x | gru_wxr | gru_wxz | gru_wxn]
    ("pre_b", 1, 4 * H_DIM),             # [enc_b1  | 0 ...]
    ("enc_h_w", H_DIM, 4 * H_DIM),       # [enc_w1h | gru_whr | gru_whz | gru_whn]
    ("enc_w2", H_DIM, H_DIM), ("enc_b2", 1, H_DIM),
    ("enc_head_w", H_DIM, 2 * Z_DIM), ("enc_head_b", 1, 2 * Z_DIM),
    ("phi_z_w", Z_DIM, H_DIM), ("phi_z_b", 1, H_DIM),
    ("gru_wz", H_DIM, 3 * H_DIM),        # [gru_wzr | gru_wzz | gru_wzn]
    ("prior_w", H_DIM, H_DIM), ("prior_b", 1, H_DIM),
    ("prior_head_w", H_DIM, 2 * Z_DIM), ("prior_head_b", 1, 2 * Z_DIM),
    ("dec_w1z", H_DIM, H_DIM), ("dec_w1h", H_DIM, H_DIM), ("dec_b1", 1, H_DIM),
    ("dec_w2", H_DIM, H_DIM), ("dec_b2", 1, H_DIM),
    ("dec_head_w", H_DIM, 2 * X_DIM), ("dec_head_b", 1, 2 * X_DIM),
    ("dec_mean_w2", X_DIM, X_DIM), ("dec_mean_b2", 1, X_DIM),
]


def _build_layout():
    layout, row = {}, 0
    for name, r, c in SLAB_PIECES:
        layout[name] = (row, r, c)
        row += ((r + 7) // 8) * 8
    return layout, row


SLAB_LAYOUT, SLAB_ROWS = _build_layout()


def pack_weight_slab(w):
    """Host-side fusion of the PyTorch-style parameterization into one (rows,128) slab."""
    p = {}
    p["phi_x_w1"], p["phi_x_b1"] = w["phi_x_w1"], w["phi_x_b1"]
    p["phi_x_w2"], p["phi_x_b2"] = w["phi_x_w2"], w["phi_x_b2"]
    gru_wx_x = jnp.concatenate([w["gru_wxr"], w["gru_wxz"], w["gru_wxn"]], axis=1)   # (H,3H)
    p["phi_pre_w"] = jnp.concatenate([w["enc_w1x"], gru_wx_x], axis=1)               # (H,4H)
    p["pre_b"] = jnp.concatenate(
        [w["enc_b1"], jnp.zeros((1, 3 * H_DIM), jnp.float32)], axis=1)               # (1,4H)
    gru_wh = jnp.concatenate([w["gru_whr"], w["gru_whz"], w["gru_whn"]], axis=1)     # (H,3H)
    p["enc_h_w"] = jnp.concatenate([w["enc_w1h"], gru_wh], axis=1)                   # (H,4H)
    p["enc_w2"], p["enc_b2"] = w["enc_w2"], w["enc_b2"]
    p["enc_head_w"] = jnp.concatenate([w["enc_mean_w"], w["enc_std_w"]], axis=1)     # (H,2Z)
    p["enc_head_b"] = jnp.concatenate([w["enc_mean_b"], w["enc_std_b"]], axis=1)
    p["phi_z_w"], p["phi_z_b"] = w["phi_z_w"], w["phi_z_b"]
    p["gru_wz"] = jnp.concatenate([w["gru_wzr"], w["gru_wzz"], w["gru_wzn"]], axis=1)
    p["prior_w"], p["prior_b"] = w["prior_w"], w["prior_b"]
    p["prior_head_w"] = jnp.concatenate([w["prior_mean_w"], w["prior_std_w"]], axis=1)
    p["prior_head_b"] = jnp.concatenate([w["prior_mean_b"], w["prior_std_b"]], axis=1)
    p["dec_w1z"], p["dec_w1h"], p["dec_b1"] = w["dec_w1z"], w["dec_w1h"], w["dec_b1"]
    p["dec_w2"], p["dec_b2"] = w["dec_w2"], w["dec_b2"]
    p["dec_head_w"] = jnp.concatenate([w["dec_mean_w1"], w["dec_std_w"]], axis=1)    # (H,2X)
    p["dec_head_b"] = jnp.concatenate([w["dec_mean_b1"], w["dec_std_b"]], axis=1)
    p["dec_mean_w2"], p["dec_mean_b2"] = w["dec_mean_w2"], w["dec_mean_b2"]

    slab = jnp.zeros((SLAB_ROWS, SLAB_W), jnp.float32)
    for name, r, c in SLAB_PIECES:
        row, _, _ = SLAB_LAYOUT[name]
        slab = slab.at[row:row + r, :c].set(p[name].astype(jnp.float32))
    return slab


# ------------------------------------------------------------------ kernel
def vrnn_kernel(x_ref, eps_ref, w_ref, out_ref, loss_ref,
                pre_scr, h_scr, em_scr, es_scr, z_scr, pz_scr):
    f32 = jnp.float32
    relu = lambda v: jnp.maximum(v, 0.0)
    softplus = jax.nn.softplus

    def W(name):
        row, r, c = SLAB_LAYOUT[name]
        return w_ref[row:row + r, 0:c]

    def dot(a, b):
        return jnp.dot(a, b, preferred_element_type=f32)

    # ---- batched prologue: phi_x and its enc / GRU contributions (off critical path)
    x_all = x_ref[...]                                               # (T*BP, X)
    p1 = relu(dot(x_all, W("phi_x_w1")) + W("phi_x_b1"))
    phi_x_all = relu(dot(p1, W("phi_x_w2")) + W("phi_x_b2"))         # (T*BP, H)
    # lanes [:H]  = phi_x @ enc_w1x + enc_b1   (encoder first-layer x-contribution)
    # lanes [H:]  = phi_x @ [wxr|wxz|wxn]      (GRU input-gate x-contribution)
    pre_scr[...] = dot(phi_x_all, W("phi_pre_w")) + W("pre_b")       # (T*BP, 128)

    # ---- serial recurrence (statically unrolled, only recurrence-critical math) ----
    h = jnp.zeros((BATCH_PAD, H_DIM), f32)                           # h[-1]
    h_scr[0:BATCH_PAD, :] = h
    for t in range(T_STEPS):
        r0 = t * BATCH_PAD
        pre_t = pre_scr[r0:r0 + BATCH_PAD, :]                        # (BP, 128)
        eps_t = eps_ref[r0:r0 + BATCH_PAD, :]                        # (BP, Z)

        # single lane-dense h matmul: [enc h-contrib | gh_r | gh_z | gh_n]
        hw = dot(h, W("enc_h_w"))                                    # (BP, 128)

        # encoder on concat([phi_x, h[-1]]) (concat folded into two matmul halves)
        e1 = relu(pre_t[:, :H_DIM] + hw[:, :H_DIM])
        enc_t = relu(dot(e1, W("enc_w2")) + W("enc_b2"))
        eh = dot(enc_t, W("enc_head_w")) + W("enc_head_b")           # (BP, 2Z)
        enc_mean_t = eh[:, :Z_DIM]
        enc_std_t = softplus(eh[:, Z_DIM:])

        # reparameterized sample (noise precomputed outside, deterministic)
        z_t = eps_t * enc_std_t + enc_mean_t
        phi_z_t = relu(dot(z_t, W("phi_z_w")) + W("phi_z_b"))

        # GRU cell (bias=False); input = concat([phi_x, phi_z]); gates [r | z | n]
        gx = pre_t[:, H_DIM:] + dot(phi_z_t, W("gru_wz"))            # (BP, 3H)
        gh = hw[:, H_DIM:]                                           # (BP, 3H)
        r = jax.nn.sigmoid(gx[:, :H_DIM] + gh[:, :H_DIM])
        zg = jax.nn.sigmoid(gx[:, H_DIM:2 * H_DIM] + gh[:, H_DIM:2 * H_DIM])
        n = jnp.tanh(gx[:, 2 * H_DIM:] + r * gh[:, 2 * H_DIM:])
        h = (1.0 - zg) * n + zg * h

        # stream per-step results to VMEM scratch (no Python-list accumulation)
        h_scr[r0 + BATCH_PAD:r0 + 2 * BATCH_PAD, :] = h
        em_scr[r0:r0 + BATCH_PAD, :] = enc_mean_t
        es_scr[r0:r0 + BATCH_PAD, :] = enc_std_t
        z_scr[r0:r0 + BATCH_PAD, :] = z_t
        pz_scr[r0:r0 + BATCH_PAD, :] = phi_z_t

    # ---- deferred, non-recurrent math, vectorized over all T*BP rows ----
    h_prev_all = h_scr[0:NR, :]                                      # h[-1] per step
    h_all = h_scr[BATCH_PAD:NR + BATCH_PAD, :]                       # h after each step
    em_all = em_scr[...]
    es_all = es_scr[...]
    z_all = z_scr[...]
    pz_all = pz_scr[...]
    x_all = x_ref[...]

    # prior on h[-1]
    prior_t = relu(dot(h_prev_all, W("prior_w")) + W("prior_b"))
    ph = dot(prior_t, W("prior_head_w")) + W("prior_head_b")         # (NR, 2Z)
    prior_mean = ph[:, :Z_DIM]
    prior_std = softplus(ph[:, Z_DIM:])

    # decoder on concat([phi_z, h[-1]]) -- first layer split so no lane concat needed
    d1 = relu(dot(pz_all, W("dec_w1z")) + dot(h_prev_all, W("dec_w1h")) + W("dec_b1"))
    dec_t = relu(dot(d1, W("dec_w2")) + W("dec_b2"))
    dh = dot(dec_t, W("dec_head_w")) + W("dec_head_b")               # (NR, 2X) = [mean1|std]
    dec_mean = dot(relu(dh[:, :X_DIM]), W("dec_mean_w2")) + W("dec_mean_b2")
    dec_std = softplus(dh[:, X_DIM:])

    # losses (same formulas as _kld_gauss / _nll_gauss / F.mse_loss(reduction='sum'))
    std1 = jnp.maximum(es_all, 1e-9)      # torch.clamp(min=1e-9)
    std2 = jnp.maximum(prior_std, 1e-9)
    var1 = std1 * std1
    var2 = std2 * std2
    inv_var2 = pl.reciprocal(var2)
    kld_elem = (jnp.log(var2 * pl.reciprocal(var1))
                + (var1 + (em_all - prior_mean) ** 2) * inv_var2 - 1.0)
    inv_2var_d = pl.reciprocal(2.0 * dec_std * dec_std)
    nll_elem = (jnp.log(dec_std + EPS) + jnp.log(2.0 * jnp.pi) / 2.0
                + (x_all - dec_mean) ** 2 * inv_2var_d)
    rec_elem = (dec_mean - x_all) ** 2

    # mask the pad rows (rows BATCH..BATCH_PAD-1 of each step) out of the sums
    rowid = jax.lax.broadcasted_iota(jnp.int32, (NR, 1), 0)
    validf = ((rowid & (BATCH_PAD - 1)) < BATCH).astype(f32)

    loss_ref[0] = 0.5 * jnp.sum(kld_elem * validf)   # kld_loss
    loss_ref[1] = jnp.sum(nll_elem * validf)         # nll_loss
    loss_ref[2] = jnp.sum(rec_elem * validf)         # rec_loss (sum-reduced MSE)

    # single lane-dense packed output slab: 32+16+16+16+12+12+16 = 120 lanes + 8 pad
    pad = jnp.zeros((NR, SLAB_W - 120), f32)
    out_ref[...] = jnp.concatenate(
        [h_all, em_all, es_all, z_all, dec_mean, dec_std, kld_elem, pad], axis=-1)


# ------------------------------------------------------------------ wrapper
def vrnn_forward(sx, eps, weights, x_mean, x_std):
    # TODO(synk): ScatteringNet (kymatio wavelet scattering) has no clean Pallas
    # equivalent; `sx` stands in for its output Sx with shape (B, 1, 13, T).
    # --- preprocessing glue (plain JAX, jitted together with the kernel call) ---
    x_t0 = (sx[:, :, 0:1, :] - ST0_MEAN) / ST0_STD
    x_t1 = (jnp.log(sx[:, :, 1:13, :] + 1e-4)
            - x_mean.reshape(1, 1, 12, 1)) / x_std.reshape(1, 1, 12, 1)
    x = jnp.concatenate([x_t0, x_t1], axis=2)                        # (B, 1, 13, T)
    # squeeze(1).permute(2,0,1)[:, :, 0:x_dim] — same channel truncation as the reference
    x = jnp.transpose(x[:, 0], (2, 0, 1))[:, :, :X_DIM].astype(jnp.float32)   # (T, B, X)

    # pad the batch dim 2 -> 8 (one sublane group); pad rows are masked inside the kernel
    xp = jnp.zeros((T_STEPS, BATCH_PAD, X_DIM), jnp.float32).at[:, :BATCH, :].set(x)
    ep = jnp.zeros((T_STEPS, BATCH_PAD, Z_DIM), jnp.float32).at[:, :BATCH, :].set(
        eps.astype(jnp.float32))
    x2d = xp.reshape(NR, X_DIM)
    eps2d = ep.reshape(NR, Z_DIM)

    w_slab = pack_weight_slab(weights)

    vmem = pl.BlockSpec(memory_space=pltpu.VMEM)
    slab, losses = pl.pallas_call(
        vrnn_kernel,
        out_shape=(
            jax.ShapeDtypeStruct((NR, SLAB_W), jnp.float32),   # packed per-step outputs
            jax.ShapeDtypeStruct((3,), jnp.float32),           # [kld, nll, rec]
        ),
        in_specs=[vmem, vmem, vmem],
        out_specs=(vmem, pl.BlockSpec(memory_space=pltpu.SMEM)),
        scratch_shapes=[
            pltpu.VMEM((NR, SLAB_W), jnp.float32),                 # phi_pre (e1x | gx_x)
            pltpu.VMEM((NR + BATCH_PAD, H_DIM), jnp.float32),      # h chain (h_prev/h views)
            pltpu.VMEM((NR, Z_DIM), jnp.float32),                  # enc_mean
            pltpu.VMEM((NR, Z_DIM), jnp.float32),                  # enc_std
            pltpu.VMEM((NR, Z_DIM), jnp.float32),                  # z
            pltpu.VMEM((NR, H_DIM), jnp.float32),                  # phi_z
        ],
    )(x2d, eps2d, w_slab)

    slab = slab.reshape(T_STEPS, BATCH_PAD, SLAB_W)[:, :BATCH, :]
    h_all     = slab[..., 0:32]
    enc_mean  = slab[..., 32:48]
    enc_std   = slab[..., 48:64]
    z_lat     = slab[..., 64:80]
    dec_mean  = slab[..., 80:92]
    dec_std   = slab[..., 92:104]
    kld_elems = slab[..., 104:120]
    return x, (h_all, enc_mean, enc_std, z_lat, dec_mean, dec_std, kld_elems, losses)


if __name__ == "__main__":
    key = jax.random.PRNGKey(0)
    k_w, k_sx, k_eps, k_m, k_s = jax.random.split(key, 5)

    weights = init_weights(k_w)

    # Synthetic (positive) scattering output Sx, PyTorch-style (B, C=1, 13, T).
    sx = jax.random.uniform(k_sx, (BATCH, 1, 13, T_STEPS),
                            dtype=jnp.float32, minval=0.1, maxval=200.0)
    # Precomputed reparameterization noise (deterministic stand-in for torch randn).
    eps = jax.random.normal(k_eps, (T_STEPS, BATCH, Z_DIM), dtype=jnp.float32)
    # log_stat[0][1:13], log_stat[1][1:13]
    x_mean = jax.random.normal(k_m, (12,), dtype=jnp.float32)
    x_std = jnp.abs(jax.random.normal(k_s, (12,), dtype=jnp.float32)) + 0.5

    fwd = jax.jit(vrnn_forward)
    scattering_original, outs = fwd(sx, eps, weights, x_mean, x_std)
    outs = jax.block_until_ready(outs)
    (h_all, enc_mean, enc_std, z_lat, dec_mean, dec_std, kld_elems, losses) = outs

    assert scattering_original.shape == (T_STEPS, BATCH, X_DIM)
    assert h_all.shape == (T_STEPS, BATCH, H_DIM)
    assert enc_mean.shape == (T_STEPS, BATCH, Z_DIM)
    assert enc_std.shape == (T_STEPS, BATCH, Z_DIM)
    assert z_lat.shape == (T_STEPS, BATCH, Z_DIM)
    assert dec_mean.shape == (T_STEPS, BATCH, X_DIM)
    assert dec_std.shape == (T_STEPS, BATCH, X_DIM)
    assert kld_elems.shape == (T_STEPS, BATCH, Z_DIM)
    assert losses.shape == (3,)
    assert all(bool(jnp.all(jnp.isfinite(o))) for o in outs)

    print("KERNEL_OK")
</pallas_src>

<mosaic_0001>
module attributes {stable_mosaic.version = 11 : i64} {
  func.func @vrnn_kernel(%arg0: memref<64x12xf32, #tpu.memory_space<vmem>>, %arg1: memref<64x16xf32, #tpu.memory_space<vmem>>, %arg2: memref<528x128xf32, #tpu.memory_space<vmem>>, %arg3: memref<64x128xf32, #tpu.memory_space<vmem>>, %arg4: memref<3xf32, #tpu.memory_space<smem>>, %arg5: memref<64x128xf32, #tpu.memory_space<vmem>>, %arg6: memref<72x32xf32, #tpu.memory_space<vmem>>, %arg7: memref<64x16xf32, #tpu.memory_space<vmem>>, %arg8: memref<64x16xf32, #tpu.memory_space<vmem>>, %arg9: memref<64x16xf32, #tpu.memory_space<vmem>>, %arg10: memref<64x32xf32, #tpu.memory_space<vmem>>) attributes {dimension_semantics = [], scalar_prefetch = 0 : i64, scratch_operands = 6 : i64, tpu.core_type = #tpu.core_type<tc>} {
    %c0 = arith.constant 0 : index
    %c0_0 = arith.constant 0 : index
    %0 = vector.load %arg0[%c0, %c0_0] : memref<64x12xf32, #tpu.memory_space<vmem>>, vector<64x12xf32>
    %c0_1 = arith.constant 0 : index
    %c0_2 = arith.constant 0 : index
    %1 = vector.load %arg2[%c0_1, %c0_2] : memref<528x128xf32, #tpu.memory_space<vmem>>, vector<12x32xf32>
    %cst = arith.constant dense<0.000000e+00> : vector<64x32xf32>
    %2 = tpu.matmul %0, %1, %cst {dimension_numbers = #tpu.dot_dimension_numbers<[1], [0], [0], [1], [0, 0, 1, 1], [], []>} : vector<64x12xf32>, vector<12x32xf32>, vector<64x32xf32> -> vector<64x32xf32>
    %c16 = arith.constant 16 : index
    %c0_3 = arith.constant 0 : index
    %3 = vector.load %arg2[%c16, %c0_3] : memref<528x128xf32, #tpu.memory_space<vmem>>, vector<1x32xf32>
    %4 = vector.broadcast %3 : vector<1x32xf32> to vector<64x32xf32>
    %5 = arith.addf %2, %4 : vector<64x32xf32>
    %cst_4 = arith.constant 0.000000e+00 : f32
    %6 = vector.broadcast %cst_4 : f32 to vector<64x32xf32>
    %7 = arith.maximumf %5, %6 : vector<64x32xf32>
    %c24 = arith.constant 24 : index
    %c0_5 = arith.constant 0 : index
    %8 = vector.load %arg2[%c24, %c0_5] : memref<528x128xf32, #tpu.memory_space<vmem>>, vector<32x32xf32>
    %cst_6 = arith.constant dense<0.000000e+00> : vector<64x32xf32>
    %9 = tpu.matmul %7, %8, %cst_6 {dimension_numbers = #tpu.dot_dimension_numbers<[1], [0], [0], [1], [0, 0, 1, 1], [], []>} : vector<64x32xf32>, vector<32x32xf32>, vector<64x32xf32> -> vector<64x32xf32>
    %c56 = arith.constant 56 : index
    %c0_7 = arith.constant 0 : index
    %10 = vector.load %arg2[%c56, %c0_7] : memref<528x128xf32, #tpu.memory_space<vmem>>, vector<1x32xf32>
    %11 = vector.broadcast %10 : vector<1x32xf32> to vector<64x32xf32>
    %12 = arith.addf %9, %11 : vector<64x32xf32>
    %cst_8 = arith.constant 0.000000e+00 : f32
    %13 = vector.broadcast %cst_8 : f32 to vector<64x32xf32>
    %14 = arith.maximumf %12, %13 : vector<64x32xf32>
    %c64 = arith.constant 64 : index
    %c0_9 = arith.constant 0 : index
    %15 = vector.load %arg2[%c64, %c0_9] : memref<528x128xf32, #tpu.memory_space<vmem>>, vector<32x128xf32>
    %cst_10 = arith.constant dense<0.000000e+00> : vector<64x128xf32>
    %16 = tpu.matmul %14, %15, %cst_10 {dimension_numbers = #tpu.dot_dimension_numbers<[1], [0], [0], [1], [0, 0, 1, 1], [], []>} : vector<64x32xf32>, vector<32x128xf32>, vector<64x128xf32> -> vector<64x128xf32>
    %c96 = arith.constant 96 : index
    %c0_11 = arith.constant 0 : index
    %17 = vector.load %arg2[%c96, %c0_11] : memref<528x128xf32, #tpu.memory_space<vmem>>, vector<1x128xf32>
    %18 = vector.broadcast %17 : vector<1x128xf32> to vector<64x128xf32>
    %19 = arith.addf %16, %18 : vector<64x128xf32>
    %c0_12 = arith.constant 0 : index
    %c0_13 = arith.constant 0 : index
    %20 = vector.load %arg5[%c0_12, %c0_13] : memref<64x128xf32, #tpu.memory_space<vmem>>, vector<64x128xf32>
    tpu.vector_store %arg5[%c0_12, %c0_13], %19 {strides = array<i32>} : memref<64x128xf32, #tpu.memory_space<vmem>>, vector<64x128xf32>,
    %cst_14 = arith.constant 0.000000e+00 : f32
    %21 = vector.broadcast %cst_14 : f32 to vector<8x32xf32>
    %c0_15 = arith.constant 0 : index
    %c0_16 = arith.constant 0 : index
    %22 = vector.load %arg6[%c0_15, %c0_16] : memref<72x32xf32, #tpu.memory_space<vmem>>, vector<8x32xf32>
    tpu.vector_store %arg6[%c0_15, %c0_16], %21 {strides = array<i32>} : memref<72x32xf32, #tpu.memory_space<vmem>>, vector<8x32xf32>,
    %c0_17 = arith.constant 0 : index
    %c0_18 = arith.constant 0 : index
    %23 = vector.load %arg5[%c0_17, %c0_18] : memref<64x128xf32, #tpu.memory_space<vmem>>, vector<8x128xf32>
    %c0_19 = arith.constant 0 : index
    %c0_20 = arith.constant 0 : index
    %24 = vector.load %arg1[%c0_19, %c0_20] : memref<64x16xf32, #tpu.memory_space<vmem>>, vector<8x16xf32>
    %c104 = arith.constant 104 : index
    %c0_21 = arith.constant 0 : index
    %25 = vector.load %arg2[%c104, %c0_21] : memref<528x128xf32, #tpu.memory_space<vmem>>, vector<32x128xf32>
    %cst_22 = arith.constant dense<0.000000e+00> : vector<8x128xf32>
    %26 = tpu.matmul %21, %25, %cst_22 {dimension_numbers = #tpu.dot_dimension_numbers<[1], [0], [0], [1], [0, 0, 1, 1], [], []>} : vector<8x32xf32>, vector<32x128xf32>, vector<8x128xf32> -> vector<8x128xf32>
    %27 = vector.extract_strided_slice %23 {offsets = [0, 0], sizes = [8, 32], strides = [1, 1]} : vector<8x128xf32> to vector<8x32xf32>
    %28 = vector.extract_strided_slice %26 {offsets = [0, 0], sizes = [8, 32], strides = [1, 1]} : vector<8x128xf32> to vector<8x32xf32>
    %29 = arith.addf %27, %28 : vector<8x32xf32>
    %cst_23 = arith.constant 0.000000e+00 : f32
    %30 = vector.broadcast %cst_23 : f32 to vector<8x32xf32>
    %31 = arith.maximumf %29, %30 : vector<8x32xf32>
    %c136 = arith.constant 136 : index
    %c0_24 = arith.constant 0 : index
    %32 = vector.load %arg2[%c136, %c0_24] : memref<528x128xf32, #tpu.memory_space<vmem>>, vector<32x32xf32>
    %cst_25 = arith.constant dense<0.000000e+00> : vector<8x32xf32>
    %33 = tpu.matmul %31, %32, %cst_25 {dimension_numbers = #tpu.dot_dimension_numbers<[1], [0], [0], [1], [0, 0, 1, 1], [], []>} : vector<8x32xf32>, vector<32x32xf32>, vector<8x32xf32> -> vector<8x32xf32>
    %c168 = arith.constant 168 : index
    %c0_26 = arith.constant 0 : index
    %34 = vector.load %arg2[%c168, %c0_26] : memref<528x128xf32, #tpu.memory_space<vmem>>, vector<1x32xf32>
    %35 = vector.broadcast %34 : vector<1x32xf32> to vector<8x32xf32>
    %36 = arith.addf %33, %35 : vector<8x32xf32>
    %cst_27 = arith.constant 0.000000e+00 : f32
    %37 = vector.broadcast %cst_27 : f32 to vector<8x32xf32>
    %38 = arith.maximumf %36, %37 : vector<8x32xf32>
    %c176 = arith.constant 176 : index
    %c0_28 = arith.constant 0 : index
    %39 = vector.load %arg2[%c176, %c0_28] : memref<528x128xf32, #tpu.memory_space<vmem>>, vector<32x32xf32>
    %cst_29 = arith.constant dense<0.000000e+00> : vector<8x32xf32>
    %40 = tpu.matmul %38, %39, %cst_29 {dimension_numbers = #tpu.dot_dimension_numbers<[1], [0], [0], [1], [0, 0, 1, 1], [], []>} : vector<8x32xf32>, vector<32x32xf32>, vector<8x32xf32> -> vector<8x32xf32>
    %c208 = arith.constant 208 : index
    %c0_30 = arith.constant 0 : index
    %41 = vector.load %arg2[%c208, %c0_30] : memref<528x128xf32, #tpu.memory_space<vmem>>, vector<1x32xf32>
    %42 = vector.broadcast %41 : vector<1x32xf32> to vector<8x32xf32>
    %43 = arith.addf %40, %42 : vector<8x32xf32>
    %44 = vector.extract_strided_slice %43 {offsets = [0, 0], sizes = [8, 16], strides = [1, 1]} : vector<8x32xf32> to vector<8x16xf32>
    %45 = vector.extract_strided_slice %43 {offsets = [0, 16], sizes = [8, 16], strides = [1, 1]} : vector<8x32xf32> to vector<8x16xf32>
    %cst_31 = arith.constant 0.000000e+00 : f32
    %46 = vector.broadcast %cst_31 : f32 to vector<8x16xf32>
    %47 = arith.maximumf %45, %46 : vector<8x16xf32>
    %48 = vector.broadcast %cst_31 : f32 to vector<8x16xf32>
    %49 = arith.subf %45, %48 : vector<8x16xf32>
    %50 = arith.cmpf one, %49, %49 : vector<8x16xf32>
    %51 = vector.broadcast %cst_31 : f32 to vector<8x16xf32>
    %52 = arith.addf %45, %51 : vector<8x16xf32>
    %53 = math.absf %49 : vector<8x16xf32>
    %cst_32 = arith.constant 0.000000e+00 : f32
    %54 = vector.broadcast %cst_32 : f32 to vector<8x16xf32>
    %55 = arith.subf %54, %53 : vector<8x16xf32>
    %56 = math.exp %55 : vector<8x16xf32>
    %57 = math.log1p %56 : vector<8x16xf32>
    %58 = arith.addf %47, %57 : vector<8x16xf32>
    %59 = arith.select %50, %52, %58 : vector<8x16xi1>, vector<8x16xf32>
    %60 = arith.mulf %24, %59 : vector<8x16xf32>
    %61 = arith.addf %60, %44 : vector<8x16xf32>
    %c216 = arith.constant 216 : index
    %c0_33 = arith.constant 0 : index
    %62 = vector.load %arg2[%c216, %c0_33] : memref<528x128xf32, #tpu.memory_space<vmem>>, vector<16x32xf32>
    %cst_34 = arith.constant dense<0.000000e+00> : vector<8x32xf32>
    %63 = tpu.matmul %61, %62, %cst_34 {dimension_numbers = #tpu.dot_dimension_numbers<[1], [0], [0], [1], [0, 0, 1, 1], [], []>} : vector<8x16xf32>, vector<16x32xf32>, vector<8x32xf32> -> vector<8x32xf32>
    %c232 = arith.constant 232 : index
    %c0_35 = arith.constant 0 : index
    %64 = vector.load %arg2[%c232, %c0_35] : memref<528x128xf32, #tpu.memory_space<vmem>>, vector<1x32xf32>
    %65 = vector.broadcast %64 : vector<1x32xf32> to vector<8x32xf32>
    %66 = arith.addf %63, %65 : vector<8x32xf32>
    %cst_36 = arith.constant 0.000000e+00 : f32
    %67 = vector.broadcast %cst_36 : f32 to vector<8x32xf32>
    %68 = arith.maximumf %66, %67 : vector<8x32xf32>
    %69 = vector.extract_strided_slice %23 {offsets = [0, 32], sizes = [8, 96], strides = [1, 1]} : vector<8x128xf32> to vector<8x96xf32>
    %c240 = arith.constant 240 : index
    %c0_37 = arith.constant 0 : index
    %70 = vector.load %arg2[%c240, %c0_37] : memref<528x128xf32, #tpu.memory_space<vmem>>, vector<32x96xf32>
    %cst_38 = arith.constant dense<0.000000e+00> : vector<8x96xf32>
    %71 = tpu.matmul %68, %70, %cst_38 {dimension_numbers = #tpu.dot_dimension_numbers<[1], [0], [0], [1], [0, 0, 1, 1], [], []>} : vector<8x32xf32>, vector<32x96xf32>, vector<8x96xf32> -> vector<8x96xf32>
    %72 = arith.addf %69, %71 : vector<8x96xf32>
    %73 = vector.extract_strided_slice %26 {offsets = [0, 32], sizes = [8, 96], strides = [1, 1]} : vector<8x128xf32> to vector<8x96xf32>
    %74 = vector.extract_strided_slice %72 {offsets = [0, 0], sizes = [8, 32], strides = [1, 1]} : vector<8x96xf32> to vector<8x32xf32>
    %75 = vector.extract_strided_slice %73 {offsets = [0, 0], sizes = [8, 32], strides = [1, 1]} : vector<8x96xf32> to vector<8x32xf32>
    %76 = arith.addf %74, %75 : vector<8x32xf32>
    %77 = arith.negf %76 : vector<8x32xf32>
    %78 = math.exp %77 : vector<8x32xf32>
    %cst_39 = arith.constant 1.000000e+00 : f32
    %79 = vector.broadcast %cst_39 : f32 to vector<8x32xf32>
    %80 = arith.addf %79, %78 : vector<8x32xf32>
    %81 = arith.divf %79, %80 : vector<8x32xf32>
    %82 = vector.extract_strided_slice %72 {offsets = [0, 32], sizes = [8, 32], strides = [1, 1]} : vector<8x96xf32> to vector<8x32xf32>
    %83 = vector.extract_strided_slice %73 {offsets = [0, 32], sizes = [8, 32], strides = [1, 1]} : vector<8x96xf32> to vector<8x32xf32>
    %84 = arith.addf %82, %83 : vector<8x32xf32>
    %85 = arith.negf %84 : vector<8x32xf32>
    %86 = math.exp %85 : vector<8x32xf32>
    %cst_40 = arith.constant 1.000000e+00 : f32
    %87 = vector.broadcast %cst_40 : f32 to vector<8x32xf32>
    %88 = arith.addf %87, %86 : vector<8x32xf32>
    %89 = arith.divf %87, %88 : vector<8x32xf32>
    %90 = vector.extract_strided_slice %72 {offsets = [0, 64], sizes = [8, 32], strides = [1, 1]} : vector<8x96xf32> to vector<8x32xf32>
    %91 = vector.extract_strided_slice %73 {offsets = [0, 64], sizes = [8, 32], strides = [1, 1]} : vector<8x96xf32> to vector<8x32xf32>
    %92 = arith.mulf %81, %91 : vector<8x32xf32>
    %93 = arith.addf %90, %92 : vector<8x32xf32>
    %94 = math.tanh %93 : vector<8x32xf32>
    %cst_41 = arith.constant 1.000000e+00 : f32
    %95 = vector.broadcast %cst_41 : f32 to vector<8x32xf32>
    %96 = arith.subf %95, %89 : vector<8x32xf32>
    %97 = arith.mulf %96, %94 : vector<8x32xf32>
    %98 = arith.mulf %89, %21 : vector<8x32xf32>
    %99 = arith.addf %97, %98 : vector<8x32xf32>
    %c8 = arith.constant 8 : index
    %c0_42 = arith.constant 0 : index
    %100 = vector.load %arg6[%c8, %c0_42] : memref<72x32xf32, #tpu.memory_space<vmem>>, vector<8x32xf32>
    tpu.vector_store %arg6[%c8, %c0_42], %99 {strides = array<i32>} : memref<72x32xf32, #tpu.memory_space<vmem>>, vector<8x32xf32>,
    %c0_43 = arith.constant 0 : index
    %c0_44 = arith.constant 0 : index
    %101 = vector.load %arg7[%c0_43, %c0_44] : memref<64x16xf32, #tpu.memory_space<vmem>>, vector<8x16xf32>
    tpu.vector_store %arg7[%c0_43, %c0_44], %44 {strides = array<i32>} : memref<64x16xf32, #tpu.memory_space<vmem>>, vector<8x16xf32>,
    %c0_45 = arith.constant 0 : index
    %c0_46 = arith.constant 0 : index
    %102 = vector.load %arg8[%c0_45, %c0_46] : memref<64x16xf32, #tpu.memory_space<vmem>>, vector<8x16xf32>
    tpu.vector_store %arg8[%c0_45, %c0_46], %59 {strides = array<i32>} : memref<64x16xf32, #tpu.memory_space<vmem>>, vector<8x16xf32>,
    %c0_47 = arith.constant 0 : index
    %c0_48 = arith.constant 0 : index
    %103 = vector.load %arg9[%c0_47, %c0_48] : memref<64x16xf32, #tpu.memory_space<vmem>>, vector<8x16xf32>
    tpu.vector_store %arg9[%c0_47, %c0_48], %61 {strides = array<i32>} : memref<64x16xf32, #tpu.memory_space<vmem>>, vector<8x16xf32>,
    %c0_49 = arith.constant 0 : index
    %c0_50 = arith.constant 0 : index
    %104 = vector.load %arg10[%c0_49, %c0_50] : memref<64x32xf32, #tpu.memory_space<vmem>>, vector<8x32xf32>
    tpu.vector_store %arg10[%c0_49, %c0_50], %68 {strides = array<i32>} : memref<64x32xf32, #tpu.memory_space<vmem>>, vector<8x32xf32>,
    %c8_51 = arith.constant 8 : index
    %c0_52 = arith.constant 0 : index
    %105 = vector.load %arg5[%c8_51, %c0_52] : memref<64x128xf32, #tpu.memory_space<vmem>>, vector<8x128xf32>
    %c8_53 = arith.constant 8 : index
    %c0_54 = arith.constant 0 : index
    %106 = vector.load %arg1[%c8_53, %c0_54] : memref<64x16xf32, #tpu.memory_space<vmem>>, vector<8x16xf32>
    %c104_55 = arith.constant 104 : index
    %c0_56 = arith.constant 0 : index
    %107 = vector.load %arg2[%c104_55, %c0_56] : memref<528x128xf32, #tpu.memory_space<vmem>>, vector<32x128xf32>
    %cst_57 = arith.constant dense<0.000000e+00> : vector<8x128xf32>
    %108 = tpu.matmul %99, %107, %cst_57 {dimension_numbers = #tpu.dot_dimension_numbers<[1], [0], [0], [1], [0, 0, 1, 1], [], []>} : vector<8x32xf32>, vector<32x128xf32>, vector<8x128xf32> -> vector<8x128xf32>
    %109 = vector.extract_strided_slice %105 {offsets = [0, 0], sizes = [8, 32], strides = [1, 1]} : vector<8x128xf32> to vector<8x32xf32>
    %110 = vector.extract_strided_slice %108 {offsets = [0, 0], sizes = [8, 32], strides = [1, 1]} : vector<8x128xf32> to vector<8x32xf32>
    %111 = arith.addf %109, %110 : vector<8x32xf32>
    %cst_58 = arith.constant 0.000000e+00 : f32
    %112 = vector.broadcast %cst_58 : f32 to vector<8x32xf32>
    %113 = arith.maximumf %111, %112 : vector<8x32xf32>
    %c136_59 = arith.constant 136 : index
    %c0_60 = arith.constant 0 : index
    %114 = vector.load %arg2[%c136_59, %c0_60] : memref<528x128xf32, #tpu.memory_space<vmem>>, vector<32x32xf32>
    %cst_61 = arith.constant dense<0.000000e+00> : vector<8x32xf32>
    %115 = tpu.matmul %113, %114, %cst_61 {dimension_numbers = #tpu.dot_dimension_numbers<[1], [0], [0], [1], [0, 0, 1, 1], [], []>} : vector<8x32xf32>, vector<32x32xf32>, vector<8x32xf32> -> vector<8x32xf32>
    %c168_62 = arith.constant 168 : index
    %c0_63 = arith.constant 0 : index
    %116 = vector.load %arg2[%c168_62, %c0_63] : memref<528x128xf32, #tpu.memory_space<vmem>>, vector<1x32xf32>
    %117 = vector.broadcast %116 : vector<1x32xf32> to vector<8x32xf32>
    %118 = arith.addf %115, %117 : vector<8x32xf32>
    %cst_64 = arith.constant 0.000000e+00 : f32
    %119 = vector.broadcast %cst_64 : f32 to vector<8x32xf32>
    %120 = arith.maximumf %118, %119 : vector<8x32xf32>
    %c176_65 = arith.constant 176 : index
    %c0_66 = arith.constant 0 : index
    %121 = vector.load %arg2[%c176_65, %c0_66] : memref<528x128xf32, #tpu.memory_space<vmem>>, vector<32x32xf32>
    %cst_67 = arith.constant dense<0.000000e+00> : vector<8x32xf32>
    %122 = tpu.matmul %120, %121, %cst_67 {dimension_numbers = #tpu.dot_dimension_numbers<[1], [0], [0], [1], [0, 0, 1, 1], [], []>} : vector<8x32xf32>, vector<32x32xf32>, vector<8x32xf32> -> vector<8x32xf32>
    %c208_68 = arith.constant 208 : index
    %c0_69 = arith.constant 0 : index
    %123 = vector.load %arg2[%c208_68, %c0_69] : memref<528x128xf32, #tpu.memory_space<vmem>>, vector<1x32xf32>
    %124 = vector.broadcast %123 : vector<1x32xf32> to vector<8x32xf32>
    %125 = arith.addf %122, %124 : vector<8x32xf32>
    %126 = vector.extract_strided_slice %125 {offsets = [0, 0], sizes = [8, 16], strides = [1, 1]} : vector<8x32xf32> to vector<8x16xf32>
    %127 = vector.extract_strided_slice %125 {offsets = [0, 16], sizes = [8, 16], strides = [1, 1]} : vector<8x32xf32> to vector<8x16xf32>
    %cst_70 = arith.constant 0.000000e+00 : f32
    %128 = vector.broadcast %cst_70 : f32 to vector<8x16xf32>
    %129 = arith.maximumf %127, %128 : vector<8x16xf32>
    %130 = vector.broadcast %cst_70 : f32 to vector<8x16xf32>
    %131 = arith.subf %127, %130 : vector<8x16xf32>
    %132 = arith.cmpf one, %131, %131 : vector<8x16xf32>
    %133 = vector.broadcast %cst_70 : f32 to vector<8x16xf32>
    %134 = arith.addf %127, %133 : vector<8x16xf32>
    %135 = math.absf %131 : vector<8x16xf32>
    %cst_71 = arith.constant 0.000000e+00 : f32
    %136 = vector.broadcast %cst_71 : f32 to vector<8x16xf32>
    %137 = arith.subf %136, %135 : vector<8x16xf32>
    %138 = math.exp %137 : vector<8x16xf32>
    %139 = math.log1p %138 : vector<8x16xf32>
    %140 = arith.addf %129, %139 : vector<8x16xf32>
    %141 = arith.select %132, %134, %140 : vector<8x16xi1>, vector<8x16xf32>
    %142 = arith.mulf %106, %141 : vector<8x16xf32>
    %143 = arith.addf %142, %126 : vector<8x16xf32>
    %c216_72 = arith.constant 216 : index
    %c0_73 = arith.constant 0 : index
    %144 = vector.load %arg2[%c216_72, %c0_73] : memref<528x128xf32, #tpu.memory_space<vmem>>, vector<16x32xf32>
    %cst_74 = arith.constant dense<0.000000e+00> : vector<8x32xf32>
    %145 = tpu.matmul %143, %144, %cst_74 {dimension_numbers = #tpu.dot_dimension_numbers<[1], [0], [0], [1], [0, 0, 1, 1], [], []>} : vector<8x16xf32>, vector<16x32xf32>, vector<8x32xf32> -> vector<8x32xf32>
    %c232_75 = arith.constant 232 : index
    %c0_76 = arith.constant 0 : index
    %146 = vector.load %arg2[%c232_75, %c0_76] : memref<528x128xf32, #tpu.memory_space<vmem>>, vector<1x32xf32>
    %147 = vector.broadcast %146 : vector<1x32xf32> to vector<8x32xf32>
    %148 = arith.addf %145, %147 : vector<8x32xf32>
    %cst_77 = arith.constant 0.000000e+00 : f32
    %149 = vector.broadcast %cst_77 : f32 to vector<8x32xf32>
    %150 = arith.maximumf %148, %149 : vector<8x32xf32>
    %151 = vector.extract_strided_slice %105 {offsets = [0, 32], sizes = [8, 96], strides = [1, 1]} : vector<8x128xf32> to vector<8x96xf32>
    %c240_78 = arith.constant 240 : index
    %c0_79 = arith.constant 0 : index
    %152 = vector.load %arg2[%c240_78, %c0_79] : memref<528x128xf32, #tpu.memory_space<vmem>>, vector<32x96xf32>
    %cst_80 = arith.constant dense<0.000000e+00> : vector<8x96xf32>
    %153 = tpu.matmul %150, %152, %cst_80 {dimension_numbers = #tpu.dot_dimension_numbers<[1], [0], [0], [1], [0, 0, 1, 1], [], []>} : vector<8x32xf32>, vector<32x96xf32>, vector<8x96xf32> -> vector<8x96xf32>
    %154 = arith.addf %151, %153 : vector<8x96xf32>
    %155 = vector.extract_strided_slice %108 {offsets = [0, 32], sizes = [8, 96], strides = [1, 1]} : vector<8x128xf32> to vector<8x96xf32>
    %156 = vector.extract_strided_slice %154 {offsets = [0, 0], sizes = [8, 32], strides = [1, 1]} : vector<8x96xf32> to vector<8x32xf32>
    %157 = vector.extract_strided_slice %155 {offsets = [0, 0], sizes = [8, 32], strides = [1, 1]} : vector<8x96xf32> to vector<8x32xf32>
    %158 = arith.addf %156, %157 : vector<8x32xf32>
    %159 = arith.negf %158 : vector<8x32xf32>
    %160 = math.exp %159 : vector<8x32xf32>
    %cst_81 = arith.constant 1.000000e+00 : f32
    %161 = vector.broadcast %cst_81 : f32 to vector<8x32xf32>
    %162 = arith.addf %161, %160 : vector<8x32xf32>
    %163 = arith.divf %161, %162 : vector<8x32xf32>
    %164 = vector.extract_strided_slice %154 {offsets = [0, 32], sizes = [8, 32], strides = [1, 1]} : vector<8x96xf32> to vector<8x32xf32>
    %165 = vector.extract_strided_slice %155 {offsets = [0, 32], sizes = [8, 32], strides = [1, 1]} : vector<8x96xf32> to vector<8x32xf32>
    %166 = arith.addf %164, %165 : vector<8x32xf32>
    %167 = arith.negf %166 : vector<8x32xf32>
    %168 = math.exp %167 : vector<8x32xf32>
    %cst_82 = arith.constant 1.000000e+00 : f32
    %169 = vector.broadcast %cst_82 : f32 to vector<8x32xf32>
    %170 = arith.addf %169, %168 : vector<8x32xf32>
    %171 = arith.divf %169, %170 : vector<8x32xf32>
    %172 = vector.extract_strided_slice %154 {offsets = [0, 64], sizes = [8, 32], strides = [1, 1]} : vector<8x96xf32> to vector<8x32xf32>
    %173 = vector.extract_strided_slice %155 {offsets = [0, 64], sizes = [8, 32], strides = [1, 1]} : vector<8x96xf32> to vector<8x32xf32>
    %174 = arith.mulf %163, %173 : vector<8x32xf32>
    %175 = arith.addf %172, %174 : vector<8x32xf32>
    %176 = math.tanh %175 : vector<8x32xf32>
    %cst_83 = arith.constant 1.000000e+00 : f32
    %177 = vector.broadcast %cst_83 : f32 to vector<8x32xf32>
    %178 = arith.subf %177, %171 : vector<8x32xf32>
    %179 = arith.mulf %178, %176 : vector<8x32xf32>
    %180 = arith.mulf %171, %99 : vector<8x32xf32>
    %181 = arith.addf %179, %180 : vector<8x32xf32>
    %c16_84 = arith.constant 16 : index
    %c0_85 = arith.constant 0 : index
    %182 = vector.load %arg6[%c16_84, %c0_85] : memref<72x32xf32, #tpu.memory_space<vmem>>, vector<8x32xf32>
    tpu.vector_store %arg6[%c16_84, %c0_85], %181 {strides = array<i32>} : memref<72x32xf32, #tpu.memory_space<vmem>>, vector<8x32xf32>,
    %c8_86 = arith.constant 8 : index
    %c0_87 = arith.constant 0 : index
    %183 = vector.load %arg7[%c8_86, %c0_87] : memref<64x16xf32, #tpu.memory_space<vmem>>, vector<8x16xf32>
    tpu.vector_store %arg7[%c8_86, %c0_87], %126 {strides = array<i32>} : memref<64x16xf32, #tpu.memory_space<vmem>>, vector<8x16xf32>,
    %c8_88 = arith.constant 8 : index
    %c0_89 = arith.constant 0 : index
    %184 = vector.load %arg8[%c8_88, %c0_89] : memref<64x16xf32, #tpu.memory_space<vmem>>, vector<8x16xf32>
    tpu.vector_store %arg8[%c8_88, %c0_89], %141 {strides = array<i32>} : memref<64x16xf32, #tpu.memory_space<vmem>>, vector<8x16xf32>,
    %c8_90 = arith.constant 8 : index
    %c0_91 = arith.constant 0 : index
    %185 = vector.load %arg9[%c8_90, %c0_91] : memref<64x16xf32, #tpu.memory_space<vmem>>, vector<8x16xf32>
    tpu.vector_store %arg9[%c8_90, %c0_91], %143 {strides = array<i32>} : memref<64x16xf32, #tpu.memory_space<vmem>>, vector<8x16xf32>,
    %c8_92 = arith.constant 8 : index
    %c0_93 = arith.constant 0 : index
    %186 = vector.load %arg10[%c8_92, %c0_93] : memref<64x32xf32, #tpu.memory_space<vmem>>, vector<8x32xf32>
    tpu.vector_store %arg10[%c8_92, %c0_93], %150 {strides = array<i32>} : memref<64x32xf32, #tpu.memory_space<vmem>>, vector<8x32xf32>,
    %c16_94 = arith.constant 16 : index
    %c0_95 = arith.constant 0 : index
    %187 = vector.load %arg5[%c16_94, %c0_95] : memref<64x128xf32, #tpu.memory_space<vmem>>, vector<8x128xf32>
    %c16_96 = arith.constant 16 : index
    %c0_97 = arith.constant 0 : index
    %188 = vector.load %arg1[%c16_96, %c0_97] : memref<64x16xf32, #tpu.memory_space<vmem>>, vector<8x16xf32>
    %c104_98 = arith.constant 104 : index
    %c0_99 = arith.constant 0 : index
    %189 = vector.load %arg2[%c104_98, %c0_99] : memref<528x128xf32, #tpu.memory_space<vmem>>, vector<32x128xf32>
    %cst_100 = arith.constant dense<0.000000e+00> : vector<8x128xf32>
    %190 = tpu.matmul %181, %189, %cst_100 {dimension_numbers = #tpu.dot_dimension_numbers<[1], [0], [0], [1], [0, 0, 1, 1], [], []>} : vector<8x32xf32>, vector<32x128xf32>, vector<8x128xf32> -> vector<8x128xf32>
    %191 = vector.extract_strided_slice %187 {offsets = [0, 0], sizes = [8, 32], strides = [1, 1]} : vector<8x128xf32> to vector<8x32xf32>
    %192 = vector.extract_strided_slice %190 {offsets = [0, 0], sizes = [8, 32], strides = [1, 1]} : vector<8x128xf32> to vector<8x32xf32>
    %193 = arith.addf %191, %192 : vector<8x32xf32>
    %cst_101 = arith.constant 0.000000e+00 : f32
    %194 = vector.broadcast %cst_101 : f32 to vector<8x32xf32>
    %195 = arith.maximumf %193, %194 : vector<8x32xf32>
    %c136_102 = arith.constant 136 : index
    %c0_103 = arith.constant 0 : index
    %196 = vector.load %arg2[%c136_102, %c0_103] : memref<528x128xf32, #tpu.memory_space<vmem>>, vector<32x32xf32>
    %cst_104 = arith.constant dense<0.000000e+00> : vector<8x32xf32>
    %197 = tpu.matmul %195, %196, %cst_104 {dimension_numbers = #tpu.dot_dimension_numbers<[1], [0], [0], [1], [0, 0, 1, 1], [], []>} : vector<8x32xf32>, vector<32x32xf32>, vector<8x32xf32> -> vector<8x32xf32>
    %c168_105 = arith.constant 168 : index
    %c0_106 = arith.constant 0 : index
    %198 = vector.load %arg2[%c168_105, %c0_106] : memref<528x128xf32, #tpu.memory_space<vmem>>, vector<1x32xf32>
    %199 = vector.broadcast %198 : vector<1x32xf32> to vector<8x32xf32>
    %200 = arith.addf %197, %199 : vector<8x32xf32>
    %cst_107 = arith.constant 0.000000e+00 : f32
    %201 = vector.broadcast %cst_107 : f32 to vector<8x32xf32>
    %202 = arith.maximumf %200, %201 : vector<8x32xf32>
    %c176_108 = arith.constant 176 : index
    %c0_109 = arith.constant 0 : index
    %203 = vector.load %arg2[%c176_108, %c0_109] : memref<528x128xf32, #tpu.memory_space<vmem>>, vector<32x32xf32>
    %cst_110 = arith.constant dense<0.000000e+00> : vector<8x32xf32>
    %204 = tpu.matmul %202, %203, %cst_110 {dimension_numbers = #tpu.dot_dimension_numbers<[1], [0], [0], [1], [0, 0, 1, 1], [], []>} : vector<8x32xf32>, vector<32x32xf32>, vector<8x32xf32> -> vector<8x32xf32>
    %c208_111 = arith.constant 208 : index
    %c0_112 = arith.constant 0 : index
    %205 = vector.load %arg2[%c208_111, %c0_112] : memref<528x128xf32, #tpu.memory_space<vmem>>, vector<1x32xf32>
    %206 = vector.broadcast %205 : vector<1x32xf32> to vector<8x32xf32>
    %207 = arith.addf %204, %206 : vector<8x32xf32>
    %208 = vector.extract_strided_slice %207 {offsets = [0, 0], sizes = [8, 16], strides = [1, 1]} : vector<8x32xf32> to vector<8x16xf32>
    %209 = vector.extract_strided_slice %207 {offsets = [0, 16], sizes = [8, 16], strides = [1, 1]} : vector<8x32xf32> to vector<8x16xf32>
    %cst_113 = arith.constant 0.000000e+00 : f32
    %210 = vector.broadcast %cst_113 : f32 to vector<8x16xf32>
    %211 = arith.maximumf %209, %210 : vector<8x16xf32>
    %212 = vector.broadcast %cst_113 : f32 to vector<8x16xf32>
    %213 = arith.subf %209, %212 : vector<8x16xf32>
    %214 = arith.cmpf one, %213, %213 : vector<8x16xf32>
    %215 = vector.broadcast %cst_113 : f32 to vector<8x16xf32>
    %216 = arith.addf %209, %215 : vector<8x16xf32>
    %217 = math.absf %213 : vector<8x16xf32>
    %cst_114 = arith.constant 0.000000e+00 : f32
    %218 = vector.broadcast %cst_114 : f32 to vector<8x16xf32>
    %219 = arith.subf %218, %217 : vector<8x16xf32>
    %220 = math.exp %219 : vector<8x16xf32>
    %221 = math.log1p %220 : vector<8x16xf32>
    %222 = arith.addf %211, %221 : vector<8x16xf32>
    %223 = arith.select %214, %216, %222 : vector<8x16xi1>, vector<8x16xf32>
    %224 = arith.mulf %188, %223 : vector<8x16xf32>
    %225 = arith.addf %224, %208 : vector<8x16xf32>
    %c216_115 = arith.constant 216 : index
    %c0_116 = arith.constant 0 : index
    %226 = vector.load %arg2[%c216_115, %c0_116] : memref<528x128xf32, #tpu.memory_space<vmem>>, vector<16x32xf32>
    %cst_117 = arith.constant dense<0.000000e+00> : vector<8x32xf32>
    %227 = tpu.matmul %225, %226, %cst_117 {dimension_numbers = #tpu.dot_dimension_numbers<[1], [0], [0], [1], [0, 0, 1, 1], [], []>} : vector<8x16xf32>, vector<16x32xf32>, vector<8x32xf32> -> vector<8x32xf32>
    %c232_118 = arith.constant 232 : index
    %c0_119 = arith.constant 0 : index
    %228 = vector.load %arg2[%c232_118, %c0_119] : memref<528x128xf32, #tpu.memory_space<vmem>>, vector<1x32xf32>
    %229 = vector.broadcast %228 : vector<1x32xf32> to vector<8x32xf32>
    %230 = arith.addf %227, %229 : vector<8x32xf32>
    %cst_120 = arith.constant 0.000000e+00 : f32
    %231 = vector.broadcast %cst_120 : f32 to vector<8x32xf32>
    %232 = arith.maximumf %230, %231 : vector<8x32xf32>
    %233 = vector.extract_strided_slice %187 {offsets = [0, 32], sizes = [8, 96], strides = [1, 1]} : vector<8x128xf32> to vector<8x96xf32>
    %c240_121 = arith.constant 240 : index
    %c0_122 = arith.constant 0 : index
    %234 = vector.load %arg2[%c240_121, %c0_122] : memref<528x128xf32, #tpu.memory_space<vmem>>, vector<32x96xf32>
    %cst_123 = arith.constant dense<0.000000e+00> : vector<8x96xf32>
    %235 = tpu.matmul %232, %234, %cst_123 {dimension_numbers = #tpu.dot_dimension_numbers<[1], [0], [0], [1], [0, 0, 1, 1], [], []>} : vector<8x32xf32>, vector<32x96xf32>, vector<8x96xf32> -> vector<8x96xf32>
    %236 = arith.addf %233, %235 : vector<8x96xf32>
    %237 = vector.extract_strided_slice %190 {offsets = [0, 32], sizes = [8, 96], strides = [1, 1]} : vector<8x128xf32> to vector<8x96xf32>
    %238 = vector.extract_strided_slice %236 {offsets = [0, 0], sizes = [8, 32], strides = [1, 1]} : vector<8x96xf32> to vector<8x32xf32>
    %239 = vector.extract_strided_slice %237 {offsets = [0, 0], sizes = [8, 32], strides = [1, 1]} : vector<8x96xf32> to vector<8x32xf32>
    %240 = arith.addf %238, %239 : vector<8x32xf32>
    %241 = arith.negf %240 : vector<8x32xf32>
    %242 = math.exp %241 : vector<8x32xf32>
    %cst_124 = arith.constant 1.000000e+00 : f32
    %243 = vector.broadcast %cst_124 : f32 to vector<8x32xf32>
    %244 = arith.addf %243, %242 : vector<8x32xf32>
    %245 = arith.divf %243, %244 : vector<8x32xf32>
    %246 = vector.extract_strided_slice %236 {offsets = [0, 32], sizes = [8, 32], strides = [1, 1]} : vector<8x96xf32> to vector<8x32xf32>
    %247 = vector.extract_strided_slice %237 {offsets = [0, 32], sizes = [8, 32], strides = [1, 1]} : vector<8x96xf32> to vector<8x32xf32>
    %248 = arith.addf %246, %247 : vector<8x32xf32>
    %249 = arith.negf %248 : vector<8x32xf32>
    %250 = math.exp %249 : vector<8x32xf32>
    %cst_125 = arith.constant 1.000000e+00 : f32
    %251 = vector.broadcast %cst_125 : f32 to vector<8x32xf32>
    %252 = arith.addf %251, %250 : vector<8x32xf32>
    %253 = arith.divf %251, %252 : vector<8x32xf32>
    %254 = vector.extract_strided_slice %236 {offsets = [0, 64], sizes = [8, 32], strides = [1, 1]} : vector<8x96xf32> to vector<8x32xf32>
    %255 = vector.extract_strided_slice %237 {offsets = [0, 64], sizes = [8, 32], strides = [1, 1]} : vector<8x96xf32> to vector<8x32xf32>
    %256 = arith.mulf %245, %255 : vector<8x32xf32>
    %257 = arith.addf %254, %256 : vector<8x32xf32>
    %258 = math.tanh %257 : vector<8x32xf32>
    %cst_126 = arith.constant 1.000000e+00 : f32
    %259 = vector.broadcast %cst_126 : f32 to vector<8x32xf32>
    %260 = arith.subf %259, %253 : vector<8x32xf32>
    %261 = arith.mulf %260, %258 : vector<8x32xf32>
    %262 = arith.mulf %253, %181 : vector<8x32xf32>
    %263 = arith.addf %261, %262 : vector<8x32xf32>
    %c24_127 = arith.constant 24 : index
    %c0_128 = arith.constant 0 : index
    %264 = vector.load %arg6[%c24_127, %c0_128] : memref<72x32xf32, #tpu.memory_space<vmem>>, vector<8x32xf32>
    tpu.vector_store %arg6[%c24_127, %c0_128], %263 {strides = array<i32>} : memref<72x32xf32, #tpu.memory_space<vmem>>, vector<8x32xf32>,
    %c16_129 = arith.constant 16 : index
    %c0_130 = arith.constant 0 : index
    %265 = vector.load %arg7[%c16_129, %c0_130] : memref<64x16xf32, #tpu.memory_space<vmem>>, vector<8x16xf32>
    tpu.vector_store %arg7[%c16_129, %c0_130], %208 {strides = array<i32>} : memref<64x16xf32, #tpu.memory_space<vmem>>, vector<8x16xf32>,
    %c16_131 = arith.constant 16 : index
    %c0_132 = arith.constant 0 : index
    %266 = vector.load %arg8[%c16_131, %c0_132] : memref<64x16xf32, #tpu.memory_space<vmem>>, vector<8x16xf32>
    tpu.vector_store %arg8[%c16_131, %c0_132], %223 {strides = array<i32>} : memref<64x16xf32, #tpu.memory_space<vmem>>, vector<8x16xf32>,
    %c16_133 = arith.constant 16 : index
    %c0_134 = arith.constant 0 : index
    %267 = vector.load %arg9[%c16_133, %c0_134] : memref<64x16xf32, #tpu.memory_space<vmem>>, vector<8x16xf32>
    tpu.vector_store %arg9[%c16_133, %c0_134], %225 {strides = array<i32>} : memref<64x16xf32, #tpu.memory_space<vmem>>, vector<8x16xf32>,
    %c16_135 = arith.constant 16 : index
    %c0_136 = arith.constant 0 : index
    %268 = vector.load %arg10[%c16_135, %c0_136] : memref<64x32xf32, #tpu.memory_space<vmem>>, vector<8x32xf32>
    tpu.vector_store %arg10[%c16_135, %c0_136], %232 {strides = array<i32>} : memref<64x32xf32, #tpu.memory_space<vmem>>, vector<8x32xf32>,
    %c24_137 = arith.constant 24 : index
    %c0_138 = arith.constant 0 : index
    %269 = vector.load %arg5[%c24_137, %c0_138] : memref<64x128xf32, #tpu.memory_space<vmem>>, vector<8x128xf32>
    %c24_139 = arith.constant 24 : index
    %c0_140 = arith.constant 0 : index
    %270 = vector.load %arg1[%c24_139, %c0_140] : memref<64x16xf32, #tpu.memory_space<vmem>>, vector<8x16xf32>
    %c104_141 = arith.constant 104 : index
    %c0_142 = arith.constant 0 : index
    %271 = vector.load %arg2[%c104_141, %c0_142] : memref<528x128xf32, #tpu.memory_space<vmem>>, vector<32x128xf32>
    %cst_143 = arith.constant dense<0.000000e+00> : vector<8x128xf32>
    %272 = tpu.matmul %263, %271, %cst_143 {dimension_numbers = #tpu.dot_dimension_numbers<[1], [0], [0], [1], [0, 0, 1, 1], [], []>} : vector<8x32xf32>, vector<32x128xf32>, vector<8x128xf32> -> vector<8x128xf32>
    %273 = vector.extract_strided_slice %269 {offsets = [0, 0], sizes = [8, 32], strides = [1, 1]} : vector<8x128xf32> to vector<8x32xf32>
    %274 = vector.extract_strided_slice %272 {offsets = [0, 0], sizes = [8, 32], strides = [1, 1]} : vector<8x128xf32> to vector<8x32xf32>
    %275 = arith.addf %273, %274 : vector<8x32xf32>
    %cst_144 = arith.constant 0.000000e+00 : f32
    %276 = vector.broadcast %cst_144 : f32 to vector<8x32xf32>
    %277 = arith.maximumf %275, %276 : vector<8x32xf32>
    %c136_145 = arith.constant 136 : index
    %c0_146 = arith.constant 0 : index
    %278 = vector.load %arg2[%c136_145, %c0_146] : memref<528x128xf32, #tpu.memory_space<vmem>>, vector<32x32xf32>
    %cst_147 = arith.constant dense<0.000000e+00> : vector<8x32xf32>
    %279 = tpu.matmul %277, %278, %cst_147 {dimension_numbers = #tpu.dot_dimension_numbers<[1], [0], [0], [1], [0, 0, 1, 1], [], []>} : vector<8x32xf32>, vector<32x32xf32>, vector<8x32xf32> -> vector<8x32xf32>
    %c168_148 = arith.constant 168 : index
    %c0_149 = arith.constant 0 : index
    %280 = vector.load %arg2[%c168_148, %c0_149] : memref<528x128xf32, #tpu.memory_space<vmem>>, vector<1x32xf32>
    %281 = vector.broadcast %280 : vector<1x32xf32> to vector<8x32xf32>
    %282 = arith.addf %279, %281 : vector<8x32xf32>
    %cst_150 = arith.constant 0.000000e+00 : f32
    %283 = vector.broadcast %cst_150 : f32 to vector<8x32xf32>
    %284 = arith.maximumf %282, %283 : vector<8x32xf32>
    %c176_151 = arith.constant 176 : index
    %c0_152 = arith.constant 0 : index
    %285 = vector.load %arg2[%c176_151, %c0_152] : memref<528x128xf32, #tpu.memory_space<vmem>>, vector<32x32xf32>
    %cst_153 = arith.constant dense<0.000000e+00> : vector<8x32xf32>
    %286 = tpu.matmul %284, %285, %cst_153 {dimension_numbers = #tpu.dot_dimension_numbers<[1], [0], [0], [1], [0, 0, 1, 1], [], []>} : vector<8x32xf32>, vector<32x32xf32>, vector<8x32xf32> -> vector<8x32xf32>
    %c208_154 = arith.constant 208 : index
    %c0_155 = arith.constant 0 : index
    %287 = vector.load %arg2[%c208_154, %c0_155] : memref<528x128xf32, #tpu.memory_space<vmem>>, vector<1x32xf32>
    %288 = vector.broadcast %287 : vector<1x32xf32> to vector<8x32xf32>
    %289 = arith.addf %286, %288 : vector<8x32xf32>
    %290 = vector.extract_strided_slice %289 {offsets = [0, 0], sizes = [8, 16], strides = [1, 1]} : vector<8x32xf32> to vector<8x16xf32>
    %291 = vector.extract_strided_slice %289 {offsets = [0, 16], sizes = [8, 16], strides = [1, 1]} : vector<8x32xf32> to vector<8x16xf32>
    %cst_156 = arith.constant 0.000000e+00 : f32
    %292 = vector.broadcast %cst_156 : f32 to vector<8x16xf32>
    %293 = arith.maximumf %291, %292 : vector<8x16xf32>
    %294 = vector.broadcast %cst_156 : f32 to vector<8x16xf32>
    %295 = arith.subf %291, %294 : vector<8x16xf32>
    %296 = arith.cmpf one, %295, %295 : vector<8x16xf32>
    %297 = vector.broadcast %cst_156 : f32 to vector<8x16xf32>
    %298 = arith.addf %291, %297 : vector<8x16xf32>
    %299 = math.absf %295 : vector<8x16xf32>
    %cst_157 = arith.constant 0.000000e+00 : f32
    %300 = vector.broadcast %cst_157 : f32 to vector<8x16xf32>
    %301 = arith.subf %300, %299 : vector<8x16xf32>
    %302 = math.exp %301 : vector<8x16xf32>
    %303 = math.log1p %302 : vector<8x16xf32>
    %304 = arith.addf %293, %303 : vector<8x16xf32>
    %305 = arith.select %296, %298, %304 : vector<8x16xi1>, vector<8x16xf32>
    %306 = arith.mulf %270, %305 : vector<8x16xf32>
    %307 = arith.addf %306, %290 : vector<8x16xf32>
    %c216_158 = arith.constant 216 : index
    %c0_159 = arith.constant 0 : index
    %308 = vector.load %arg2[%c216_158, %c0_159] : memref<528x128xf32, #tpu.memory_space<vmem>>, vector<16x32xf32>
    %cst_160 = arith.constant dense<0.000000e+00> : vector<8x32xf32>
    %309 = tpu.matmul %307, %308, %cst_160 {dimension_numbers = #tpu.dot_dimension_numbers<[1], [0], [0], [1], [0, 0, 1, 1], [], []>} : vector<8x16xf32>, vector<16x32xf32>, vector<8x32xf32> -> vector<8x32xf32>
    %c232_161 = arith.constant 232 : index
    %c0_162 = arith.constant 0 : index
    %310 = vector.load %arg2[%c232_161, %c0_162] : memref<528x128xf32, #tpu.memory_space<vmem>>, vector<1x32xf32>
    %311 = vector.broadcast %310 : vector<1x32xf32> to vector<8x32xf32>
    %312 = arith.addf %309, %311 : vector<8x32xf32>
    %cst_163 = arith.constant 0.000000e+00 : f32
    %313 = vector.broadcast %cst_163 : f32 to vector<8x32xf32>
    %314 = arith.maximumf %312, %313 : vector<8x32xf32>
    %315 = vector.extract_strided_slice %269 {offsets = [0, 32], sizes = [8, 96], strides = [1, 1]} : vector<8x128xf32> to vector<8x96xf32>
    %c240_164 = arith.constant 240 : index
    %c0_165 = arith.constant 0 : index
    %316 = vector.load %arg2[%c240_164, %c0_165] : memref<528x128xf32, #tpu.memory_space<vmem>>, vector<32x96xf32>
    %cst_166 = arith.constant dense<0.000000e+00> : vector<8x96xf32>
    %317 = tpu.matmul %314, %316, %cst_166 {dimension_numbers = #tpu.dot_dimension_numbers<[1], [0], [0], [1], [0, 0, 1, 1], [], []>} : vector<8x32xf32>, vector<32x96xf32>, vector<8x96xf32> -> vector<8x96xf32>
    %318 = arith.addf %315, %317 : vector<8x96xf32>
    %319 = vector.extract_strided_slice %272 {offsets = [0, 32], sizes = [8, 96], strides = [1, 1]} : vector<8x128xf32> to vector<8x96xf32>
    %320 = vector.extract_strided_slice %318 {offsets = [0, 0], sizes = [8, 32], strides = [1, 1]} : vector<8x96xf32> to vector<8x32xf32>
    %321 = vector.extract_strided_slice %319 {offsets = [0, 0], sizes = [8, 32], strides = [1, 1]} : vector<8x96xf32> to vector<8x32xf32>
    %322 = arith.addf %320, %321 : vector<8x32xf32>
    %323 = arith.negf %322 : vector<8x32xf32>
    %324 = math.exp %323 : vector<8x32xf32>
    %cst_167 = arith.constant 1.000000e+00 : f32
    %325 = vector.broadcast %cst_167 : f32 to vector<8x32xf32>
    %326 = arith.addf %325, %324 : vector<8x32xf32>
    %327 = arith.divf %325, %326 : vector<8x32xf32>
    %328 = vector.extract_strided_slice %318 {offsets = [0, 32], sizes = [8, 32], strides = [1, 1]} : vector<8x96xf32> to vector<8x32xf32>
    %329 = vector.extract_strided_slice %319 {offsets = [0, 32], sizes = [8, 32], strides = [1, 1]} : vector<8x96xf32> to vector<8x32xf32>
    %330 = arith.addf %328, %329 : vector<8x32xf32>
    %331 = arith.negf %330 : vector<8x32xf32>
    %332 = math.exp %331 : vector<8x32xf32>
    %cst_168 = arith.constant 1.000000e+00 : f32
    %333 = vector.broadcast %cst_168 : f32 to vector<8x32xf32>
    %334 = arith.addf %333, %332 : vector<8x32xf32>
    %335 = arith.divf %333, %334 : vector<8x32xf32>
    %336 = vector.extract_strided_slice %318 {offsets = [0, 64], sizes = [8, 32], strides = [1, 1]} : vector<8x96xf32> to vector<8x32xf32>
    %337 = vector.extract_strided_slice %319 {offsets = [0, 64], sizes = [8, 32], strides = [1, 1]} : vector<8x96xf32> to vector<8x32xf32>
    %338 = arith.mulf %327, %337 : vector<8x32xf32>
    %339 = arith.addf %336, %338 : vector<8x32xf32>
    %340 = math.tanh %339 : vector<8x32xf32>
    %cst_169 = arith.constant 1.000000e+00 : f32
    %341 = vector.broadcast %cst_169 : f32 to vector<8x32xf32>
    %342 = arith.subf %341, %335 : vector<8x32xf32>
    %343 = arith.mulf %342, %340 : vector<8x32xf32>
    %344 = arith.mulf %335, %263 : vector<8x32xf32>
    %345 = arith.addf %343, %344 : vector<8x32xf32>
    %c32 = arith.constant 32 : index
    %c0_170 = arith.constant 0 : index
    %346 = vector.load %arg6[%c32, %c0_170] : memref<72x32xf32, #tpu.memory_space<vmem>>, vector<8x32xf32>
    tpu.vector_store %arg6[%c32, %c0_170], %345 {strides = array<i32>} : memref<72x32xf32, #tpu.memory_space<vmem>>, vector<8x32xf32>,
    %c24_171 = arith.constant 24 : index
    %c0_172 = arith.constant 0 : index
    %347 = vector.load %arg7[%c24_171, %c0_172] : memref<64x16xf32, #tpu.memory_space<vmem>>, vector<8x16xf32>
    tpu.vector_store %arg7[%c24_171, %c0_172], %290 {strides = array<i32>} : memref<64x16xf32, #tpu.memory_space<vmem>>, vector<8x16xf32>,
    %c24_173 = arith.constant 24 : index
    %c0_174 = arith.constant 0 : index
    %348 = vector.load %arg8[%c24_173, %c0_174] : memref<64x16xf32, #tpu.memory_space<vmem>>, vector<8x16xf32>
    tpu.vector_store %arg8[%c24_173, %c0_174], %305 {strides = array<i32>} : memref<64x16xf32, #tpu.memory_space<vmem>>, vector<8x16xf32>,
    %c24_175 = arith.constant 24 : index
    %c0_176 = arith.constant 0 : index
    %349 = vector.load %arg9[%c24_175, %c0_176] : memref<64x16xf32, #tpu.memory_space<vmem>>, vector<8x16xf32>
    tpu.vector_store %arg9[%c24_175, %c0_176], %307 {strides = array<i32>} : memref<64x16xf32, #tpu.memory_space<vmem>>, vector<8x16xf32>,
    %c24_177 = arith.constant 24 : index
    %c0_178 = arith.constant 0 : index
    %350 = vector.load %arg10[%c24_177, %c0_178] : memref<64x32xf32, #tpu.memory_space<vmem>>, vector<8x32xf32>
    tpu.vector_store %arg10[%c24_177, %c0_178], %314 {strides = array<i32>} : memref<64x32xf32, #tpu.memory_space<vmem>>, vector<8x32xf32>,
    %c32_179 = arith.constant 32 : index
    %c0_180 = arith.constant 0 : index
    %351 = vector.load %arg5[%c32_179, %c0_180] : memref<64x128xf32, #tpu.memory_space<vmem>>, vector<8x128xf32>
    %c32_181 = arith.constant 32 : index
    %c0_182 = arith.constant 0 : index
    %352 = vector.load %arg1[%c32_181, %c0_182] : memref<64x16xf32, #tpu.memory_space<vmem>>, vector<8x16xf32>
    %c104_183 = arith.constant 104 : index
    %c0_184 = arith.constant 0 : index
    %353 = vector.load %arg2[%c104_183, %c0_184] : memref<528x128xf32, #tpu.memory_space<vmem>>, vector<32x128xf32>
    %cst_185 = arith.constant dense<0.000000e+00> : vector<8x128xf32>
    %354 = tpu.matmul %345, %353, %cst_185 {dimension_numbers = #tpu.dot_dimension_numbers<[1], [0], [0], [1], [0, 0, 1, 1], [], []>} : vector<8x32xf32>, vector<32x128xf32>, vector<8x128xf32> -> vector<8x128xf32>
    %355 = vector.extract_strided_slice %351 {offsets = [0, 0], sizes = [8, 32], strides = [1, 1]} : vector<8x128xf32> to vector<8x32xf32>
    %356 = vector.extract_strided_slice %354 {offsets = [0, 0], sizes = [8, 32], strides = [1, 1]} : vector<8x128xf32> to vector<8x32xf32>
    %357 = arith.addf %355, %356 : vector<8x32xf32>
    %cst_186 = arith.constant 0.000000e+00 : f32
    %358 = vector.broadcast %cst_186 : f32 to vector<8x32xf32>
    %359 = arith.maximumf %357, %358 : vector<8x32xf32>
    %c136_187 = arith.constant 136 : index
    %c0_188 = arith.constant 0 : index
    %360 = vector.load %arg2[%c136_187, %c0_188] : memref<528x128xf32, #tpu.memory_space<vmem>>, vector<32x32xf32>
    %cst_189 = arith.constant dense<0.000000e+00> : vector<8x32xf32>
    %361 = tpu.matmul %359, %360, %cst_189 {dimension_numbers = #tpu.dot_dimension_numbers<[1], [0], [0], [1], [0, 0, 1, 1], [], []>} : vector<8x32xf32>, vector<32x32xf32>, vector<8x32xf32> -> vector<8x32xf32>
    %c168_190 = arith.constant 168 : index
    %c0_191 = arith.constant 0 : index
    %362 = vector.load %arg2[%c168_190, %c0_191] : memref<528x128xf32, #tpu.memory_space<vmem>>, vector<1x32xf32>
    %363 = vector.broadcast %362 : vector<1x32xf32> to vector<8x32xf32>
    %364 = arith.addf %361, %363 : vector<8x32xf32>
    %cst_192 = arith.constant 0.000000e+00 : f32
    %365 = vector.broadcast %cst_192 : f32 to vector<8x32xf32>
    %366 = arith.maximumf %364, %365 : vector<8x32xf32>
    %c176_193 = arith.constant 176 : index
    %c0_194 = arith.constant 0 : index
    %367 = vector.load %arg2[%c176_193, %c0_194] : memref<528x128xf32, #tpu.memory_space<vmem>>, vector<32x32xf32>
    %cst_195 = arith.constant dense<0.000000e+00> : vector<8x32xf32>
    %368 = tpu.matmul %366, %367, %cst_195 {dimension_numbers = #tpu.dot_dimension_numbers<[1], [0], [0], [1], [0, 0, 1, 1], [], []>} : vector<8x32xf32>, vector<32x32xf32>, vector<8x32xf32> -> vector<8x32xf32>
    %c208_196 = arith.constant 208 : index
    %c0_197 = arith.constant 0 : index
    %369 = vector.load %arg2[%c208_196, %c0_197] : memref<528x128xf32, #tpu.memory_space<vmem>>, vector<1x32xf32>
    %370 = vector.broadcast %369 : vector<1x32xf32> to vector<8x32xf32>
    %371 = arith.addf %368, %370 : vector<8x32xf32>
    %372 = vector.extract_strided_slice %371 {offsets = [0, 0], sizes = [8, 16], strides = [1, 1]} : vector<8x32xf32> to vector<8x16xf32>
    %373 = vector.extract_strided_slice %371 {offsets = [0, 16], sizes = [8, 16], strides = [1, 1]} : vector<8x32xf32> to vector<8x16xf32>
    %cst_198 = arith.constant 0.000000e+00 : f32
    %374 = vector.broadcast %cst_198 : f32 to vector<8x16xf32>
    %375 = arith.maximumf %373, %374 : vector<8x16xf32>
    %376 = vector.broadcast %cst_198 : f32 to vector<8x16xf32>
    %377 = arith.subf %373, %376 : vector<8x16xf32>
    %378 = arith.cmpf one, %377, %377 : vector<8x16xf32>
    %379 = vector.broadcast %cst_198 : f32 to vector<8x16xf32>
    %380 = arith.addf %373, %379 : vector<8x16xf32>
    %381 = math.absf %377 : vector<8x16xf32>
    %cst_199 = arith.constant 0.000000e+00 : f32
    %382 = vector.broadcast %cst_199 : f32 to vector<8x16xf32>
    %383 = arith.subf %382, %381 : vector<8x16xf32>
    %384 = math.exp %383 : vector<8x16xf32>
    %385 = math.log1p %384 : vector<8x16xf32>
    %386 = arith.addf %375, %385 : vector<8x16xf32>
    %387 = arith.select %378, %380, %386 : vector<8x16xi1>, vector<8x16xf32>
    %388 = arith.mulf %352, %387 : vector<8x16xf32>
    %389 = arith.addf %388, %372 : vector<8x16xf32>
    %c216_200 = arith.constant 216 : index
    %c0_201 = arith.constant 0 : index
    %390 = vector.load %arg2[%c216_200, %c0_201] : memref<528x128xf32, #tpu.memory_space<vmem>>, vector<16x32xf32>
    %cst_202 = arith.constant dense<0.000000e+00> : vector<8x32xf32>
    %391 = tpu.matmul %389, %390, %cst_202 {dimension_numbers = #tpu.dot_dimension_numbers<[1], [0], [0], [1], [0, 0, 1, 1], [], []>} : vector<8x16xf32>, vector<16x32xf32>, vector<8x32xf32> -> vector<8x32xf32>
    %c232_203 = arith.constant 232 : index
    %c0_204 = arith.constant 0 : index
    %392 = vector.load %arg2[%c232_203, %c0_204] : memref<528x128xf32, #tpu.memory_space<vmem>>, vector<1x32xf32>
    %393 = vector.broadcast %392 : vector<1x32xf32> to vector<8x32xf32>
    %394 = arith.addf %391, %393 : vector<8x32xf32>
    %cst_205 = arith.constant 0.000000e+00 : f32
    %395 = vector.broadcast %cst_205 : f32 to vector<8x32xf32>
    %396 = arith.maximumf %394, %395 : vector<8x32xf32>
    %397 = vector.extract_strided_slice %351 {offsets = [0, 32], sizes = [8, 96], strides = [1, 1]} : vector<8x128xf32> to vector<8x96xf32>
    %c240_206 = arith.constant 240 : index
    %c0_207 = arith.constant 0 : index
    %398 = vector.load %arg2[%c240_206, %c0_207] : memref<528x128xf32, #tpu.memory_space<vmem>>, vector<32x96xf32>
    %cst_208 = arith.constant dense<0.000000e+00> : vector<8x96xf32>
    %399 = tpu.matmul %396, %398, %cst_208 {dimension_numbers = #tpu.dot_dimension_numbers<[1], [0], [0], [1], [0, 0, 1, 1], [], []>} : vector<8x32xf32>, vector<32x96xf32>, vector<8x96xf32> -> vector<8x96xf32>
    %400 = arith.addf %397, %399 : vector<8x96xf32>
    %401 = vector.extract_strided_slice %354 {offsets = [0, 32], sizes = [8, 96], strides = [1, 1]} : vector<8x128xf32> to vector<8x96xf32>
    %402 = vector.extract_strided_slice %400 {offsets = [0, 0], sizes = [8, 32], strides = [1, 1]} : vector<8x96xf32> to vector<8x32xf32>
    %403 = vector.extract_strided_slice %401 {offsets = [0, 0], sizes = [8, 32], strides = [1, 1]} : vector<8x96xf32> to vector<8x32xf32>
    %404 = arith.addf %402, %403 : vector<8x32xf32>
    %405 = arith.negf %404 : vector<8x32xf32>
    %406 = math.exp %405 : vector<8x32xf32>
    %cst_209 = arith.constant 1.000000e+00 : f32
    %407 = vector.broadcast %cst_209 : f32 to vector<8x32xf32>
    %408 = arith.addf %407, %406 : vector<8x32xf32>
    %409 = arith.divf %407, %408 : vector<8x32xf32>
    %410 = vector.extract_strided_slice %400 {offsets = [0, 32], sizes = [8, 32], strides = [1, 1]} : vector<8x96xf32> to vector<8x32xf32>
    %411 = vector.extract_strided_slice %401 {offsets = [0, 32], sizes = [8, 32], strides = [1, 1]} : vector<8x96xf32> to vector<8x32xf32>
    %412 = arith.addf %410, %411 : vector<8x32xf32>
    %413 = arith.negf %412 : vector<8x32xf32>
    %414 = math.exp %413 : vector<8x32xf32>
    %cst_210 = arith.constant 1.000000e+00 : f32
    %415 = vector.broadcast %cst_210 : f32 to vector<8x32xf32>
    %416 = arith.addf %415, %414 : vector<8x32xf32>
    %417 = arith.divf %415, %416 : vector<8x32xf32>
    %418 = vector.extract_strided_slice %400 {offsets = [0, 64], sizes = [8, 32], strides = [1, 1]} : vector<8x96xf32> to vector<8x32xf32>
    %419 = vector.extract_strided_slice %401 {offsets = [0, 64], sizes = [8, 32], strides = [1, 1]} : vector<8x96xf32> to vector<8x32xf32>
    %420 = arith.mulf %409, %419 : vector<8x32xf32>
    %421 = arith.addf %418, %420 : vector<8x32xf32>
    %422 = math.tanh %421 : vector<8x32xf32>
    %cst_211 = arith.constant 1.000000e+00 : f32
    %423 = vector.broadcast %cst_211 : f32 to vector<8x32xf32>
    %424 = arith.subf %423, %417 : vector<8x32xf32>
    %425 = arith.mulf %424, %422 : vector<8x32xf32>
    %426 = arith.mulf %417, %345 : vector<8x32xf32>
    %427 = arith.addf %425, %426 : vector<8x32xf32>
    %c40 = arith.constant 40 : index
    %c0_212 = arith.constant 0 : index
    %428 = vector.load %arg6[%c40, %c0_212] : memref<72x32xf32, #tpu.memory_space<vmem>>, vector<8x32xf32>
    tpu.vector_store %arg6[%c40, %c0_212], %427 {strides = array<i32>} : memref<72x32xf32, #tpu.memory_space<vmem>>, vector<8x32xf32>,
    %c32_213 = arith.constant 32 : index
    %c0_214 = arith.constant 0 : index
    %429 = vector.load %arg7[%c32_213, %c0_214] : memref<64x16xf32, #tpu.memory_space<vmem>>, vector<8x16xf32>
    tpu.vector_store %arg7[%c32_213, %c0_214], %372 {strides = array<i32>} : memref<64x16xf32, #tpu.memory_space<vmem>>, vector<8x16xf32>,
    %c32_215 = arith.constant 32 : index
    %c0_216 = arith.constant 0 : index
    %430 = vector.load %arg8[%c32_215, %c0_216] : memref<64x16xf32, #tpu.memory_space<vmem>>, vector<8x16xf32>
    tpu.vector_store %arg8[%c32_215, %c0_216], %387 {strides = array<i32>} : memref<64x16xf32, #tpu.memory_space<vmem>>, vector<8x16xf32>,
    %c32_217 = arith.constant 32 : index
    %c0_218 = arith.constant 0 : index
    %431 = vector.load %arg9[%c32_217, %c0_218] : memref<64x16xf32, #tpu.memory_space<vmem>>, vector<8x16xf32>
    tpu.vector_store %arg9[%c32_217, %c0_218], %389 {strides = array<i32>} : memref<64x16xf32, #tpu.memory_space<vmem>>, vector<8x16xf32>,
    %c32_219 = arith.constant 32 : index
    %c0_220 = arith.constant 0 : index
    %432 = vector.load %arg10[%c32_219, %c0_220] : memref<64x32xf32, #tpu.memory_space<vmem>>, vector<8x32xf32>
    tpu.vector_store %arg10[%c32_219, %c0_220], %396 {strides = array<i32>} : memref<64x32xf32, #tpu.memory_space<vmem>>, vector<8x32xf32>,
    %c40_221 = arith.constant 40 : index
    %c0_222 = arith.constant 0 : index
    %433 = vector.load %arg5[%c40_221, %c0_222] : memref<64x128xf32, #tpu.memory_space<vmem>>, vector<8x128xf32>
    %c40_223 = arith.constant 40 : index
    %c0_224 = arith.constant 0 : index
    %434 = vector.load %arg1[%c40_223, %c0_224] : memref<64x16xf32, #tpu.memory_space<vmem>>, vector<8x16xf32>
    %c104_225 = arith.constant 104 : index
    %c0_226 = arith.constant 0 : index
    %435 = vector.load %arg2[%c104_225, %c0_226] : memref<528x128xf32, #tpu.memory_space<vmem>>, vector<32x128xf32>
    %cst_227 = arith.constant dense<0.000000e+00> : vector<8x128xf32>
    %436 = tpu.matmul %427, %435, %cst_227 {dimension_numbers = #tpu.dot_dimension_numbers<[1], [0], [0], [1], [0, 0, 1, 1], [], []>} : vector<8x32xf32>, vector<32x128xf32>, vector<8x128xf32> -> vector<8x128xf32>
    %437 = vector.extract_strided_slice %433 {offsets = [0, 0], sizes = [8, 32], strides = [1, 1]} : vector<8x128xf32> to vector<8x32xf32>
    %438 = vector.extract_strided_slice %436 {offsets = [0, 0], sizes = [8, 32], strides = [1, 1]} : vector<8x128xf32> to vector<8x32xf32>
    %439 = arith.addf %437, %438 : vector<8x32xf32>
    %cst_228 = arith.constant 0.000000e+00 : f32
    %440 = vector.broadcast %cst_228 : f32 to vector<8x32xf32>
    %441 = arith.maximumf %439, %440 : vector<8x32xf32>
    %c136_229 = arith.constant 136 : index
    %c0_230 = arith.constant 0 : index
    %442 = vector.load %arg2[%c136_229, %c0_230] : memref<528x128xf32, #tpu.memory_space<vmem>>, vector<32x32xf32>
    %cst_231 = arith.constant dense<0.000000e+00> : vector<8x32xf32>
    %443 = tpu.matmul %441, %442, %cst_231 {dimension_numbers = #tpu.dot_dimension_numbers<[1], [0], [0], [1], [0, 0, 1, 1], [], []>} : vector<8x32xf32>, vector<32x32xf32>, vector<8x32xf32> -> vector<8x32xf32>
    %c168_232 = arith.constant 168 : index
    %c0_233 = arith.constant 0 : index
    %444 = vector.load %arg2[%c168_232, %c0_233] : memref<528x128xf32, #tpu.memory_space<vmem>>, vector<1x32xf32>
    %445 = vector.broadcast %444 : vector<1x32xf32> to vector<8x32xf32>
    %446 = arith.addf %443, %445 : vector<8x32xf32>
    %cst_234 = arith.constant 0.000000e+00 : f32
    %447 = vector.broadcast %cst_234 : f32 to vector<8x32xf32>
    %448 = arith.maximumf %446, %447 : vector<8x32xf32>
    %c176_235 = arith.constant 176 : index
    %c0_236 = arith.constant 0 : index
    %449 = vector.load %arg2[%c176_235, %c0_236] : memref<528x128xf32, #tpu.memory_space<vmem>>, vector<32x32xf32>
    %cst_237 = arith.constant dense<0.000000e+00> : vector<8x32xf32>
    %450 = tpu.matmul %448, %449, %cst_237 {dimension_numbers = #tpu.dot_dimension_numbers<[1], [0], [0], [1], [0, 0, 1, 1], [], []>} : vector<8x32xf32>, vector<32x32xf32>, vector<8x32xf32> -> vector<8x32xf32>
    %c208_238 = arith.constant 208 : index
    %c0_239 = arith.constant 0 : index
    %451 = vector.load %arg2[%c208_238, %c0_239] : memref<528x128xf32, #tpu.memory_space<vmem>>, vector<1x32xf32>
    %452 = vector.broadcast %451 : vector<1x32xf32> to vector<8x32xf32>
    %453 = arith.addf %450, %452 : vector<8x32xf32>
    %454 = vector.extract_strided_slice %453 {offsets = [0, 0], sizes = [8, 16], strides = [1, 1]} : vector<8x32xf32> to vector<8x16xf32>
    %455 = vector.extract_strided_slice %453 {offsets = [0, 16], sizes = [8, 16], strides = [1, 1]} : vector<8x32xf32> to vector<8x16xf32>
    %cst_240 = arith.constant 0.000000e+00 : f32
    %456 = vector.broadcast %cst_240 : f32 to vector<8x16xf32>
    %457 = arith.maximumf %455, %456 : vector<8x16xf32>
    %458 = vector.broadcast %cst_240 : f32 to vector<8x16xf32>
    %459 = arith.subf %455, %458 : vector<8x16xf32>
    %460 = arith.cmpf one, %459, %459 : vector<8x16xf32>
    %461 = vector.broadcast %cst_240 : f32 to vector<8x16xf32>
    %462 = arith.addf %455, %461 : vector<8x16xf32>
    %463 = math.absf %459 : vector<8x16xf32>
    %cst_241 = arith.constant 0.000000e+00 : f32
    %464 = vector.broadcast %cst_241 : f32 to vector<8x16xf32>
    %465 = arith.subf %464, %463 : vector<8x16xf32>
    %466 = math.exp %465 : vector<8x16xf32>
    %467 = math.log1p %466 : vector<8x16xf32>
    %468 = arith.addf %457, %467 : vector<8x16xf32>
    %469 = arith.select %460, %462, %468 : vector<8x16xi1>, vector<8x16xf32>
    %470 = arith.mulf %434, %469 : vector<8x16xf32>
    %471 = arith.addf %470, %454 : vector<8x16xf32>
    %c216_242 = arith.constant 216 : index
    %c0_243 = arith.constant 0 : index
    %472 = vector.load %arg2[%c216_242, %c0_243] : memref<528x128xf32, #tpu.memory_space<vmem>>, vector<16x32xf32>
    %cst_244 = arith.constant dense<0.000000e+00> : vector<8x32xf32>
    %473 = tpu.matmul %471, %472, %cst_244 {dimension_numbers = #tpu.dot_dimension_numbers<[1], [0], [0], [1], [0, 0, 1, 1], [], []>} : vector<8x16xf32>, vector<16x32xf32>, vector<8x32xf32> -> vector<8x32xf32>
    %c232_245 = arith.constant 232 : index
    %c0_246 = arith.constant 0 : index
    %474 = vector.load %arg2[%c232_245, %c0_246] : memref<528x128xf32, #tpu.memory_space<vmem>>, vector<1x32xf32>
    %475 = vector.broadcast %474 : vector<1x32xf32> to vector<8x32xf32>
    %476 = arith.addf %473, %475 : vector<8x32xf32>
    %cst_247 = arith.constant 0.000000e+00 : f32
    %477 = vector.broadcast %cst_247 : f32 to vector<8x32xf32>
    %478 = arith.maximumf %476, %477 : vector<8x32xf32>
    %479 = vector.extract_strided_slice %433 {offsets = [0, 32], sizes = [8, 96], strides = [1, 1]} : vector<8x128xf32> to vector<8x96xf32>
    %c240_248 = arith.constant 240 : index
    %c0_249 = arith.constant 0 : index
    %480 = vector.load %arg2[%c240_248, %c0_249] : memref<528x128xf32, #tpu.memory_space<vmem>>, vector<32x96xf32>
    %cst_250 = arith.constant dense<0.000000e+00> : vector<8x96xf32>
    %481 = tpu.matmul %478, %480, %cst_250 {dimension_numbers = #tpu.dot_dimension_numbers<[1], [0], [0], [1], [0, 0, 1, 1], [], []>} : vector<8x32xf32>, vector<32x96xf32>, vector<8x96xf32> -> vector<8x96xf32>
    %482 = arith.addf %479, %481 : vector<8x96xf32>
    %483 = vector.extract_strided_slice %436 {offsets = [0, 32], sizes = [8, 96], strides = [1, 1]} : vector<8x128xf32> to vector<8x96xf32>
    %484 = vector.extract_strided_slice %482 {offsets = [0, 0], sizes = [8, 32], strides = [1, 1]} : vector<8x96xf32> to vector<8x32xf32>
    %485 = vector.extract_strided_slice %483 {offsets = [0, 0], sizes = [8, 32], strides = [1, 1]} : vector<8x96xf32> to vector<8x32xf32>
    %486 = arith.addf %484, %485 : vector<8x32xf32>
    %487 = arith.negf %486 : vector<8x32xf32>
    %488 = math.exp %487 : vector<8x32xf32>
    %cst_251 = arith.constant 1.000000e+00 : f32
    %489 = vector.broadcast %cst_251 : f32 to vector<8x32xf32>
    %490 = arith.addf %489, %488 : vector<8x32xf32>
    %491 = arith.divf %489, %490 : vector<8x32xf32>
    %492 = vector.extract_strided_slice %482 {offsets = [0, 32], sizes = [8, 32], strides = [1, 1]} : vector<8x96xf32> to vector<8x32xf32>
    %493 = vector.extract_strided_slice %483 {offsets = [0, 32], sizes = [8, 32], strides = [1, 1]} : vector<8x96xf32> to vector<8x32xf32>
    %494 = arith.addf %492, %493 : vector<8x32xf32>
    %495 = arith.negf %494 : vector<8x32xf32>
    %496 = math.exp %495 : vector<8x32xf32>
    %cst_252 = arith.constant 1.000000e+00 : f32
    %497 = vector.broadcast %cst_252 : f32 to vector<8x32xf32>
    %498 = arith.addf %497, %496 : vector<8x32xf32>
    %499 = arith.divf %497, %498 : vector<8x32xf32>
    %500 = vector.extract_strided_slice %482 {offsets = [0, 64], sizes = [8, 32], strides = [1, 1]} : vector<8x96xf32> to vector<8x32xf32>
    %501 = vector.extract_strided_slice %483 {offsets = [0, 64], sizes = [8, 32], strides = [1, 1]} : vector<8x96xf32> to vector<8x32xf32>
    %502 = arith.mulf %491, %501 : vector<8x32xf32>
    %503 = arith.addf %500, %502 : vector<8x32xf32>
    %504 = math.tanh %503 : vector<8x32xf32>
    %cst_253 = arith.constant 1.000000e+00 : f32
    %505 = vector.broadcast %cst_253 : f32 to vector<8x32xf32>
    %506 = arith.subf %505, %499 : vector<8x32xf32>
    %507 = arith.mulf %506, %504 : vector<8x32xf32>
    %508 = arith.mulf %499, %427 : vector<8x32xf32>
    %509 = arith.addf %507, %508 : vector<8x32xf32>
    %c48 = arith.constant 48 : index
    %c0_254 = arith.constant 0 : index
    %510 = vector.load %arg6[%c48, %c0_254] : memref<72x32xf32, #tpu.memory_space<vmem>>, vector<8x32xf32>
    tpu.vector_store %arg6[%c48, %c0_254], %509 {strides = array<i32>} : memref<72x32xf32, #tpu.memory_space<vmem>>, vector<8x32xf32>,
    %c40_255 = arith.constant 40 : index
    %c0_256 = arith.constant 0 : index
    %511 = vector.load %arg7[%c40_255, %c0_256] : memref<64x16xf32, #tpu.memory_space<vmem>>, vector<8x16xf32>
    tpu.vector_store %arg7[%c40_255, %c0_256], %454 {strides = array<i32>} : memref<64x16xf32, #tpu.memory_space<vmem>>, vector<8x16xf32>,
    %c40_257 = arith.constant 40 : index
    %c0_258 = arith.constant 0 : index
    %512 = vector.load %arg8[%c40_257, %c0_258] : memref<64x16xf32, #tpu.memory_space<vmem>>, vector<8x16xf32>
    tpu.vector_store %arg8[%c40_257, %c0_258], %469 {strides = array<i32>} : memref<64x16xf32, #tpu.memory_space<vmem>>, vector<8x16xf32>,
    %c40_259 = arith.constant 40 : index
    %c0_260 = arith.constant 0 : index
    %513 = vector.load %arg9[%c40_259, %c0_260] : memref<64x16xf32, #tpu.memory_space<vmem>>, vector<8x16xf32>
    tpu.vector_store %arg9[%c40_259, %c0_260], %471 {strides = array<i32>} : memref<64x16xf32, #tpu.memory_space<vmem>>, vector<8x16xf32>,
    %c40_261 = arith.constant 40 : index
    %c0_262 = arith.constant 0 : index
    %514 = vector.load %arg10[%c40_261, %c0_262] : memref<64x32xf32, #tpu.memory_space<vmem>>, vector<8x32xf32>
    tpu.vector_store %arg10[%c40_261, %c0_262], %478 {strides = array<i32>} : memref<64x32xf32, #tpu.memory_space<vmem>>, vector<8x32xf32>,
    %c48_263 = arith.constant 48 : index
    %c0_264 = arith.constant 0 : index
    %515 = vector.load %arg5[%c48_263, %c0_264] : memref<64x128xf32, #tpu.memory_space<vmem>>, vector<8x128xf32>
    %c48_265 = arith.constant 48 : index
    %c0_266 = arith.constant 0 : index
    %516 = vector.load %arg1[%c48_265, %c0_266] : memref<64x16xf32, #tpu.memory_space<vmem>>, vector<8x16xf32>
    %c104_267 = arith.constant 104 : index
    %c0_268 = arith.constant 0 : index
    %517 = vector.load %arg2[%c104_267, %c0_268] : memref<528x128xf32, #tpu.memory_space<vmem>>, vector<32x128xf32>
    %cst_269 = arith.constant dense<0.000000e+00> : vector<8x128xf32>
    %518 = tpu.matmul %509, %517, %cst_269 {dimension_numbers = #tpu.dot_dimension_numbers<[1], [0], [0], [1], [0, 0, 1, 1], [], []>} : vector<8x32xf32>, vector<32x128xf32>, vector<8x128xf32> -> vector<8x128xf32>
    %519 = vector.extract_strided_slice %515 {offsets = [0, 0], sizes = [8, 32], strides = [1, 1]} : vector<8x128xf32> to vector<8x32xf32>
    %520 = vector.extract_strided_slice %518 {offsets = [0, 0], sizes = [8, 32], strides = [1, 1]} : vector<8x128xf32> to vector<8x32xf32>
    %521 = arith.addf %519, %520 : vector<8x32xf32>
    %cst_270 = arith.constant 0.000000e+00 : f32
    %522 = vector.broadcast %cst_270 : f32 to vector<8x32xf32>
    %523 = arith.maximumf %521, %522 : vector<8x32xf32>
    %c136_271 = arith.constant 136 : index
    %c0_272 = arith.constant 0 : index
    %524 = vector.load %arg2[%c136_271, %c0_272] : memref<528x128xf32, #tpu.memory_space<vmem>>, vector<32x32xf32>
    %cst_273 = arith.constant dense<0.000000e+00> : vector<8x32xf32>
    %525 = tpu.matmul %523, %524, %cst_273 {dimension_numbers = #tpu.dot_dimension_numbers<[1], [0], [0], [1], [0, 0, 1, 1], [], []>} : vector<8x32xf32>, vector<32x32xf32>, vector<8x32xf32> -> vector<8x32xf32>
    %c168_274 = arith.constant 168 : index
    %c0_275 = arith.constant 0 : index
    %526 = vector.load %arg2[%c168_274, %c0_275] : memref<528x128xf32, #tpu.memory_space<vmem>>, vector<1x32xf32>
    %527 = vector.broadcast %526 : vector<1x32xf32> to vector<8x32xf32>
    %528 = arith.addf %525, %527 : vector<8x32xf32>
    %cst_276 = arith.constant 0.000000e+00 : f32
    %529 = vector.broadcast %cst_276 : f32 to vector<8x32xf32>
    %530 = arith.maximumf %528, %529 : vector<8x32xf32>
    %c176_277 = arith.constant 176 : index
    %c0_278 = arith.constant 0 : index
    %531 = vector.load %arg2[%c176_277, %c0_278] : memref<528x128xf32, #tpu.memory_space<vmem>>, vector<32x32xf32>
    %cst_279 = arith.constant dense<0.000000e+00> : vector<8x32xf32>
    %532 = tpu.matmul %530, %531, %cst_279 {dimension_numbers = #tpu.dot_dimension_numbers<[1], [0], [0], [1], [0, 0, 1, 1], [], []>} : vector<8x32xf32>, vector<32x32xf32>, vector<8x32xf32> -> vector<8x32xf32>
    %c208_280 = arith.constant 208 : index
    %c0_281 = arith.constant 0 : index
    %533 = vector.load %arg2[%c208_280, %c0_281] : memref<528x128xf32, #tpu.memory_space<vmem>>, vector<1x32xf32>
    %534 = vector.broadcast %533 : vector<1x32xf32> to vector<8x32xf32>
    %535 = arith.addf %532, %534 : vector<8x32xf32>
    %536 = vector.extract_strided_slice %535 {offsets = [0, 0], sizes = [8, 16], strides = [1, 1]} : vector<8x32xf32> to vector<8x16xf32>
    %537 = vector.extract_strided_slice %535 {offsets = [0, 16], sizes = [8, 16], strides = [1, 1]} : vector<8x32xf32> to vector<8x16xf32>
    %cst_282 = arith.constant 0.000000e+00 : f32
    %538 = vector.broadcast %cst_282 : f32 to vector<8x16xf32>
    %539 = arith.maximumf %537, %538 : vector<8x16xf32>
    %540 = vector.broadcast %cst_282 : f32 to vector<8x16xf32>
    %541 = arith.subf %537, %540 : vector<8x16xf32>
    %542 = arith.cmpf one, %541, %541 : vector<8x16xf32>
    %543 = vector.broadcast %cst_282 : f32 to vector<8x16xf32>
    %544 = arith.addf %537, %543 : vector<8x16xf32>
    %545 = math.absf %541 : vector<8x16xf32>
    %cst_283 = arith.constant 0.000000e+00 : f32
    %546 = vector.broadcast %cst_283 : f32 to vector<8x16xf32>
    %547 = arith.subf %546, %545 : vector<8x16xf32>
    %548 = math.exp %547 : vector<8x16xf32>
    %549 = math.log1p %548 : vector<8x16xf32>
    %550 = arith.addf %539, %549 : vector<8x16xf32>
    %551 = arith.select %542, %544, %550 : vector<8x16xi1>, vector<8x16xf32>
    %552 = arith.mulf %516, %551 : vector<8x16xf32>
    %553 = arith.addf %552, %536 : vector<8x16xf32>
    %c216_284 = arith.constant 216 : index
    %c0_285 = arith.constant 0 : index
    %554 = vector.load %arg2[%c216_284, %c0_285] : memref<528x128xf32, #tpu.memory_space<vmem>>, vector<16x32xf32>
    %cst_286 = arith.constant dense<0.000000e+00> : vector<8x32xf32>
    %555 = tpu.matmul %553, %554, %cst_286 {dimension_numbers = #tpu.dot_dimension_numbers<[1], [0], [0], [1], [0, 0, 1, 1], [], []>} : vector<8x16xf32>, vector<16x32xf32>, vector<8x32xf32> -> vector<8x32xf32>
    %c232_287 = arith.constant 232 : index
    %c0_288 = arith.constant 0 : index
    %556 = vector.load %arg2[%c232_287, %c0_288] : memref<528x128xf32, #tpu.memory_space<vmem>>, vector<1x32xf32>
    %557 = vector.broadcast %556 : vector<1x32xf32> to vector<8x32xf32>
    %558 = arith.addf %555, %557 : vector<8x32xf32>
    %cst_289 = arith.constant 0.000000e+00 : f32
    %559 = vector.broadcast %cst_289 : f32 to vector<8x32xf32>
    %560 = arith.maximumf %558, %559 : vector<8x32xf32>
    %561 = vector.extract_strided_slice %515 {offsets = [0, 32], sizes = [8, 96], strides = [1, 1]} : vector<8x128xf32> to vector<8x96xf32>
    %c240_290 = arith.constant 240 : index
    %c0_291 = arith.constant 0 : index
    %562 = vector.load %arg2[%c240_290, %c0_291] : memref<528x128xf32, #tpu.memory_space<vmem>>, vector<32x96xf32>
    %cst_292 = arith.constant dense<0.000000e+00> : vector<8x96xf32>
    %563 = tpu.matmul %560, %562, %cst_292 {dimension_numbers = #tpu.dot_dimension_numbers<[1], [0], [0], [1], [0, 0, 1, 1], [], []>} : vector<8x32xf32>, vector<32x96xf32>, vector<8x96xf32> -> vector<8x96xf32>
    %564 = arith.addf %561, %563 : vector<8x96xf32>
    %565 = vector.extract_strided_slice %518 {offsets = [0, 32], sizes = [8, 96], strides = [1, 1]} : vector<8x128xf32> to vector<8x96xf32>
    %566 = vector.extract_strided_slice %564 {offsets = [0, 0], sizes = [8, 32], strides = [1, 1]} : vector<8x96xf32> to vector<8x32xf32>
    %567 = vector.extract_strided_slice %565 {offsets = [0, 0], sizes = [8, 32], strides = [1, 1]} : vector<8x96xf32> to vector<8x32xf32>
    %568 = arith.addf %566, %567 : vector<8x32xf32>
    %569 = arith.negf %568 : vector<8x32xf32>
    %570 = math.exp %569 : vector<8x32xf32>
    %cst_293 = arith.constant 1.000000e+00 : f32
    %571 = vector.broadcast %cst_293 : f32 to vector<8x32xf32>
    %572 = arith.addf %571, %570 : vector<8x32xf32>
    %573 = arith.divf %571, %572 : vector<8x32xf32>
    %574 = vector.extract_strided_slice %564 {offsets = [0, 32], sizes = [8, 32], strides = [1, 1]} : vector<8x96xf32> to vector<8x32xf32>
    %575 = vector.extract_strided_slice %565 {offsets = [0, 32], sizes = [8, 32], strides = [1, 1]} : vector<8x96xf32> to vector<8x32xf32>
    %576 = arith.addf %574, %575 : vector<8x32xf32>
    %577 = arith.negf %576 : vector<8x32xf32>
    %578 = math.exp %577 : vector<8x32xf32>
    %cst_294 = arith.constant 1.000000e+00 : f32
    %579 = vector.broadcast %cst_294 : f32 to vector<8x32xf32>
    %580 = arith.addf %579, %578 : vector<8x32xf32>
    %581 = arith.divf %579, %580 : vector<8x32xf32>
    %582 = vector.extract_strided_slice %564 {offsets = [0, 64], sizes = [8, 32], strides = [1, 1]} : vector<8x96xf32> to vector<8x32xf32>
    %583 = vector.extract_strided_slice %565 {offsets = [0, 64], sizes = [8, 32], strides = [1, 1]} : vector<8x96xf32> to vector<8x32xf32>
    %584 = arith.mulf %573, %583 : vector<8x32xf32>
    %585 = arith.addf %582, %584 : vector<8x32xf32>
    %586 = math.tanh %585 : vector<8x32xf32>
    %cst_295 = arith.constant 1.000000e+00 : f32
    %587 = vector.broadcast %cst_295 : f32 to vector<8x32xf32>
    %588 = arith.subf %587, %581 : vector<8x32xf32>
    %589 = arith.mulf %588, %586 : vector<8x32xf32>
    %590 = arith.mulf %581, %509 : vector<8x32xf32>
    %591 = arith.addf %589, %590 : vector<8x32xf32>
    %c56_296 = arith.constant 56 : index
    %c0_297 = arith.constant 0 : index
    %592 = vector.load %arg6[%c56_296, %c0_297] : memref<72x32xf32, #tpu.memory_space<vmem>>, vector<8x32xf32>
    tpu.vector_store %arg6[%c56_296, %c0_297], %591 {strides = array<i32>} : memref<72x32xf32, #tpu.memory_space<vmem>>, vector<8x32xf32>,
    %c48_298 = arith.constant 48 : index
    %c0_299 = arith.constant 0 : index
    %593 = vector.load %arg7[%c48_298, %c0_299] : memref<64x16xf32, #tpu.memory_space<vmem>>, vector<8x16xf32>
    tpu.vector_store %arg7[%c48_298, %c0_299], %536 {strides = array<i32>} : memref<64x16xf32, #tpu.memory_space<vmem>>, vector<8x16xf32>,
    %c48_300 = arith.constant 48 : index
    %c0_301 = arith.constant 0 : index
    %594 = vector.load %arg8[%c48_300, %c0_301] : memref<64x16xf32, #tpu.memory_space<vmem>>, vector<8x16xf32>
    tpu.vector_store %arg8[%c48_300, %c0_301], %551 {strides = array<i32>} : memref<64x16xf32, #tpu.memory_space<vmem>>, vector<8x16xf32>,
    %c48_302 = arith.constant 48 : index
    %c0_303 = arith.constant 0 : index
    %595 = vector.load %arg9[%c48_302, %c0_303] : memref<64x16xf32, #tpu.memory_space<vmem>>, vector<8x16xf32>
    tpu.vector_store %arg9[%c48_302, %c0_303], %553 {strides = array<i32>} : memref<64x16xf32, #tpu.memory_space<vmem>>, vector<8x16xf32>,
    %c48_304 = arith.constant 48 : index
    %c0_305 = arith.constant 0 : index
    %596 = vector.load %arg10[%c48_304, %c0_305] : memref<64x32xf32, #tpu.memory_space<vmem>>, vector<8x32xf32>
    tpu.vector_store %arg10[%c48_304, %c0_305], %560 {strides = array<i32>} : memref<64x32xf32, #tpu.memory_space<vmem>>, vector<8x32xf32>,
    %c56_306 = arith.constant 56 : index
    %c0_307 = arith.constant 0 : index
    %597 = vector.load %arg5[%c56_306, %c0_307] : memref<64x128xf32, #tpu.memory_space<vmem>>, vector<8x128xf32>
    %c56_308 = arith.constant 56 : index
    %c0_309 = arith.constant 0 : index
    %598 = vector.load %arg1[%c56_308, %c0_309] : memref<64x16xf32, #tpu.memory_space<vmem>>, vector<8x16xf32>
    %c104_310 = arith.constant 104 : index
    %c0_311 = arith.constant 0 : index
    %599 = vector.load %arg2[%c104_310, %c0_311] : memref<528x128xf32, #tpu.memory_space<vmem>>, vector<32x128xf32>
    %cst_312 = arith.constant dense<0.000000e+00> : vector<8x128xf32>
    %600 = tpu.matmul %591, %599, %cst_312 {dimension_numbers = #tpu.dot_dimension_numbers<[1], [0], [0], [1], [0, 0, 1, 1], [], []>} : vector<8x32xf32>, vector<32x128xf32>, vector<8x128xf32> -> vector<8x128xf32>
    %601 = vector.extract_strided_slice %597 {offsets = [0, 0], sizes = [8, 32], strides = [1, 1]} : vector<8x128xf32> to vector<8x32xf32>
    %602 = vector.extract_strided_slice %600 {offsets = [0, 0], sizes = [8, 32], strides = [1, 1]} : vector<8x128xf32> to vector<8x32xf32>
    %603 = arith.addf %601, %602 : vector<8x32xf32>
    %cst_313 = arith.constant 0.000000e+00 : f32
    %604 = vector.broadcast %cst_313 : f32 to vector<8x32xf32>
    %605 = arith.maximumf %603, %604 : vector<8x32xf32>
    %c136_314 = arith.constant 136 : index
    %c0_315 = arith.constant 0 : index
    %606 = vector.load %arg2[%c136_314, %c0_315] : memref<528x128xf32, #tpu.memory_space<vmem>>, vector<32x32xf32>
    %cst_316 = arith.constant dense<0.000000e+00> : vector<8x32xf32>
    %607 = tpu.matmul %605, %606, %cst_316 {dimension_numbers = #tpu.dot_dimension_numbers<[1], [0], [0], [1], [0, 0, 1, 1], [], []>} : vector<8x32xf32>, vector<32x32xf32>, vector<8x32xf32> -> vector<8x32xf32>
    %c168_317 = arith.constant 168 : index
    %c0_318 = arith.constant 0 : index
    %608 = vector.load %arg2[%c168_317, %c0_318] : memref<528x128xf32, #tpu.memory_space<vmem>>, vector<1x32xf32>
    %609 = vector.broadcast %608 : vector<1x32xf32> to vector<8x32xf32>
    %610 = arith.addf %607, %609 : vector<8x32xf32>
    %cst_319 = arith.constant 0.000000e+00 : f32
    %611 = vector.broadcast %cst_319 : f32 to vector<8x32xf32>
    %612 = arith.maximumf %610, %611 : vector<8x32xf32>
    %c176_320 = arith.constant 176 : index
    %c0_321 = arith.constant 0 : index
    %613 = vector.load %arg2[%c176_320, %c0_321] : memref<528x128xf32, #tpu.memory_space<vmem>>, vector<32x32xf32>
    %cst_322 = arith.constant dense<0.000000e+00> : vector<8x32xf32>
    %614 = tpu.matmul %612, %613, %cst_322 {dimension_numbers = #tpu.dot_dimension_numbers<[1], [0], [0], [1], [0, 0, 1, 1], [], []>} : vector<8x32xf32>, vector<32x32xf32>, vector<8x32xf32> -> vector<8x32xf32>
    %c208_323 = arith.constant 208 : index
    %c0_324 = arith.constant 0 : index
    %615 = vector.load %arg2[%c208_323, %c0_324] : memref<528x128xf32, #tpu.memory_space<vmem>>, vector<1x32xf32>
    %616 = vector.broadcast %615 : vector<1x32xf32> to vector<8x32xf32>
    %617 = arith.addf %614, %616 : vector<8x32xf32>
    %618 = vector.extract_strided_slice %617 {offsets = [0, 0], sizes = [8, 16], strides = [1, 1]} : vector<8x32xf32> to vector<8x16xf32>
    %619 = vector.extract_strided_slice %617 {offsets = [0, 16], sizes = [8, 16], strides = [1, 1]} : vector<8x32xf32> to vector<8x16xf32>
    %cst_325 = arith.constant 0.000000e+00 : f32
    %620 = vector.broadcast %cst_325 : f32 to vector<8x16xf32>
    %621 = arith.maximumf %619, %620 : vector<8x16xf32>
    %622 = vector.broadcast %cst_325 : f32 to vector<8x16xf32>
    %623 = arith.subf %619, %622 : vector<8x16xf32>
    %624 = arith.cmpf one, %623, %623 : vector<8x16xf32>
    %625 = vector.broadcast %cst_325 : f32 to vector<8x16xf32>
    %626 = arith.addf %619, %625 : vector<8x16xf32>
    %627 = math.absf %623 : vector<8x16xf32>
    %cst_326 = arith.constant 0.000000e+00 : f32
    %628 = vector.broadcast %cst_326 : f32 to vector<8x16xf32>
    %629 = arith.subf %628, %627 : vector<8x16xf32>
    %630 = math.exp %629 : vector<8x16xf32>
    %631 = math.log1p %630 : vector<8x16xf32>
    %632 = arith.addf %621, %631 : vector<8x16xf32>
    %633 = arith.select %624, %626, %632 : vector<8x16xi1>, vector<8x16xf32>
    %634 = arith.mulf %598, %633 : vector<8x16xf32>
    %635 = arith.addf %634, %618 : vector<8x16xf32>
    %c216_327 = arith.constant 216 : index
    %c0_328 = arith.constant 0 : index
    %636 = vector.load %arg2[%c216_327, %c0_328] : memref<528x128xf32, #tpu.memory_space<vmem>>, vector<16x32xf32>
    %cst_329 = arith.constant dense<0.000000e+00> : vector<8x32xf32>
    %637 = tpu.matmul %635, %636, %cst_329 {dimension_numbers = #tpu.dot_dimension_numbers<[1], [0], [0], [1], [0, 0, 1, 1], [], []>} : vector<8x16xf32>, vector<16x32xf32>, vector<8x32xf32> -> vector<8x32xf32>
    %c232_330 = arith.constant 232 : index
    %c0_331 = arith.constant 0 : index
    %638 = vector.load %arg2[%c232_330, %c0_331] : memref<528x128xf32, #tpu.memory_space<vmem>>, vector<1x32xf32>
    %639 = vector.broadcast %638 : vector<1x32xf32> to vector<8x32xf32>
    %640 = arith.addf %637, %639 : vector<8x32xf32>
    %cst_332 = arith.constant 0.000000e+00 : f32
    %641 = vector.broadcast %cst_332 : f32 to vector<8x32xf32>
    %642 = arith.maximumf %640, %641 : vector<8x32xf32>
    %643 = vector.extract_strided_slice %597 {offsets = [0, 32], sizes = [8, 96], strides = [1, 1]} : vector<8x128xf32> to vector<8x96xf32>
    %c240_333 = arith.constant 240 : index
    %c0_334 = arith.constant 0 : index
    %644 = vector.load %arg2[%c240_333, %c0_334] : memref<528x128xf32, #tpu.memory_space<vmem>>, vector<32x96xf32>
    %cst_335 = arith.constant dense<0.000000e+00> : vector<8x96xf32>
    %645 = tpu.matmul %642, %644, %cst_335 {dimension_numbers = #tpu.dot_dimension_numbers<[1], [0], [0], [1], [0, 0, 1, 1], [], []>} : vector<8x32xf32>, vector<32x96xf32>, vector<8x96xf32> -> vector<8x96xf32>
    %646 = arith.addf %643, %645 : vector<8x96xf32>
    %647 = vector.extract_strided_slice %600 {offsets = [0, 32], sizes = [8, 96], strides = [1, 1]} : vector<8x128xf32> to vector<8x96xf32>
    %648 = vector.extract_strided_slice %646 {offsets = [0, 0], sizes = [8, 32], strides = [1, 1]} : vector<8x96xf32> to vector<8x32xf32>
    %649 = vector.extract_strided_slice %647 {offsets = [0, 0], sizes = [8, 32], strides = [1, 1]} : vector<8x96xf32> to vector<8x32xf32>
    %650 = arith.addf %648, %649 : vector<8x32xf32>
    %651 = arith.negf %650 : vector<8x32xf32>
    %652 = math.exp %651 : vector<8x32xf32>
    %cst_336 = arith.constant 1.000000e+00 : f32
    %653 = vector.broadcast %cst_336 : f32 to vector<8x32xf32>
    %654 = arith.addf %653, %652 : vector<8x32xf32>
    %655 = arith.divf %653, %654 : vector<8x32xf32>
    %656 = vector.extract_strided_slice %646 {offsets = [0, 32], sizes = [8, 32], strides = [1, 1]} : vector<8x96xf32> to vector<8x32xf32>
    %657 = vector.extract_strided_slice %647 {offsets = [0, 32], sizes = [8, 32], strides = [1, 1]} : vector<8x96xf32> to vector<8x32xf32>
    %658 = arith.addf %656, %657 : vector<8x32xf32>
    %659 = arith.negf %658 : vector<8x32xf32>
    %660 = math.exp %659 : vector<8x32xf32>
    %cst_337 = arith.constant 1.000000e+00 : f32
    %661 = vector.broadcast %cst_337 : f32 to vector<8x32xf32>
    %662 = arith.addf %661, %660 : vector<8x32xf32>
    %663 = arith.divf %661, %662 : vector<8x32xf32>
    %664 = vector.extract_strided_slice %646 {offsets = [0, 64], sizes = [8, 32], strides = [1, 1]} : vector<8x96xf32> to vector<8x32xf32>
    %665 = vector.extract_strided_slice %647 {offsets = [0, 64], sizes = [8, 32], strides = [1, 1]} : vector<8x96xf32> to vector<8x32xf32>
    %666 = arith.mulf %655, %665 : vector<8x32xf32>
    %667 = arith.addf %664, %666 : vector<8x32xf32>
    %668 = math.tanh %667 : vector<8x32xf32>
    %cst_338 = arith.constant 1.000000e+00 : f32
    %669 = vector.broadcast %cst_338 : f32 to vector<8x32xf32>
    %670 = arith.subf %669, %663 : vector<8x32xf32>
    %671 = arith.mulf %670, %668 : vector<8x32xf32>
    %672 = arith.mulf %663, %591 : vector<8x32xf32>
    %673 = arith.addf %671, %672 : vector<8x32xf32>
    %c64_339 = arith.constant 64 : index
    %c0_340 = arith.constant 0 : index
    %674 = vector.load %arg6[%c64_339, %c0_340] : memref<72x32xf32, #tpu.memory_space<vmem>>, vector<8x32xf32>
    tpu.vector_store %arg6[%c64_339, %c0_340], %673 {strides = array<i32>} : memref<72x32xf32, #tpu.memory_space<vmem>>, vector<8x32xf32>,
    %c56_341 = arith.constant 56 : index
    %c0_342 = arith.constant 0 : index
    %675 = vector.load %arg7[%c56_341, %c0_342] : memref<64x16xf32, #tpu.memory_space<vmem>>, vector<8x16xf32>
    tpu.vector_store %arg7[%c56_341, %c0_342], %618 {strides = array<i32>} : memref<64x16xf32, #tpu.memory_space<vmem>>, vector<8x16xf32>,
    %c56_343 = arith.constant 56 : index
    %c0_344 = arith.constant 0 : index
    %676 = vector.load %arg8[%c56_343, %c0_344] : memref<64x16xf32, #tpu.memory_space<vmem>>, vector<8x16xf32>
    tpu.vector_store %arg8[%c56_343, %c0_344], %633 {strides = array<i32>} : memref<64x16xf32, #tpu.memory_space<vmem>>, vector<8x16xf32>,
    %c56_345 = arith.constant 56 : index
    %c0_346 = arith.constant 0 : index
    %677 = vector.load %arg9[%c56_345, %c0_346] : memref<64x16xf32, #tpu.memory_space<vmem>>, vector<8x16xf32>
    tpu.vector_store %arg9[%c56_345, %c0_346], %635 {strides = array<i32>} : memref<64x16xf32, #tpu.memory_space<vmem>>, vector<8x16xf32>,
    %c56_347 = arith.constant 56 : index
    %c0_348 = arith.constant 0 : index
    %678 = vector.load %arg10[%c56_347, %c0_348] : memref<64x32xf32, #tpu.memory_space<vmem>>, vector<8x32xf32>
    tpu.vector_store %arg10[%c56_347, %c0_348], %642 {strides = array<i32>} : memref<64x32xf32, #tpu.memory_space<vmem>>, vector<8x32xf32>,
    %c0_349 = arith.constant 0 : index
    %c0_350 = arith.constant 0 : index
    %679 = vector.load %arg6[%c0_349, %c0_350] : memref<72x32xf32, #tpu.memory_space<vmem>>, vector<64x32xf32>
    %c8_351 = arith.constant 8 : index
    %c0_352 = arith.constant 0 : index
    %680 = vector.load %arg6[%c8_351, %c0_352] : memref<72x32xf32, #tpu.memory_space<vmem>>, vector<64x32xf32>
    %c0_353 = arith.constant 0 : index
    %c0_354 = arith.constant 0 : index
    %681 = vector.load %arg7[%c0_353, %c0_354] : memref<64x16xf32, #tpu.memory_space<vmem>>, vector<64x16xf32>
    %c0_355 = arith.constant 0 : index
    %c0_356 = arith.constant 0 : index
    %682 = vector.load %arg8[%c0_355, %c0_356] : memref<64x16xf32, #tpu.memory_space<vmem>>, vector<64x16xf32>
    %c0_357 = arith.constant 0 : index
    %c0_358 = arith.constant 0 : index
    %683 = vector.load %arg9[%c0_357, %c0_358] : memref<64x16xf32, #tpu.memory_space<vmem>>, vector<64x16xf32>
    %c0_359 = arith.constant 0 : index
    %c0_360 = arith.constant 0 : index
    %684 = vector.load %arg10[%c0_359, %c0_360] : memref<64x32xf32, #tpu.memory_space<vmem>>, vector<64x32xf32>
    %c0_361 = arith.constant 0 : index
    %c0_362 = arith.constant 0 : index
    %685 = vector.load %arg0[%c0_361, %c0_362] : memref<64x12xf32, #tpu.memory_space<vmem>>, vector<64x12xf32>
    %c272 = arith.constant 272 : index
    %c0_363 = arith.constant 0 : index
    %686 = vector.load %arg2[%c272, %c0_363] : memref<528x128xf32, #tpu.memory_space<vmem>>, vector<32x32xf32>
    %cst_364 = arith.constant dense<0.000000e+00> : vector<64x32xf32>
    %687 = tpu.matmul %679, %686, %cst_364 {dimension_numbers = #tpu.dot_dimension_numbers<[1], [0], [0], [1], [0, 0, 1, 1], [], []>} : vector<64x32xf32>, vector<32x32xf32>, vector<64x32xf32> -> vector<64x32xf32>
    %c304 = arith.constant 304 : index
    %c0_365 = arith.constant 0 : index
    %688 = vector.load %arg2[%c304, %c0_365] : memref<528x128xf32, #tpu.memory_space<vmem>>, vector<1x32xf32>
    %689 = vector.broadcast %688 : vector<1x32xf32> to vector<64x32xf32>
    %690 = arith.addf %687, %689 : vector<64x32xf32>
    %cst_366 = arith.constant 0.000000e+00 : f32
    %691 = vector.broadcast %cst_366 : f32 to vector<64x32xf32>
    %692 = arith.maximumf %690, %691 : vector<64x32xf32>
    %c312 = arith.constant 312 : index
    %c0_367 = arith.constant 0 : index
    %693 = vector.load %arg2[%c312, %c0_367] : memref<528x128xf32, #tpu.memory_space<vmem>>, vector<32x32xf32>
    %cst_368 = arith.constant dense<0.000000e+00> : vector<64x32xf32>
    %694 = tpu.matmul %692, %693, %cst_368 {dimension_numbers = #tpu.dot_dimension_numbers<[1], [0], [0], [1], [0, 0, 1, 1], [], []>} : vector<64x32xf32>, vector<32x32xf32>, vector<64x32xf32> -> vector<64x32xf32>
    %c344 = arith.constant 344 : index
    %c0_369 = arith.constant 0 : index
    %695 = vector.load %arg2[%c344, %c0_369] : memref<528x128xf32, #tpu.memory_space<vmem>>, vector<1x32xf32>
    %696 = vector.broadcast %695 : vector<1x32xf32> to vector<64x32xf32>
    %697 = arith.addf %694, %696 : vector<64x32xf32>
    %698 = vector.extract_strided_slice %697 {offsets = [0, 0], sizes = [64, 16], strides = [1, 1]} : vector<64x32xf32> to vector<64x16xf32>
    %699 = vector.extract_strided_slice %697 {offsets = [0, 16], sizes = [64, 16], strides = [1, 1]} : vector<64x32xf32> to vector<64x16xf32>
    %cst_370 = arith.constant 0.000000e+00 : f32
    %700 = vector.broadcast %cst_370 : f32 to vector<64x16xf32>
    %701 = arith.maximumf %699, %700 : vector<64x16xf32>
    %702 = vector.broadcast %cst_370 : f32 to vector<64x16xf32>
    %703 = arith.subf %699, %702 : vector<64x16xf32>
    %704 = arith.cmpf one, %703, %703 : vector<64x16xf32>
    %705 = vector.broadcast %cst_370 : f32 to vector<64x16xf32>
    %706 = arith.addf %699, %705 : vector<64x16xf32>
    %707 = math.absf %703 : vector<64x16xf32>
    %cst_371 = arith.constant 0.000000e+00 : f32
    %708 = vector.broadcast %cst_371 : f32 to vector<64x16xf32>
    %709 = arith.subf %708, %707 : vector<64x16xf32>
    %710 = math.exp %709 : vector<64x16xf32>
    %711 = math.log1p %710 : vector<64x16xf32>
    %712 = arith.addf %701, %711 : vector<64x16xf32>
    %713 = arith.select %704, %706, %712 : vector<64x16xi1>, vector<64x16xf32>
    %c352 = arith.constant 352 : index
    %c0_372 = arith.constant 0 : index
    %714 = vector.load %arg2[%c352, %c0_372] : memref<528x128xf32, #tpu.memory_space<vmem>>, vector<32x32xf32>
    %cst_373 = arith.constant dense<0.000000e+00> : vector<64x32xf32>
    %715 = tpu.matmul %684, %714, %cst_373 {dimension_numbers = #tpu.dot_dimension_numbers<[1], [0], [0], [1], [0, 0, 1, 1], [], []>} : vector<64x32xf32>, vector<32x32xf32>, vector<64x32xf32> -> vector<64x32xf32>
    %c384 = arith.constant 384 : index
    %c0_374 = arith.constant 0 : index
    %716 = vector.load %arg2[%c384, %c0_374] : memref<528x128xf32, #tpu.memory_space<vmem>>, vector<32x32xf32>
    %cst_375 = arith.constant dense<0.000000e+00> : vector<64x32xf32>
    %717 = tpu.matmul %679, %716, %cst_375 {dimension_numbers = #tpu.dot_dimension_numbers<[1], [0], [0], [1], [0, 0, 1, 1], [], []>} : vector<64x32xf32>, vector<32x32xf32>, vector<64x32xf32> -> vector<64x32xf32>
    %718 = arith.addf %715, %717 : vector<64x32xf32>
    %c416 = arith.constant 416 : index
    %c0_376 = arith.constant 0 : index
    %719 = vector.load %arg2[%c416, %c0_376] : memref<528x128xf32, #tpu.memory_space<vmem>>, vector<1x32xf32>
    %720 = vector.broadcast %719 : vector<1x32xf32> to vector<64x32xf32>
    %721 = arith.addf %718, %720 : vector<64x32xf32>
    %cst_377 = arith.constant 0.000000e+00 : f32
    %722 = vector.broadcast %cst_377 : f32 to vector<64x32xf32>
    %723 = arith.maximumf %721, %722 : vector<64x32xf32>
    %c424 = arith.constant 424 : index
    %c0_378 = arith.constant 0 : index
    %724 = vector.load %arg2[%c424, %c0_378] : memref<528x128xf32, #tpu.memory_space<vmem>>, vector<32x32xf32>
    %cst_379 = arith.constant dense<0.000000e+00> : vector<64x32xf32>
    %725 = tpu.matmul %723, %724, %cst_379 {dimension_numbers = #tpu.dot_dimension_numbers<[1], [0], [0], [1], [0, 0, 1, 1], [], []>} : vector<64x32xf32>, vector<32x32xf32>, vector<64x32xf32> -> vector<64x32xf32>
    %c456 = arith.constant 456 : index
    %c0_380 = arith.constant 0 : index
    %726 = vector.load %arg2[%c456, %c0_380] : memref<528x128xf32, #tpu.memory_space<vmem>>, vector<1x32xf32>
    %727 = vector.broadcast %726 : vector<1x32xf32> to vector<64x32xf32>
    %728 = arith.addf %725, %727 : vector<64x32xf32>
    %cst_381 = arith.constant 0.000000e+00 : f32
    %729 = vector.broadcast %cst_381 : f32 to vector<64x32xf32>
    %730 = arith.maximumf %728, %729 : vector<64x32xf32>
    %c464 = arith.constant 464 : index
    %c0_382 = arith.constant 0 : index
    %731 = vector.load %arg2[%c464, %c0_382] : memref<528x128xf32, #tpu.memory_space<vmem>>, vector<32x24xf32>
    %cst_383 = arith.constant dense<0.000000e+00> : vector<64x24xf32>
    %732 = tpu.matmul %730, %731, %cst_383 {dimension_numbers = #tpu.dot_dimension_numbers<[1], [0], [0], [1], [0, 0, 1, 1], [], []>} : vector<64x32xf32>, vector<32x24xf32>, vector<64x24xf32> -> vector<64x24xf32>
    %c496 = arith.constant 496 : index
    %c0_384 = arith.constant 0 : index
    %733 = vector.load %arg2[%c496, %c0_384] : memref<528x128xf32, #tpu.memory_space<vmem>>, vector<1x24xf32>
    %734 = vector.broadcast %733 : vector<1x24xf32> to vector<64x24xf32>
    %735 = arith.addf %732, %734 : vector<64x24xf32>
    %736 = vector.extract_strided_slice %735 {offsets = [0, 0], sizes = [64, 12], strides = [1, 1]} : vector<64x24xf32> to vector<64x12xf32>
    %cst_385 = arith.constant 0.000000e+00 : f32
    %737 = vector.broadcast %cst_385 : f32 to vector<64x12xf32>
    %738 = arith.maximumf %736, %737 : vector<64x12xf32>
    %c504 = arith.constant 504 : index
    %c0_386 = arith.constant 0 : index
    %739 = vector.load %arg2[%c504, %c0_386] : memref<528x128xf32, #tpu.memory_space<vmem>>, vector<12x12xf32>
    %cst_387 = arith.constant dense<0.000000e+00> : vector<64x12xf32>
    %740 = tpu.matmul %738, %739, %cst_387 {dimension_numbers = #tpu.dot_dimension_numbers<[1], [0], [0], [1], [0, 0, 1, 1], [], []>} : vector<64x12xf32>, vector<12x12xf32>, vector<64x12xf32> -> vector<64x12xf32>
    %c520 = arith.constant 520 : index
    %c0_388 = arith.constant 0 : index
    %741 = vector.load %arg2[%c520, %c0_388] : memref<528x128xf32, #tpu.memory_space<vmem>>, vector<1x12xf32>
    %742 = vector.broadcast %741 : vector<1x12xf32> to vector<64x12xf32>
    %743 = arith.addf %740, %742 : vector<64x12xf32>
    %744 = vector.extract_strided_slice %735 {offsets = [0, 12], sizes = [64, 12], strides = [1, 1]} : vector<64x24xf32> to vector<64x12xf32>
    %cst_389 = arith.constant 0.000000e+00 : f32
    %745 = vector.broadcast %cst_389 : f32 to vector<64x12xf32>
    %746 = arith.maximumf %744, %745 : vector<64x12xf32>
    %747 = vector.broadcast %cst_389 : f32 to vector<64x12xf32>
    %748 = arith.subf %744, %747 : vector<64x12xf32>
    %749 = arith.cmpf one, %748, %748 : vector<64x12xf32>
    %750 = vector.broadcast %cst_389 : f32 to vector<64x12xf32>
    %751 = arith.addf %744, %750 : vector<64x12xf32>
    %752 = math.absf %748 : vector<64x12xf32>
    %cst_390 = arith.constant 0.000000e+00 : f32
    %753 = vector.broadcast %cst_390 : f32 to vector<64x12xf32>
    %754 = arith.subf %753, %752 : vector<64x12xf32>
    %755 = math.exp %754 : vector<64x12xf32>
    %756 = math.log1p %755 : vector<64x12xf32>
    %757 = arith.addf %746, %756 : vector<64x12xf32>
    %758 = arith.select %749, %751, %757 : vector<64x12xi1>, vector<64x12xf32>
    %cst_391 = arith.constant 9.99999971E-10 : f32
    %759 = vector.broadcast %cst_391 : f32 to vector<64x16xf32>
    %760 = arith.maximumf %682, %759 : vector<64x16xf32>
    %cst_392 = arith.constant 9.99999971E-10 : f32
    %761 = vector.broadcast %cst_392 : f32 to vector<64x16xf32>
    %762 = arith.maximumf %713, %761 : vector<64x16xf32>
    %763 = arith.mulf %760, %760 : vector<64x16xf32>
    %764 = arith.mulf %762, %762 : vector<64x16xf32>
    %765 = tpu.reciprocal %764 : vector<64x16xf32> -> vector<64x16xf32>
    %766 = tpu.reciprocal %763 : vector<64x16xf32> -> vector<64x16xf32>
    %767 = arith.mulf %764, %766 : vector<64x16xf32>
    %768 = math.log %767 : vector<64x16xf32>
    %769 = arith.subf %681, %698 : vector<64x16xf32>
    %770 = arith.mulf %769, %769 : vector<64x16xf32>
    %771 = arith.addf %763, %770 : vector<64x16xf32>
    %772 = arith.mulf %771, %765 : vector<64x16xf32>
    %773 = arith.addf %768, %772 : vector<64x16xf32>
    %cst_393 = arith.constant 1.000000e+00 : f32
    %774 = vector.broadcast %cst_393 : f32 to vector<64x16xf32>
    %775 = arith.subf %773, %774 : vector<64x16xf32>
    %cst_394 = arith.constant 2.000000e+00 : f32
    %776 = vector.broadcast %cst_394 : f32 to vector<64x12xf32>
    %777 = arith.mulf %776, %758 : vector<64x12xf32>
    %778 = arith.mulf %777, %758 : vector<64x12xf32>
    %779 = tpu.reciprocal %778 : vector<64x12xf32> -> vector<64x12xf32>
    %cst_395 = arith.constant 9.99999974E-6 : f32
    %780 = vector.broadcast %cst_395 : f32 to vector<64x12xf32>
    %781 = arith.addf %758, %780 : vector<64x12xf32>
    %782 = math.log %781 : vector<64x12xf32>
    %cst_396 = arith.constant 6.28318548 : f32
    %783 = math.log %cst_396 : f32
    %cst_397 = arith.constant 2.000000e+00 : f32
    %784 = arith.divf %783, %cst_397 : f32
    %785 = vector.broadcast %784 : f32 to vector<64x12xf32>
    %786 = arith.addf %782, %785 : vector<64x12xf32>
    %787 = arith.subf %685, %743 : vector<64x12xf32>
    %788 = arith.mulf %787, %787 : vector<64x12xf32>
    %789 = arith.mulf %788, %779 : vector<64x12xf32>
    %790 = arith.addf %786, %789 : vector<64x12xf32>
    %791 = arith.subf %743, %685 : vector<64x12xf32>
    %792 = arith.mulf %791, %791 : vector<64x12xf32>
    %793 = tpu.iota {dimensions = array<i32: 0>} : vector<64x1xi32>
    %c7_i32 = arith.constant 7 : i32
    %794 = vector.broadcast %c7_i32 : i32 to vector<64x1xi32>
    %795 = arith.andi %793, %794 : vector<64x1xi32>
    %c2_i32 = arith.constant 2 : i32
    %796 = vector.broadcast %c2_i32 : i32 to vector<64x1xi32>
    %797 = arith.cmpi slt, %795, %796 : vector<64x1xi32>
    %798 = arith.extui %797 : vector<64x1xi1> to vector<64x1xi32>
    %799 = arith.sitofp %798 : vector<64x1xi32> to vector<64x1xf32>
    %800 = vector.broadcast %799 : vector<64x1xf32> to vector<64x16xf32>
    %801 = arith.mulf %775, %800 : vector<64x16xf32>
    %802 = vector.shape_cast %801 : vector<64x16xf32> to vector<1x64x16xf32>
    %cst_398 = arith.constant dense<0.000000e+00> : vector<1xf32>
    %803 = vector.multi_reduction <add>, %802, %cst_398 [1, 2] : vector<1x64x16xf32> to vector<1xf32>
    %804 = vector.shape_cast %803 : vector<1xf32> to vector<1x1x1xf32>
    %805 = vector.extract %804[0, 0, 0] : f32 from vector<1x1x1xf32>
    %cst_399 = arith.constant 5.000000e-01 : f32
    %806 = arith.mulf %cst_399, %805 : f32
    %c0_400 = arith.constant 0 : index
    %807 = memref.load %arg4[%c0_400] : memref<3xf32, #tpu.memory_space<smem>>
    memref.store %806, %arg4[%c0_400] : memref<3xf32, #tpu.memory_space<smem>>
    %808 = vector.broadcast %799 : vector<64x1xf32> to vector<64x12xf32>
    %809 = arith.mulf %790, %808 : vector<64x12xf32>
    %810 = vector.shape_cast %809 : vector<64x12xf32> to vector<1x64x12xf32>
    %cst_401 = arith.constant dense<0.000000e+00> : vector<1xf32>
    %811 = vector.multi_reduction <add>, %810, %cst_401 [1, 2] : vector<1x64x12xf32> to vector<1xf32>
    %812 = vector.shape_cast %811 : vector<1xf32> to vector<1x1x1xf32>
    %813 = vector.extract %812[0, 0, 0] : f32 from vector<1x1x1xf32>
    %c1 = arith.constant 1 : index
    %814 = memref.load %arg4[%c1] : memref<3xf32, #tpu.memory_space<smem>>
    memref.store %813, %arg4[%c1] : memref<3xf32, #tpu.memory_space<smem>>
    %815 = vector.broadcast %799 : vector<64x1xf32> to vector<64x12xf32>
    %816 = arith.mulf %792, %815 : vector<64x12xf32>
    %817 = vector.shape_cast %816 : vector<64x12xf32> to vector<1x64x12xf32>
    %cst_402 = arith.constant dense<0.000000e+00> : vector<1xf32>
    %818 = vector.multi_reduction <add>, %817, %cst_402 [1, 2] : vector<1x64x12xf32> to vector<1xf32>
    %819 = vector.shape_cast %818 : vector<1xf32> to vector<1x1x1xf32>
    %820 = vector.extract %819[0, 0, 0] : f32 from vector<1x1x1xf32>
    %c2 = arith.constant 2 : index
    %821 = memref.load %arg4[%c2] : memref<3xf32, #tpu.memory_space<smem>>
    memref.store %820, %arg4[%c2] : memref<3xf32, #tpu.memory_space<smem>>
    %cst_403 = arith.constant 0.000000e+00 : f32
    %822 = vector.broadcast %cst_403 : f32 to vector<64x8xf32>
    %823 = tpu.concatenate %680, %681, %682, %683, %743, %758, %775, %822 in 1 : vector<64x32xf32>, vector<64x16xf32>, vector<64x16xf32>, vector<64x16xf32>, vector<64x12xf32>, vector<64x12xf32>, vector<64x16xf32>, vector<64x8xf32> -> vector<64x128xf32>
    %c0_404 = arith.constant 0 : index
    %c0_405 = arith.constant 0 : index
    %824 = vector.load %arg3[%c0_404, %c0_405] : memref<64x128xf32, #tpu.memory_space<vmem>>, vector<64x128xf32>
    tpu.vector_store %arg3[%c0_404, %c0_405], %823 {strides = array<i32>} : memref<64x128xf32, #tpu.memory_space<vmem>>, vector<64x128xf32>,
    return
  }
}

</mosaic_0001>

<llo_original>
// kernel: vrnn_forward.1
$region0: #{vrnn_forward.1}
  #allocation0 [shape = 'u32[]', space=smem, size = 0x4, offset = 0x4, fixed_abs, tag = 'smem constant byte address 0x4 - core index']
  #allocation1 [shape = 'u32[72,128]{1,0:T(1,128)}', space=vmem, size = 0x9000, scoped, tag = 'internal scratch']
  #allocation2 [shape = 'f32[64,128]{1,0:T(8,128)}', space=vmem, size = 0x8000, scoped, tag = 'scratch operand']
  #allocation3 [shape = 'f32[72,32]{1,0:T(8,128)}', space=vmem, size = 0x9000, scoped, tag = 'scratch operand']
  #allocation4 [shape = 'f32[64,16]{1,0:T(8,128)}', space=vmem, size = 0x8000, scoped, tag = 'scratch operand']
  #allocation5 [shape = 'f32[64,16]{1,0:T(8,128)}', space=vmem, size = 0x8000, scoped, tag = 'scratch operand']
  #allocation6 [shape = 'f32[64,16]{1,0:T(8,128)}', space=vmem, size = 0x8000, scoped, tag = 'scratch operand']
  #allocation7 [shape = 'f32[64,32]{1,0:T(8,128)}', space=vmem, size = 0x8000, scoped, tag = 'scratch operand']
  %s0 = inlined_call_operand.vmem [shape: f32[64,12], index: 0, kind: input, shape index: {}]
  %s1 = inlined_call_operand.vmem [shape: f32[64,16], index: 1, kind: input, shape index: {}]
  %s2 = inlined_call_operand.vmem [shape: f32[528,128], index: 2, kind: input, shape index: {}]
  %s3 = inlined_call_operand.vmem [shape: f32[64,128], index: 3, kind: output, shape index: {0}]
  %s4 = inlined_call_operand.hbm [shape: f32[3], index: 4, kind: output, shape index: {1}]
  %5 = xla_tuple %s3, %s4
  %s6 = sld [smem:[#allocation0]]
  $region30: #{vrnn_forward.1} parent=0
    _
  %s8 = ssub.s32 1, %s6
  %s9 = scalar_select 0, %s8, %s6
  $region1: #{vrnn_forward.1} parent=0
    #allocation8 [shape = 'u8[512]{0}', space=smem, size = 0x200, scoped, tag = 'output window, operand 1, single buffered']
    #allocation9 [shape = 's32[1]{0}', space=sflag, size = 0x4, scoped, tag = 'scoped memory for vrnn_forward.1']
    %10 = vsyncpa [#allocation9], 0
    // Predicated region
    $region2: #{vrnn_forward.1} parent=1 // pred_check
      _
    $region3: #{vrnn_forward.1} parent=1 // pred_check_branch
      %12 = sbr.rel (0) target = $region5
    $region4: #{vrnn_forward.1} parent=1 // pred_region
      _
    $region5: #{vrnn_forward.1} parent=1 // pred_fallthru
      _
    // Predicated region
    $region6: #{vrnn_forward.1} parent=1 // pred_check
      _
    $region7: #{vrnn_forward.1} parent=1 // pred_check_branch
      %14 = sbr.rel (0) target = $region9
    $region8: #{vrnn_forward.1} parent=1 // pred_region
      _
    $region9: #{vrnn_forward.1} parent=1 // pred_fallthru
      _
    // Predicated region
    $region10: #{vrnn_forward.1} parent=1 // pred_check
      _
    $region11: #{vrnn_forward.1} parent=1 // pred_check_branch
      %16 = sbr.rel (0) target = $region13
    $region12: #{vrnn_forward.1} parent=1 // pred_region
      _
    $region13: #{vrnn_forward.1} parent=1 // pred_fallthru
      _
    %v17 = vld [vmem:[%s0] sm:$0xff]
    %v18 = vld [vmem:[%s0 + $0x8] sm:$0xff]
    %v19 = vld [vmem:[%s0 + $0x10] sm:$0xff]
    %v20 = vld [vmem:[%s0 + $0x18] sm:$0xff]
    %v21 = vld [vmem:[%s0 + $0x20] sm:$0xff]
    %v22 = vld [vmem:[%s0 + $0x28] sm:$0xff]
    %v23 = vld [vmem:[%s0 + $0x30] sm:$0xff]
    %v24 = vld [vmem:[%s0 + $0x38] sm:$0xff]
    %v25 = vld [vmem:[%s2] sm:$0xff]
    %v26 = vld [vmem:[%s2 + $0x8] sm:$0xf]
    %v27 = vld [vmem:[%s2 + $0x10] sm:$0x1]
    %v28 = vperm.slane %v27, 0
    %vm29 = vcmask 97280
    %v31 = vsel %vm29, %v17, 0
    %v34 = vsel %vm29, %v18, 0
    %v37 = vsel %vm29, %v19, 0
    %v40 = vsel %vm29, %v20, 0
    %v43 = vsel %vm29, %v21, 0
    %v46 = vsel %vm29, %v22, 0
    %v49 = vsel %vm29, %v23, 0
    %v52 = vsel %vm29, %v24, 0
    %vm54 = vcmask 1043456
    %v56 = vsel %vm54, %v26, 0
    %58 = vmatpush.msra.mxu0 0.0
    %59 = vmatpush.msra.mxu0 0.0
    %60 = vmatpush.msra.mxu0 0.0
    %61 = vmatpush.msra.mxu0 0.0
    %62 = vmatpush.msra.mxu0 0.0
    %63 = vmatpush.msra.mxu0 0.0
    %64 = vmatpush.msra.mxu0 0.0
    %65 = vmatpush.msra.mxu0 0.0
    %66 = vmatpush.msra.mxu0 0.0
    %67 = vmatpush.msra.mxu0 0.0
    %68 = vmatpush.msra.mxu0 0.0
    %69 = vmatpush.msra.mxu0 0.0
    %70 = vmatpush.msra.mxu0 0.0
    %71 = vmatpush.msra.mxu0 0.0
    %72 = vmatpush.msra.mxu0 %v56
    %73 = vmatpush.msra.mxu0 %v25
    %74 = vmatmul.f32.gmra.mxu0 %v31
    %v75 = vpop.f32.mrf.mxu0
    %v76 = vadd.f32 %v28, %v75
    %77 = vmatmul.f32.gmra.mxu0 %v34
    %v78 = vpop.f32.mrf.mxu0
    %v79 = vadd.f32 %v28, %v78
    %80 = vmatmul.f32.gmra.mxu0 %v37
    %v81 = vpop.f32.mrf.mxu0
    %v82 = vadd.f32 %v28, %v81
    %83 = vmatmul.f32.gmra.mxu0 %v40
    %v84 = vpop.f32.mrf.mxu0
    %v85 = vadd.f32 %v28, %v84
    %86 = vmatmul.f32.gmra.mxu0 %v43
    %v87 = vpop.f32.mrf.mxu0
    %v88 = vadd.f32 %v28, %v87
    %89 = vmatmul.f32.gmra.mxu0 %v46
    %v90 = vpop.f32.mrf.mxu0
    %v91 = vadd.f32 %v28, %v90
    %92 = vmatmul.f32.gmra.mxu0 %v49
    %v93 = vpop.f32.mrf.mxu0
    %v94 = vadd.f32 %v28, %v93
    %95 = vmatmul.f32.gmra.mxu0 %v52
    %v96 = vpop.f32.mrf.mxu0
    %v97 = vadd.f32 %v28, %v96
    %98 = vdwg.mxu0
    %v99 = vmax.f32 %v76, 0.0
    %v100 = vmax.f32 %v79, 0.0
    %v101 = vmax.f32 %v82, 0.0
    %v102 = vmax.f32 %v85, 0.0
    %v103 = vmax.f32 %v88, 0.0
    %v104 = vmax.f32 %v91, 0.0
    %v105 = vmax.f32 %v94, 0.0
    %v106 = vmax.f32 %v97, 0.0
    %v107 = vld [vmem:[%s2 + $0x18] sm:$0xff]
    %v108 = vld [vmem:[%s2 + $0x20] sm:$0xff]
    %v109 = vld [vmem:[%s2 + $0x28] sm:$0xff]
    %v110 = vld [vmem:[%s2 + $0x30] sm:$0xff]
    %v111 = vld [vmem:[%s2 + $0x38] sm:$0x1]
    %v112 = vperm.slane %v111, 0
    %vm113 = vcmask 261120
    %v115 = vsel %vm113, %v99, 0
    %v118 = vsel %vm113, %v100, 0
    %v121 = vsel %vm113, %v101, 0
    %v124 = vsel %vm113, %v102, 0
    %v127 = vsel %vm113, %v103, 0
    %v130 = vsel %vm113, %v104, 0
    %v133 = vsel %vm113, %v105, 0
    %v136 = vsel %vm113, %v106, 0
    %138 = vmatpush.msra.mxu0 0.0
    %139 = vmatpush.msra.mxu0 0.0
    %140 = vmatpush.msra.mxu0 0.0
    %141 = vmatpush.msra.mxu0 0.0
    %142 = vmatpush.msra.mxu0 0.0
    %143 = vmatpush.msra.mxu0 0.0
    %144 = vmatpush.msra.mxu0 0.0
    %145 = vmatpush.msra.mxu0 0.0
    %146 = vmatpush.msra.mxu0 0.0
    %147 = vmatpush.msra.mxu0 0.0
    %148 = vmatpush.msra.mxu0 0.0
    %149 = vmatpush.msra.mxu0 0.0
    %150 = vmatpush.msra.mxu0 %v110
    %151 = vmatpush.msra.mxu0 %v109
    %152 = vmatpush.msra.mxu0 %v108
    %153 = vmatpush.msra.mxu0 %v107
    %154 = vmatmul.f32.gmra.mxu0 %v115
    %v155 = vpop.f32.mrf.mxu0
    %v156 = vadd.f32 %v112, %v155
    %157 = vmatmul.f32.gmra.mxu0 %v118
    %v158 = vpop.f32.mrf.mxu0
    %v159 = vadd.f32 %v112, %v158
    %160 = vmatmul.f32.gmra.mxu0 %v121
    %v161 = vpop.f32.mrf.mxu0
    %v162 = vadd.f32 %v112, %v161
    %163 = vmatmul.f32.gmra.mxu0 %v124
    %v164 = vpop.f32.mrf.mxu0
    %v165 = vadd.f32 %v112, %v164
    %166 = vmatmul.f32.gmra.mxu0 %v127
    %v167 = vpop.f32.mrf.mxu0
    %v168 = vadd.f32 %v112, %v167
    %169 = vmatmul.f32.gmra.mxu0 %v130
    %v170 = vpop.f32.mrf.mxu0
    %v171 = vadd.f32 %v112, %v170
    %172 = vmatmul.f32.gmra.mxu0 %v133
    %v173 = vpop.f32.mrf.mxu0
    %v174 = vadd.f32 %v112, %v173
    %175 = vmatmul.f32.gmra.mxu0 %v136
    %v176 = vpop.f32.mrf.mxu0
    %v177 = vadd.f32 %v112, %v176
    %178 = vdwg.mxu0
    %v179 = vmax.f32 %v156, 0.0
    %v180 = vmax.f32 %v159, 0.0
    %v181 = vmax.f32 %v162, 0.0
    %v182 = vmax.f32 %v165, 0.0
    %v183 = vmax.f32 %v168, 0.0
    %v184 = vmax.f32 %v171, 0.0
    %v185 = vmax.f32 %v174, 0.0
    %v186 = vmax.f32 %v177, 0.0
    %v187 = vld [vmem:[%s2 + $0x40] sm:$0xff]
    %v188 = vld [vmem:[%s2 + $0x48] sm:$0xff]
    %v189 = vld [vmem:[%s2 + $0x50] sm:$0xff]
    %v190 = vld [vmem:[%s2 + $0x58] sm:$0xff]
    %v191 = vld [vmem:[%s2 + $0x60] sm:$0x1]
    %v192 = vperm.slane %v191, 0
    %v194 = vsel %vm113, %v179, 0
    %v197 = vsel %vm113, %v180, 0
    %v200 = vsel %vm113, %v181, 0
    %v203 = vsel %vm113, %v182, 0
    %v206 = vsel %vm113, %v183, 0
    %v209 = vsel %vm113, %v184, 0
    %v212 = vsel %vm113, %v185, 0
    %v215 = vsel %vm113, %v186, 0
    %217 = vmatpush.msra.mxu0 0.0
    %218 = vmatpush.msra.mxu0 0.0
    %219 = vmatpush.msra.mxu0 0.0
    %220 = vmatpush.msra.mxu0 0.0
    %221 = vmatpush.msra.mxu0 0.0
    %222 = vmatpush.msra.mxu0 0.0
    %223 = vmatpush.msra.mxu0 0.0
    %224 = vmatpush.msra.mxu0 0.0
    %225 = vmatpush.msra.mxu0 0.0
    %226 = vmatpush.msra.mxu0 0.0
    %227 = vmatpush.msra.mxu0 0.0
    %228 = vmatpush.msra.mxu0 0.0
    %229 = vmatpush.msra.mxu0 %v190
    %230 = vmatpush.msra.mxu0 %v189
    %231 = vmatpush.msra.mxu0 %v188
    %232 = vmatpush.msra.mxu0 %v187
    %233 = vmatmul.f32.gmra.mxu0 %v194
    %v234 = vpop.f32.mrf.mxu0
    %v235 = vadd.f32 %v192, %v234
    %236 = vmatmul.f32.gmra.mxu0 %v197
    %v237 = vpop.f32.mrf.mxu0
    %v238 = vadd.f32 %v192, %v237
    %239 = vmatmul.f32.gmra.mxu0 %v200
    %v240 = vpop.f32.mrf.mxu0
    %v241 = vadd.f32 %v192, %v240
    %242 = vmatmul.f32.gmra.mxu0 %v203
    %v243 = vpop.f32.mrf.mxu0
    %v244 = vadd.f32 %v192, %v243
    %245 = vmatmul.f32.gmra.mxu0 %v206
    %v246 = vpop.f32.mrf.mxu0
    %v247 = vadd.f32 %v192, %v246
    %248 = vmatmul.f32.gmra.mxu0 %v209
    %v249 = vpop.f32.mrf.mxu0
    %v250 = vadd.f32 %v192, %v249
    %251 = vmatmul.f32.gmra.mxu0 %v212
    %v252 = vpop.f32.mrf.mxu0
    %v253 = vadd.f32 %v192, %v252
    %254 = vmatmul.f32.gmra.mxu0 %v215
    %v255 = vpop.f32.mrf.mxu0
    %v256 = vadd.f32 %v192, %v255
    %257 = vdwg.mxu0
    %258 = vst [vmem:[#allocation2] sm:$0xff] %v235
    %259 = vst [vmem:[#allocation2 + $0x8] sm:$0xff] %v238
    %260 = vst [vmem:[#allocation2 + $0x10] sm:$0xff] %v241
    %261 = vst [vmem:[#allocation2 + $0x18] sm:$0xff] %v244
    %262 = vst [vmem:[#allocation2 + $0x20] sm:$0xff] %v247
    %263 = vst [vmem:[#allocation2 + $0x28] sm:$0xff] %v250
    %264 = vst [vmem:[#allocation2 + $0x30] sm:$0xff] %v253
    %265 = vst [vmem:[#allocation2 + $0x38] sm:$0xff] %v256
    %266 = vst.msk [vmem:[#allocation3] sm:$0xff] %vm113, 0.0
    %v267 = vld [vmem:[#allocation2] sm:$0xff]
    %v268 = vld [vmem:[%s1] sm:$0xff]
    %v269 = vld [vmem:[%s2 + $0x68] sm:$0xff]
    %v270 = vld [vmem:[%s2 + $0x70] sm:$0xff]
    %v271 = vld [vmem:[%s2 + $0x78] sm:$0xff]
    %v272 = vld [vmem:[%s2 + $0x80] sm:$0xff]
    %v274 = vsel %vm113, 0.0, 0
    %276 = vmatpush.msra.mxu0 0.0
    %277 = vmatpush.msra.mxu0 0.0
    %278 = vmatpush.msra.mxu0 0.0
    %279 = vmatpush.msra.mxu0 0.0
    %280 = vmatpush.msra.mxu0 0.0
    %281 = vmatpush.msra.mxu0 0.0
    %282 = vmatpush.msra.mxu0 0.0
    %283 = vmatpush.msra.mxu0 0.0
    %284 = vmatpush.msra.mxu0 0.0
    %285 = vmatpush.msra.mxu0 0.0
    %286 = vmatpush.msra.mxu0 0.0
    %287 = vmatpush.msra.mxu0 0.0
    %288 = vmatpush.msra.mxu0 %v272
    %289 = vmatpush.msra.mxu0 %v271
    %290 = vmatpush.msra.mxu0 %v270
    %291 = vmatpush.msra.mxu0 %v269
    %292 = vmatmul.f32.gmra.mxu0 %v274
    %v293 = vpop.f32.mrf.mxu0
    %v294 = vadd.f32 0.0, %v293
    %295 = vdwg.mxu0
    %v296 = vadd.f32 %v267, %v294
    %v297 = vmax.f32 %v296, 0.0
    %v298 = vld [vmem:[%s2 + $0x88] sm:$0xff]
    %v299 = vld [vmem:[%s2 + $0x90] sm:$0xff]
    %v300 = vld [vmem:[%s2 + $0x98] sm:$0xff]
    %v301 = vld [vmem:[%s2 + $0xa0] sm:$0xff]
    %v302 = vld [vmem:[%s2 + $0xa8] sm:$0x1]
    %v303 = vperm.slane %v302, 0
    %v305 = vsel %vm113, %v297, 0
    %307 = vmatpush.msra.mxu0 0.0
    %308 = vmatpush.msra.mxu0 0.0
    %309 = vmatpush.msra.mxu0 0.0
    %310 = vmatpush.msra.mxu0 0.0
    %311 = vmatpush.msra.mxu0 0.0
    %312 = vmatpush.msra.mxu0 0.0
    %313 = vmatpush.msra.mxu0 0.0
    %314 = vmatpush.msra.mxu0 0.0
    %315 = vmatpush.msra.mxu0 0.0
    %316 = vmatpush.msra.mxu0 0.0
    %317 = vmatpush.msra.mxu0 0.0
    %318 = vmatpush.msra.mxu0 0.0
    %319 = vmatpush.msra.mxu0 %v301
    %320 = vmatpush.msra.mxu0 %v300
    %321 = vmatpush.msra.mxu0 %v299
    %322 = vmatpush.msra.mxu0 %v298
    %323 = vmatmul.f32.gmra.mxu0 %v305
    %v324 = vpop.f32.mrf.mxu0
    %v325 = vadd.f32 %v303, %v324
    %326 = vdwg.mxu0
    %v327 = vmax.f32 %v325, 0.0
    %v328 = vld [vmem:[%s2 + $0xb0] sm:$0xff]
    %v329 = vld [vmem:[%s2 + $0xb8] sm:$0xff]
    %v330 = vld [vmem:[%s2 + $0xc0] sm:$0xff]
    %v331 = vld [vmem:[%s2 + $0xc8] sm:$0xff]
    %v332 = vld [vmem:[%s2 + $0xd0] sm:$0x1]
    %v333 = vperm.slane %v332, 0
    %v335 = vsel %vm113, %v327, 0
    %337 = vmatpush.msra.mxu0 0.0
    %338 = vmatpush.msra.mxu0 0.0
    %339 = vmatpush.msra.mxu0 0.0
    %340 = vmatpush.msra.mxu0 0.0
    %341 = vmatpush.msra.mxu0 0.0
    %342 = vmatpush.msra.mxu0 0.0
    %343 = vmatpush.msra.mxu0 0.0
    %344 = vmatpush.msra.mxu0 0.0
    %345 = vmatpush.msra.mxu0 0.0
    %346 = vmatpush.msra.mxu0 0.0
    %347 = vmatpush.msra.mxu0 0.0
    %348 = vmatpush.msra.mxu0 0.0
    %349 = vmatpush.msra.mxu0 %v331
    %350 = vmatpush.msra.mxu0 %v330
    %351 = vmatpush.msra.mxu0 %v329
    %352 = vmatpush.msra.mxu0 %v328
    %353 = vmatmul.f32.gmra.mxu0 %v335
    %v354 = vpop.f32.mrf.mxu0
    %v355 = vadd.f32 %v333, %v354
    %356 = vdwg.mxu0
    %v357 = vmax.f32 %v355, 0.0
    %vm358 = vcmp.ne.f32.partialorder %v355, %v355
    %v359 = vadd.f32 %v355, 0.0
    %v360 = vand.u32 2147483647, %v355
    %v361 = vsub.f32 0.0, %v360
    %v362 = vmul.f32 %v361, 1.442695
    %v363 = vpow.pop %v362
    %v364 = vadd.f32 %v363, 1.0
    %v365 = vlog2.pop %v364
    %v366 = vmul.f32 %v365, 0.6931472
    %v367 = vmul.f32 -0.5, %v363
    %v368 = vadd.f32 %v367, 1.0
    %v369 = vmul.f32 %v368, %v363
    %v370 = vand.u32 2147483647, %v363
    %vm371 = vcmp.lt.f32.partialorder %v370, 0.0004427343
    %v372 = vsel %vm371, %v369, %v366
    %v373 = vadd.f32 %v357, %v372
    %v374 = vsel %vm358, %v359, %v373
    %376 = vrot.lane.b32.xlu0 %v374, 112
    %v377 = vpop.permute.xlu0 %376
    %v379 = vmul.f32 %v268, %v377
    %v380 = vadd.f32 %v379, %v355
    %v381 = vld [vmem:[%s2 + $0xd8] sm:$0xff]
    %v382 = vld [vmem:[%s2 + $0xe0] sm:$0xff]
    %v383 = vld [vmem:[%s2 + $0xe8] sm:$0x1]
    %v384 = vperm.slane %v383, 0
    %vm385 = vcmask 130048
    %v387 = vsel %vm385, %v380, 0
    %389 = vmatpush.msra.mxu0 0.0
    %390 = vmatpush.msra.mxu0 0.0
    %391 = vmatpush.msra.mxu0 0.0
    %392 = vmatpush.msra.mxu0 0.0
    %393 = vmatpush.msra.mxu0 0.0
    %394 = vmatpush.msra.mxu0 0.0
    %395 = vmatpush.msra.mxu0 0.0
    %396 = vmatpush.msra.mxu0 0.0
    %397 = vmatpush.msra.mxu0 0.0
    %398 = vmatpush.msra.mxu0 0.0
    %399 = vmatpush.msra.mxu0 0.0
    %400 = vmatpush.msra.mxu0 0.0
    %401 = vmatpush.msra.mxu0 0.0
    %402 = vmatpush.msra.mxu0 0.0
    %403 = vmatpush.msra.mxu0 %v382
    %404 = vmatpush.msra.mxu0 %v381
    %405 = vmatmul.f32.gmra.mxu0 %v387
    %v406 = vpop.f32.mrf.mxu0
    %v407 = vadd.f32 %v384, %v406
    %408 = vdwg.mxu0
    %v409 = vmax.f32 %v407, 0.0
    %v410 = vld [vmem:[%s2 + $0xf0] sm:$0xff]
    %v411 = vld [vmem:[%s2 + $0xf8] sm:$0xff]
    %v412 = vld [vmem:[%s2 + $0x100] sm:$0xff]
    %v413 = vld [vmem:[%s2 + $0x108] sm:$0xff]
    %v415 = vsel %vm113, %v409, 0
    %417 = vmatpush.msra.mxu0 0.0
    %418 = vmatpush.msra.mxu0 0.0
    %419 = vmatpush.msra.mxu0 0.0
    %420 = vmatpush.msra.mxu0 0.0
    %421 = vmatpush.msra.mxu0 0.0
    %422 = vmatpush.msra.mxu0 0.0
    %423 = vmatpush.msra.mxu0 0.0
    %424 = vmatpush.msra.mxu0 0.0
    %425 = vmatpush.msra.mxu0 0.0
    %426 = vmatpush.msra.mxu0 0.0
    %427 = vmatpush.msra.mxu0 0.0
    %428 = vmatpush.msra.mxu0 0.0
    %429 = vmatpush.msra.mxu0 %v413
    %430 = vmatpush.msra.mxu0 %v412
    %431 = vmatpush.msra.mxu0 %v411
    %432 = vmatpush.msra.mxu0 %v410
    %433 = vmatmul.f32.gmra.mxu0 %v415
    %v434 = vpop.f32.mrf.mxu0
    %v435 = vadd.f32 0.0, %v434
    %436 = vdwg.mxu0
    %438 = vrot.lane.b32.xlu0 %v435, 32
    %v439 = vpop.permute.xlu0 %438
    %v441 = vadd.f32 %v267, %v439
    %v442 = vadd.f32 %v441, %v294
    %v443 = vxor.u32 %v442, 2147483648
    %v444 = vmul.f32 %v443, 1.442695
    %v445 = vpow.pop %v444
    %v446 = vadd.f32 %v445, 1.0
    %v447 = vrcp.pop %v446
    %v448 = vmul.f32 %v446, %v447
    %v449 = vsub.f32 1.0, %v448
    %v450 = vmul.f32 %v447, %v449
    %v451 = vadd.f32 %v447, %v450
    %vm452 = vweird.f32 %v446
    %vm453 = vweird.f32 %v447
    %vm454 = vmor %vm452, %vm453
    %v455 = vsel %vm454, %v447, %v451
    %v456 = vand.u32 2147483647, %v446
    %vm457 = vcmp.eq.f32.partialorder %v456, 8.507059e+37
    %v458 = vand.u32 %v446, 2147483648
    %v459 = vor.u32 1.1754944e-38, %v458
    %v460 = vsel %vm457, %v459, %v455
    %v461 = vmul.f32 1.0, %v460
    %463 = vrot.lane.b32.xlu0 %v294, 64
    %v464 = vpop.permute.xlu0 %463
    %v466 = vmul.f32 %v461, %v464
    %468 = vrot.lane.b32.xlu0 %v466, 64
    %v469 = vpop.permute.xlu0 %468
    %v471 = vadd.f32 %v441, %v469
    %v472 = vtanh.pop %v471
    %v473 = vsub.f32 1.0, %v461
    %475 = vrot.lane.b32.xlu0 %v472, 96
    %v476 = vpop.permute.xlu0 %475
    %v478 = vmul.f32 %v473, %v476
    %v479 = vmul.f32 %v461, 0.0
    %v480 = vadd.f32 %v478, %v479
    %482 = vrot.lane.b32.xlu0 %v480, 64
    %v483 = vpop.permute.xlu0 %482
    %485 = vst.msk [vmem:[#allocation3 + $0x8] sm:$0xff] %vm113, %v483
    %486 = vst.msk [vmem:[#allocation4] sm:$0xff] %vm385, %v355
    %487 = vst.msk [vmem:[#allocation5] sm:$0xff] %vm385, %v377
    %488 = vst.msk [vmem:[#allocation6] sm:$0xff] %vm385, %v380
    %489 = vst.msk [vmem:[#allocation7] sm:$0xff] %vm113, %v409
    %v490 = vld [vmem:[#allocation2 + $0x8] sm:$0xff]
    %v491 = vld [vmem:[%s1 + $0x8] sm:$0xff]
    %v492 = vld [vmem:[%s2 + $0x68] sm:$0xff]
    %v493 = vld [vmem:[%s2 + $0x70] sm:$0xff]
    %v494 = vld [vmem:[%s2 + $0x78] sm:$0xff]
    %v495 = vld [vmem:[%s2 + $0x80] sm:$0xff]
    %v496 = vsel %vm113, %v483, 0
    %498 = vmatpush.msra.mxu0 0.0
    %499 = vmatpush.msra.mxu0 0.0
    %500 = vmatpush.msra.mxu0 0.0
    %501 = vmatpush.msra.mxu0 0.0
    %502 = vmatpush.msra.mxu0 0.0
    %503 = vmatpush.msra.mxu0 0.0
    %504 = vmatpush.msra.mxu0 0.0
    %505 = vmatpush.msra.mxu0 0.0
    %506 = vmatpush.msra.mxu0 0.0
    %507 = vmatpush.msra.mxu0 0.0
    %508 = vmatpush.msra.mxu0 0.0
    %509 = vmatpush.msra.mxu0 0.0
    %510 = vmatpush.msra.mxu0 %v495
    %511 = vmatpush.msra.mxu0 %v494
    %512 = vmatpush.msra.mxu0 %v493
    %513 = vmatpush.msra.mxu0 %v492
    %514 = vmatmul.f32.gmra.mxu0 %v496
    %v515 = vpop.f32.mrf.mxu0
    %v516 = vadd.f32 0.0, %v515
    %517 = vdwg.mxu0
    %v518 = vadd.f32 %v490, %v516
    %v519 = vmax.f32 %v518, 0.0
    %v520 = vld [vmem:[%s2 + $0x88] sm:$0xff]
    %v521 = vld [vmem:[%s2 + $0x90] sm:$0xff]
    %v522 = vld [vmem:[%s2 + $0x98] sm:$0xff]
    %v523 = vld [vmem:[%s2 + $0xa0] sm:$0xff]
    %v524 = vld [vmem:[%s2 + $0xa8] sm:$0x1]
    %v525 = vperm.slane %v524, 0
    %v527 = vsel %vm113, %v519, 0
    %529 = vmatpush.msra.mxu0 0.0
    %530 = vmatpush.msra.mxu0 0.0
    %531 = vmatpush.msra.mxu0 0.0
    %532 = vmatpush.msra.mxu0 0.0
    %533 = vmatpush.msra.mxu0 0.0
    %534 = vmatpush.msra.mxu0 0.0
    %535 = vmatpush.msra.mxu0 0.0
    %536 = vmatpush.msra.mxu0 0.0
    %537 = vmatpush.msra.mxu0 0.0
    %538 = vmatpush.msra.mxu0 0.0
    %539 = vmatpush.msra.mxu0 0.0
    %540 = vmatpush.msra.mxu0 0.0
    %541 = vmatpush.msra.mxu0 %v523
    %542 = vmatpush.msra.mxu0 %v522
    %543 = vmatpush.msra.mxu0 %v521
    %544 = vmatpush.msra.mxu0 %v520
    %545 = vmatmul.f32.gmra.mxu0 %v527
    %v546 = vpop.f32.mrf.mxu0
    %v547 = vadd.f32 %v525, %v546
    %548 = vdwg.mxu0
    %v549 = vmax.f32 %v547, 0.0
    %v550 = vld [vmem:[%s2 + $0xb0] sm:$0xff]
    %v551 = vld [vmem:[%s2 + $0xb8] sm:$0xff]
    %v552 = vld [vmem:[%s2 + $0xc0] sm:$0xff]
    %v553 = vld [vmem:[%s2 + $0xc8] sm:$0xff]
    %v554 = vld [vmem:[%s2 + $0xd0] sm:$0x1]
    %v555 = vperm.slane %v554, 0
    %v557 = vsel %vm113, %v549, 0
    %559 = vmatpush.msra.mxu0 0.0
    %560 = vmatpush.msra.mxu0 0.0
    %561 = vmatpush.msra.mxu0 0.0
    %562 = vmatpush.msra.mxu0 0.0
    %563 = vmatpush.msra.mxu0 0.0
    %564 = vmatpush.msra.mxu0 0.0
    %565 = vmatpush.msra.mxu0 0.0
    %566 = vmatpush.msra.mxu0 0.0
    %567 = vmatpush.msra.mxu0 0.0
    %568 = vmatpush.msra.mxu0 0.0
    %569 = vmatpush.msra.mxu0 0.0
    %570 = vmatpush.msra.mxu0 0.0
    %571 = vmatpush.msra.mxu0 %v553
    %572 = vmatpush.msra.mxu0 %v552
    %573 = vmatpush.msra.mxu0 %v551
    %574 = vmatpush.msra.mxu0 %v550
    %575 = vmatmul.f32.gmra.mxu0 %v557
    %v576 = vpop.f32.mrf.mxu0
    %v577 = vadd.f32 %v555, %v576
    %578 = vdwg.mxu0
    %v579 = vmax.f32 %v577, 0.0
    %vm580 = vcmp.ne.f32.partialorder %v577, %v577
    %v581 = vadd.f32 %v577, 0.0
    %v582 = vand.u32 2147483647, %v577
    %v583 = vsub.f32 0.0, %v582
    %v584 = vmul.f32 %v583, 1.442695
    %v585 = vpow.pop %v584
    %v586 = vadd.f32 %v585, 1.0
    %v587 = vlog2.pop %v586
    %v588 = vmul.f32 %v587, 0.6931472
    %v589 = vmul.f32 -0.5, %v585
    %v590 = vadd.f32 %v589, 1.0
    %v591 = vmul.f32 %v590, %v585
    %v592 = vand.u32 2147483647, %v585
    %vm593 = vcmp.lt.f32.partialorder %v592, 0.0004427343
    %v594 = vsel %vm593, %v591, %v588
    %v595 = vadd.f32 %v579, %v594
    %v596 = vsel %vm580, %v581, %v595
    %598 = vrot.lane.b32.xlu0 %v596, 112
    %v599 = vpop.permute.xlu0 %598
    %v601 = vmul.f32 %v491, %v599
    %v602 = vadd.f32 %v601, %v577
    %v603 = vld [vmem:[%s2 + $0xd8] sm:$0xff]
    %v604 = vld [vmem:[%s2 + $0xe0] sm:$0xff]
    %v605 = vld [vmem:[%s2 + $0xe8] sm:$0x1]
    %v606 = vperm.slane %v605, 0
    %v608 = vsel %vm385, %v602, 0
    %610 = vmatpush.msra.mxu0 0.0
    %611 = vmatpush.msra.mxu0 0.0
    %612 = vmatpush.msra.mxu0 0.0
    %613 = vmatpush.msra.mxu0 0.0
    %614 = vmatpush.msra.mxu0 0.0
    %615 = vmatpush.msra.mxu0 0.0
    %616 = vmatpush.msra.mxu0 0.0
    %617 = vmatpush.msra.mxu0 0.0
    %618 = vmatpush.msra.mxu0 0.0
    %619 = vmatpush.msra.mxu0 0.0
    %620 = vmatpush.msra.mxu0 0.0
    %621 = vmatpush.msra.mxu0 0.0
    %622 = vmatpush.msra.mxu0 0.0
    %623 = vmatpush.msra.mxu0 0.0
    %624 = vmatpush.msra.mxu0 %v604
    %625 = vmatpush.msra.mxu0 %v603
    %626 = vmatmul.f32.gmra.mxu0 %v608
    %v627 = vpop.f32.mrf.mxu0
    %v628 = vadd.f32 %v606, %v627
    %629 = vdwg.mxu0
    %v630 = vmax.f32 %v628, 0.0
    %v631 = vld [vmem:[%s2 + $0xf0] sm:$0xff]
    %v632 = vld [vmem:[%s2 + $0xf8] sm:$0xff]
    %v633 = vld [vmem:[%s2 + $0x100] sm:$0xff]
    %v634 = vld [vmem:[%s2 + $0x108] sm:$0xff]
    %v636 = vsel %vm113, %v630, 0
    %638 = vmatpush.msra.mxu0 0.0
    %639 = vmatpush.msra.mxu0 0.0
    %640 = vmatpush.msra.mxu0 0.0
    %641 = vmatpush.msra.mxu0 0.0
    %642 = vmatpush.msra.mxu0 0.0
    %643 = vmatpush.msra.mxu0 0.0
    %644 = vmatpush.msra.mxu0 0.0
    %645 = vmatpush.msra.mxu0 0.0
    %646 = vmatpush.msra.mxu0 0.0
    %647 = vmatpush.msra.mxu0 0.0
    %648 = vmatpush.msra.mxu0 0.0
    %649 = vmatpush.msra.mxu0 0.0
    %650 = vmatpush.msra.mxu0 %v634
    %651 = vmatpush.msra.mxu0 %v633
    %652 = vmatpush.msra.mxu0 %v632
    %653 = vmatpush.msra.mxu0 %v631
    %654 = vmatmul.f32.gmra.mxu0 %v636
    %v655 = vpop.f32.mrf.mxu0
    %v656 = vadd.f32 0.0, %v655
    %657 = vdwg.mxu0
    %659 = vrot.lane.b32.xlu0 %v656, 32
    %v660 = vpop.permute.xlu0 %659
    %v662 = vadd.f32 %v490, %v660
    %v663 = vadd.f32 %v662, %v516
    %v664 = vxor.u32 %v663, 2147483648
    %v665 = vmul.f32 %v664, 1.442695
    %v666 = vpow.pop %v665
    %v667 = vadd.f32 %v666, 1.0
    %v668 = vrcp.pop %v667
    %v669 = vmul.f32 %v667, %v668
    %v670 = vsub.f32 1.0, %v669
    %v671 = vmul.f32 %v668, %v670
    %v672 = vadd.f32 %v668, %v671
    %vm673 = vweird.f32 %v667
    %vm674 = vweird.f32 %v668
    %vm675 = vmor %vm673, %vm674
    %v676 = vsel %vm675, %v668, %v672
    %v677 = vand.u32 2147483647, %v667
    %vm678 = vcmp.eq.f32.partialorder %v677, 8.507059e+37
    %v679 = vand.u32 %v667, 2147483648
    %v680 = vor.u32 1.1754944e-38, %v679
    %v681 = vsel %vm678, %v680, %v676
    %v682 = vmul.f32 1.0, %v681
    %684 = vrot.lane.b32.xlu0 %v516, 64
    %v685 = vpop.permute.xlu0 %684
    %v687 = vmul.f32 %v682, %v685
    %689 = vrot.lane.b32.xlu0 %v687, 64
    %v690 = vpop.permute.xlu0 %689
    %v692 = vadd.f32 %v662, %v690
    %v693 = vtanh.pop %v692
    %v694 = vsub.f32 1.0, %v682
    %696 = vrot.lane.b32.xlu0 %v693, 96
    %v697 = vpop.permute.xlu0 %696
    %v699 = vmul.f32 %v694, %v697
    %v700 = vmul.f32 %v682, %v480
    %v701 = vadd.f32 %v699, %v700
    %703 = vrot.lane.b32.xlu0 %v701, 64
    %v704 = vpop.permute.xlu0 %703
    %706 = vst.msk [vmem:[#allocation3 + $0x10] sm:$0xff] %vm113, %v704
    %707 = vst.msk [vmem:[#allocation4 + $0x8] sm:$0xff] %vm385, %v577
    %708 = vst.msk [vmem:[#allocation5 + $0x8] sm:$0xff] %vm385, %v599
    %709 = vst.msk [vmem:[#allocation6 + $0x8] sm:$0xff] %vm385, %v602
    %710 = vst.msk [vmem:[#allocation7 + $0x8] sm:$0xff] %vm113, %v630
    %v711 = vld [vmem:[#allocation2 + $0x10] sm:$0xff]
    %v712 = vld [vmem:[%s1 + $0x10] sm:$0xff]
    %v713 = vld [vmem:[%s2 + $0x68] sm:$0xff]
    %v714 = vld [vmem:[%s2 + $0x70] sm:$0xff]
    %v715 = vld [vmem:[%s2 + $0x78] sm:$0xff]
    %v716 = vld [vmem:[%s2 + $0x80] sm:$0xff]
    %v717 = vsel %vm113, %v704, 0
    %719 = vmatpush.msra.mxu0 0.0
    %720 = vmatpush.msra.mxu0 0.0
    %721 = vmatpush.msra.mxu0 0.0
    %722 = vmatpush.msra.mxu0 0.0
    %723 = vmatpush.msra.mxu0 0.0
    %724 = vmatpush.msra.mxu0 0.0
    %725 = vmatpush.msra.mxu0 0.0
    %726 = vmatpush.msra.mxu0 0.0
    %727 = vmatpush.msra.mxu0 0.0
    %728 = vmatpush.msra.mxu0 0.0
    %729 = vmatpush.msra.mxu0 0.0
    %730 = vmatpush.msra.mxu0 0.0
    %731 = vmatpush.msra.mxu0 %v716
    %732 = vmatpush.msra.mxu0 %v715
    %733 = vmatpush.msra.mxu0 %v714
    %734 = vmatpush.msra.mxu0 %v713
    %735 = vmatmul.f32.gmra.mxu0 %v717
    %v736 = vpop.f32.mrf.mxu0
    %v737 = vadd.f32 0.0, %v736
    %738 = vdwg.mxu0
    %v739 = vadd.f32 %v711, %v737
    %v740 = vmax.f32 %v739, 0.0
    %v741 = vld [vmem:[%s2 + $0x88] sm:$0xff]
    %v742 = vld [vmem:[%s2 + $0x90] sm:$0xff]
    %v743 = vld [vmem:[%s2 + $0x98] sm:$0xff]
    %v744 = vld [vmem:[%s2 + $0xa0] sm:$0xff]
    %v745 = vld [vmem:[%s2 + $0xa8] sm:$0x1]
    %v746 = vperm.slane %v745, 0
    %v748 = vsel %vm113, %v740, 0
    %750 = vmatpush.msra.mxu0 0.0
    %751 = vmatpush.msra.mxu0 0.0
    %752 = vmatpush.msra.mxu0 0.0
    %753 = vmatpush.msra.mxu0 0.0
    %754 = vmatpush.msra.mxu0 0.0
    %755 = vmatpush.msra.mxu0 0.0
    %756 = vmatpush.msra.mxu0 0.0
    %757 = vmatpush.msra.mxu0 0.0
    %758 = vmatpush.msra.mxu0 0.0
    %759 = vmatpush.msra.mxu0 0.0
    %760 = vmatpush.msra.mxu0 0.0
    %761 = vmatpush.msra.mxu0 0.0
    %762 = vmatpush.msra.mxu0 %v744
    %763 = vmatpush.msra.mxu0 %v743
    %764 = vmatpush.msra.mxu0 %v742
    %765 = vmatpush.msra.mxu0 %v741
    %766 = vmatmul.f32.gmra.mxu0 %v748
    %v767 = vpop.f32.mrf.mxu0
    %v768 = vadd.f32 %v746, %v767
    %769 = vdwg.mxu0
    %v770 = vmax.f32 %v768, 0.0
    %v771 = vld [vmem:[%s2 + $0xb0] sm:$0xff]
    %v772 = vld [vmem:[%s2 + $0xb8] sm:$0xff]
    %v773 = vld [vmem:[%s2 + $0xc0] sm:$0xff]
    %v774 = vld [vmem:[%s2 + $0xc8] sm:$0xff]
    %v775 = vld [vmem:[%s2 + $0xd0] sm:$0x1]
    %v776 = vperm.slane %v775, 0
    %v778 = vsel %vm113, %v770, 0
    %780 = vmatpush.msra.mxu0 0.0
    %781 = vmatpush.msra.mxu0 0.0
    %782 = vmatpush.msra.mxu0 0.0
    %783 = vmatpush.msra.mxu0 0.0
    %784 = vmatpush.msra.mxu0 0.0
    %785 = vmatpush.msra.mxu0 0.0
    %786 = vmatpush.msra.mxu0 0.0
    %787 = vmatpush.msra.mxu0 0.0
    %788 = vmatpush.msra.mxu0 0.0
    %789 = vmatpush.msra.mxu0 0.0
    %790 = vmatpush.msra.mxu0 0.0
    %791 = vmatpush.msra.mxu0 0.0
    %792 = vmatpush.msra.mxu0 %v774
    %793 = vmatpush.msra.mxu0 %v773
    %794 = vmatpush.msra.mxu0 %v772
    %795 = vmatpush.msra.mxu0 %v771
    %796 = vmatmul.f32.gmra.mxu0 %v778
    %v797 = vpop.f32.mrf.mxu0
    %v798 = vadd.f32 %v776, %v797
    %799 = vdwg.mxu0
    %v800 = vmax.f32 %v798, 0.0
    %vm801 = vcmp.ne.f32.partialorder %v798, %v798
    %v802 = vadd.f32 %v798, 0.0
    %v803 = vand.u32 2147483647, %v798
    %v804 = vsub.f32 0.0, %v803
    %v805 = vmul.f32 %v804, 1.442695
    %v806 = vpow.pop %v805
    %v807 = vadd.f32 %v806, 1.0
    %v808 = vlog2.pop %v807
    %v809 = vmul.f32 %v808, 0.6931472
    %v810 = vmul.f32 -0.5, %v806
    %v811 = vadd.f32 %v810, 1.0
    %v812 = vmul.f32 %v811, %v806
    %v813 = vand.u32 2147483647, %v806
    %vm814 = vcmp.lt.f32.partialorder %v813, 0.0004427343
    %v815 = vsel %vm814, %v812, %v809
    %v816 = vadd.f32 %v800, %v815
    %v817 = vsel %vm801, %v802, %v816
    %819 = vrot.lane.b32.xlu0 %v817, 112
    %v820 = vpop.permute.xlu0 %819
    %v822 = vmul.f32 %v712, %v820
    %v823 = vadd.f32 %v822, %v798
    %v824 = vld [vmem:[%s2 + $0xd8] sm:$0xff]
    %v825 = vld [vmem:[%s2 + $0xe0] sm:$0xff]
    %v826 = vld [vmem:[%s2 + $0xe8] sm:$0x1]
    %v827 = vperm.slane %v826, 0
    %v829 = vsel %vm385, %v823, 0
    %831 = vmatpush.msra.mxu0 0.0
    %832 = vmatpush.msra.mxu0 0.0
    %833 = vmatpush.msra.mxu0 0.0
    %834 = vmatpush.msra.mxu0 0.0
    %835 = vmatpush.msra.mxu0 0.0
    %836 = vmatpush.msra.mxu0 0.0
    %837 = vmatpush.msra.mxu0 0.0
    %838 = vmatpush.msra.mxu0 0.0
    %839 = vmatpush.msra.mxu0 0.0
    %840 = vmatpush.msra.mxu0 0.0
    %841 = vmatpush.msra.mxu0 0.0
    %842 = vmatpush.msra.mxu0 0.0
    %843 = vmatpush.msra.mxu0 0.0
    %844 = vmatpush.msra.mxu0 0.0
    %845 = vmatpush.msra.mxu0 %v825
    %846 = vmatpush.msra.mxu0 %v824
    %847 = vmatmul.f32.gmra.mxu0 %v829
    %v848 = vpop.f32.mrf.mxu0
    %v849 = vadd.f32 %v827, %v848
    %850 = vdwg.mxu0
    %v851 = vmax.f32 %v849, 0.0
    %v852 = vld [vmem:[%s2 + $0xf0] sm:$0xff]
    %v853 = vld [vmem:[%s2 + $0xf8] sm:$0xff]
    %v854 = vld [vmem:[%s2 + $0x100] sm:$0xff]
    %v855 = vld [vmem:[%s2 + $0x108] sm:$0xff]
    %v857 = vsel %vm113, %v851, 0
    %859 = vmatpush.msra.mxu0 0.0
    %860 = vmatpush.msra.mxu0 0.0
    %861 = vmatpush.msra.mxu0 0.0
    %862 = vmatpush.msra.mxu0 0.0
    %863 = vmatpush.msra.mxu0 0.0
    %864 = vmatpush.msra.mxu0 0.0
    %865 = vmatpush.msra.mxu0 0.0
    %866 = vmatpush.msra.mxu0 0.0
    %867 = vmatpush.msra.mxu0 0.0
    %868 = vmatpush.msra.mxu0 0.0
    %869 = vmatpush.msra.mxu0 0.0
    %870 = vmatpush.msra.mxu0 0.0
    %871 = vmatpush.msra.mxu0 %v855
    %872 = vmatpush.msra.mxu0 %v854
    %873 = vmatpush.msra.mxu0 %v853
    %874 = vmatpush.msra.mxu0 %v852
    %875 = vmatmul.f32.gmra.mxu0 %v857
    %v876 = vpop.f32.mrf.mxu0
    %v877 = vadd.f32 0.0, %v876
    %878 = vdwg.mxu0
    %880 = vrot.lane.b32.xlu0 %v877, 32
    %v881 = vpop.permute.xlu0 %880
    %v883 = vadd.f32 %v711, %v881
    %v884 = vadd.f32 %v883, %v737
    %v885 = vxor.u32 %v884, 2147483648
    %v886 = vmul.f32 %v885, 1.442695
    %v887 = vpow.pop %v886
    %v888 = vadd.f32 %v887, 1.0
    %v889 = vrcp.pop %v888
    %v890 = vmul.f32 %v888, %v889
    %v891 = vsub.f32 1.0, %v890
    %v892 = vmul.f32 %v889, %v891
    %v893 = vadd.f32 %v889, %v892
    %vm894 = vweird.f32 %v888
    %vm895 = vweird.f32 %v889
    %vm896 = vmor %vm894, %vm895
    %v897 = vsel %vm896, %v889, %v893
    %v898 = vand.u32 2147483647, %v888
    %vm899 = vcmp.eq.f32.partialorder %v898, 8.507059e+37
    %v900 = vand.u32 %v888, 2147483648
    %v901 = vor.u32 1.1754944e-38, %v900
    %v902 = vsel %vm899, %v901, %v897
    %v903 = vmul.f32 1.0, %v902
    %905 = vrot.lane.b32.xlu0 %v737, 64
    %v906 = vpop.permute.xlu0 %905
    %v908 = vmul.f32 %v903, %v906
    %910 = vrot.lane.b32.xlu0 %v908, 64
    %v911 = vpop.permute.xlu0 %910
    %v913 = vadd.f32 %v883, %v911
    %v914 = vtanh.pop %v913
    %v915 = vsub.f32 1.0, %v903
    %917 = vrot.lane.b32.xlu0 %v914, 96
    %v918 = vpop.permute.xlu0 %917
    %v920 = vmul.f32 %v915, %v918
    %v921 = vmul.f32 %v903, %v701
    %v922 = vadd.f32 %v920, %v921
    %924 = vrot.lane.b32.xlu0 %v922, 64
    %v925 = vpop.permute.xlu0 %924
    %927 = vst.msk [vmem:[#allocation3 + $0x18] sm:$0xff] %vm113, %v925
    %928 = vst.msk [vmem:[#allocation4 + $0x10] sm:$0xff] %vm385, %v798
    %929 = vst.msk [vmem:[#allocation5 + $0x10] sm:$0xff] %vm385, %v820
    %930 = vst.msk [vmem:[#allocation6 + $0x10] sm:$0xff] %vm385, %v823
    %931 = vst.msk [vmem:[#allocation7 + $0x10] sm:$0xff] %vm113, %v851
    %v932 = vld [vmem:[#allocation2 + $0x18] sm:$0xff]
    %v933 = vld [vmem:[%s1 + $0x18] sm:$0xff]
    %v934 = vld [vmem:[%s2 + $0x68] sm:$0xff]
    %v935 = vld [vmem:[%s2 + $0x70] sm:$0xff]
    %v936 = vld [vmem:[%s2 + $0x78] sm:$0xff]
    %v937 = vld [vmem:[%s2 + $0x80] sm:$0xff]
    %v938 = vsel %vm113, %v925, 0
    %940 = vmatpush.msra.mxu0 0.0
    %941 = vmatpush.msra.mxu0 0.0
    %942 = vmatpush.msra.mxu0 0.0
    %943 = vmatpush.msra.mxu0 0.0
    %944 = vmatpush.msra.mxu0 0.0
    %945 = vmatpush.msra.mxu0 0.0
    %946 = vmatpush.msra.mxu0 0.0
    %947 = vmatpush.msra.mxu0 0.0
    %948 = vmatpush.msra.mxu0 0.0
    %949 = vmatpush.msra.mxu0 0.0
    %950 = vmatpush.msra.mxu0 0.0
    %951 = vmatpush.msra.mxu0 0.0
    %952 = vmatpush.msra.mxu0 %v937
    %953 = vmatpush.msra.mxu0 %v936
    %954 = vmatpush.msra.mxu0 %v935
    %955 = vmatpush.msra.mxu0 %v934
    %956 = vmatmul.f32.gmra.mxu0 %v938
    %v957 = vpop.f32.mrf.mxu0
    %v958 = vadd.f32 0.0, %v957
    %959 = vdwg.mxu0
    %v960 = vadd.f32 %v932, %v958
    %v961 = vmax.f32 %v960, 0.0
    %v962 = vld [vmem:[%s2 + $0x88] sm:$0xff]
    %v963 = vld [vmem:[%s2 + $0x90] sm:$0xff]
    %v964 = vld [vmem:[%s2 + $0x98] sm:$0xff]
    %v965 = vld [vmem:[%s2 + $0xa0] sm:$0xff]
    %v966 = vld [vmem:[%s2 + $0xa8] sm:$0x1]
    %v967 = vperm.slane %v966, 0
    %v969 = vsel %vm113, %v961, 0
    %971 = vmatpush.msra.mxu0 0.0
    %972 = vmatpush.msra.mxu0 0.0
    %973 = vmatpush.msra.mxu0 0.0
    %974 = vmatpush.msra.mxu0 0.0
    %975 = vmatpush.msra.mxu0 0.0
    %976 = vmatpush.msra.mxu0 0.0
    %977 = vmatpush.msra.mxu0 0.0
    %978 = vmatpush.msra.mxu0 0.0
    %979 = vmatpush.msra.mxu0 0.0
    %980 = vmatpush.msra.mxu0 0.0
    %981 = vmatpush.msra.mxu0 0.0
    %982 = vmatpush.msra.mxu0 0.0
    %983 = vmatpush.msra.mxu0 %v965
    %984 = vmatpush.msra.mxu0 %v964
    %985 = vmatpush.msra.mxu0 %v963
    %986 = vmatpush.msra.mxu0 %v962
    %987 = vmatmul.f32.gmra.mxu0 %v969
    %v988 = vpop.f32.mrf.mxu0
    %v989 = vadd.f32 %v967, %v988
    %990 = vdwg.mxu0
    %v991 = vmax.f32 %v989, 0.0
    %v992 = vld [vmem:[%s2 + $0xb0] sm:$0xff]
    %v993 = vld [vmem:[%s2 + $0xb8] sm:$0xff]
    %v994 = vld [vmem:[%s2 + $0xc0] sm:$0xff]
    %v995 = vld [vmem:[%s2 + $0xc8] sm:$0xff]
    %v996 = vld [vmem:[%s2 + $0xd0] sm:$0x1]
    %v997 = vperm.slane %v996, 0
    %v999 = vsel %vm113, %v991, 0
    %1001 = vmatpush.msra.mxu0 0.0
    %1002 = vmatpush.msra.mxu0 0.0
    %1003 = vmatpush.msra.mxu0 0.0
    %1004 = vmatpush.msra.mxu0 0.0
    %1005 = vmatpush.msra.mxu0 0.0
    %1006 = vmatpush.msra.mxu0 0.0
    %1007 = vmatpush.msra.mxu0 0.0
    %1008 = vmatpush.msra.mxu0 0.0
    %1009 = vmatpush.msra.mxu0 0.0
    %1010 = vmatpush.msra.mxu0 0.0
    %1011 = vmatpush.msra.mxu0 0.0
    %1012 = vmatpush.msra.mxu0 0.0
    %1013 = vmatpush.msra.mxu0 %v995
    %1014 = vmatpush.msra.mxu0 %v994
    %1015 = vmatpush.msra.mxu0 %v993
    %1016 = vmatpush.msra.mxu0 %v992
    %1017 = vmatmul.f32.gmra.mxu0 %v999
    %v1018 = vpop.f32.mrf.mxu0
    %v1019 = vadd.f32 %v997, %v1018
    %1020 = vdwg.mxu0
    %v1021 = vmax.f32 %v1019, 0.0
    %vm1022 = vcmp.ne.f32.partialorder %v1019, %v1019
    %v1023 = vadd.f32 %v1019, 0.0
    %v1024 = vand.u32 2147483647, %v1019
    %v1025 = vsub.f32 0.0, %v1024
    %v1026 = vmul.f32 %v1025, 1.442695
    %v1027 = vpow.pop %v1026
    %v1028 = vadd.f32 %v1027, 1.0
    %v1029 = vlog2.pop %v1028
    %v1030 = vmul.f32 %v1029, 0.6931472
    %v1031 = vmul.f32 -0.5, %v1027
    %v1032 = vadd.f32 %v1031, 1.0
    %v1033 = vmul.f32 %v1032, %v1027
    %v1034 = vand.u32 2147483647, %v1027
    %vm1035 = vcmp.lt.f32.partialorder %v1034, 0.0004427343
    %v1036 = vsel %vm1035, %v1033, %v1030
    %v1037 = vadd.f32 %v1021, %v1036
    %v1038 = vsel %vm1022, %v1023, %v1037
    %1040 = vrot.lane.b32.xlu0 %v1038, 112
    %v1041 = vpop.permute.xlu0 %1040
    %v1043 = vmul.f32 %v933, %v1041
    %v1044 = vadd.f32 %v1043, %v1019
    %v1045 = vld [vmem:[%s2 + $0xd8] sm:$0xff]
    %v1046 = vld [vmem:[%s2 + $0xe0] sm:$0xff]
    %v1047 = vld [vmem:[%s2 + $0xe8] sm:$0x1]
    %v1048 = vperm.slane %v1047, 0
    %v1050 = vsel %vm385, %v1044, 0
    %1052 = vmatpush.msra.mxu0 0.0
    %1053 = vmatpush.msra.mxu0 0.0
    %1054 = vmatpush.msra.mxu0 0.0
    %1055 = vmatpush.msra.mxu0 0.0
    %1056 = vmatpush.msra.mxu0 0.0
    %1057 = vmatpush.msra.mxu0 0.0
    %1058 = vmatpush.msra.mxu0 0.0
    %1059 = vmatpush.msra.mxu0 0.0
    %1060 = vmatpush.msra.mxu0 0.0
    %1061 = vmatpush.msra.mxu0 0.0
    %1062 = vmatpush.msra.mxu0 0.0
    %1063 = vmatpush.msra.mxu0 0.0
    %1064 = vmatpush.msra.mxu0 0.0
    %1065 = vmatpush.msra.mxu0 0.0
    %1066 = vmatpush.msra.mxu0 %v1046
    %1067 = vmatpush.msra.mxu0 %v1045
    %1068 = vmatmul.f32.gmra.mxu0 %v1050
    %v1069 = vpop.f32.mrf.mxu0
    %v1070 = vadd.f32 %v1048, %v1069
    %1071 = vdwg.mxu0
    %v1072 = vmax.f32 %v1070, 0.0
    %v1073 = vld [vmem:[%s2 + $0xf0] sm:$0xff]
    %v1074 = vld [vmem:[%s2 + $0xf8] sm:$0xff]
    %v1075 = vld [vmem:[%s2 + $0x100] sm:$0xff]
    %v1076 = vld [vmem:[%s2 + $0x108] sm:$0xff]
    %v1078 = vsel %vm113, %v1072, 0
    %1080 = vmatpush.msra.mxu0 0.0
    %1081 = vmatpush.msra.mxu0 0.0
    %1082 = vmatpush.msra.mxu0 0.0
    %1083 = vmatpush.msra.mxu0 0.0
    %1084 = vmatpush.msra.mxu0 0.0
    %1085 = vmatpush.msra.mxu0 0.0
    %1086 = vmatpush.msra.mxu0 0.0
    %1087 = vmatpush.msra.mxu0 0.0
    %1088 = vmatpush.msra.mxu0 0.0
    %1089 = vmatpush.msra.mxu0 0.0
    %1090 = vmatpush.msra.mxu0 0.0
    %1091 = vmatpush.msra.mxu0 0.0
    %1092 = vmatpush.msra.mxu0 %v1076
    %1093 = vmatpush.msra.mxu0 %v1075
    %1094 = vmatpush.msra.mxu0 %v1074
    %1095 = vmatpush.msra.mxu0 %v1073
    %1096 = vmatmul.f32.gmra.mxu0 %v1078
    %v1097 = vpop.f32.mrf.mxu0
    %v1098 = vadd.f32 0.0, %v1097
    %1099 = vdwg.mxu0
    %1101 = vrot.lane.b32.xlu0 %v1098, 32
    %v1102 = vpop.permute.xlu0 %1101
    %v1104 = vadd.f32 %v932, %v1102
    %v1105 = vadd.f32 %v1104, %v958
    %v1106 = vxor.u32 %v1105, 2147483648
    %v1107 = vmul.f32 %v1106, 1.442695
    %v1108 = vpow.pop %v1107
    %v1109 = vadd.f32 %v1108, 1.0
    %v1110 = vrcp.pop %v1109
    %v1111 = vmul.f32 %v1109, %v1110
    %v1112 = vsub.f32 1.0, %v1111
    %v1113 = vmul.f32 %v1110, %v1112
    %v1114 = vadd.f32 %v1110, %v1113
    %vm1115 = vweird.f32 %v1109
    %vm1116 = vweird.f32 %v1110
    %vm1117 = vmor %vm1115, %vm1116
    %v1118 = vsel %vm1117, %v1110, %v1114
    %v1119 = vand.u32 2147483647, %v1109
    %vm1120 = vcmp.eq.f32.partialorder %v1119, 8.507059e+37
    %v1121 = vand.u32 %v1109, 2147483648
    %v1122 = vor.u32 1.1754944e-38, %v1121
    %v1123 = vsel %vm1120, %v1122, %v1118
    %v1124 = vmul.f32 1.0, %v1123
    %1126 = vrot.lane.b32.xlu0 %v958, 64
    %v1127 = vpop.permute.xlu0 %1126
    %v1129 = vmul.f32 %v1124, %v1127
    %1131 = vrot.lane.b32.xlu0 %v1129, 64
    %v1132 = vpop.permute.xlu0 %1131
    %v1134 = vadd.f32 %v1104, %v1132
    %v1135 = vtanh.pop %v1134
    %v1136 = vsub.f32 1.0, %v1124
    %1138 = vrot.lane.b32.xlu0 %v1135, 96
    %v1139 = vpop.permute.xlu0 %1138
    %v1141 = vmul.f32 %v1136, %v1139
    %v1142 = vmul.f32 %v1124, %v922
    %v1143 = vadd.f32 %v1141, %v1142
    %1145 = vrot.lane.b32.xlu0 %v1143, 64
    %v1146 = vpop.permute.xlu0 %1145
    %1148 = vst.msk [vmem:[#allocation3 + $0x20] sm:$0xff] %vm113, %v1146
    %1149 = vst.msk [vmem:[#allocation4 + $0x18] sm:$0xff] %vm385, %v1019
    %1150 = vst.msk [vmem:[#allocation5 + $0x18] sm:$0xff] %vm385, %v1041
    %1151 = vst.msk [vmem:[#allocation6 + $0x18] sm:$0xff] %vm385, %v1044
    %1152 = vst.msk [vmem:[#allocation7 + $0x18] sm:$0xff] %vm113, %v1072
    %v1153 = vld [vmem:[#allocation2 + $0x20] sm:$0xff]
    %v1154 = vld [vmem:[%s1 + $0x20] sm:$0xff]
    %v1155 = vld [vmem:[%s2 + $0x68] sm:$0xff]
    %v1156 = vld [vmem:[%s2 + $0x70] sm:$0xff]
    %v1157 = vld [vmem:[%s2 + $0x78] sm:$0xff]
    %v1158 = vld [vmem:[%s2 + $0x80] sm:$0xff]
    %v1159 = vsel %vm113, %v1146, 0
    %1161 = vmatpush.msra.mxu0 0.0
    %1162 = vmatpush.msra.mxu0 0.0
    %1163 = vmatpush.msra.mxu0 0.0
    %1164 = vmatpush.msra.mxu0 0.0
    %1165 = vmatpush.msra.mxu0 0.0
    %1166 = vmatpush.msra.mxu0 0.0
    %1167 = vmatpush.msra.mxu0 0.0
    %1168 = vmatpush.msra.mxu0 0.0
    %1169 = vmatpush.msra.mxu0 0.0
    %1170 = vmatpush.msra.mxu0 0.0
    %1171 = vmatpush.msra.mxu0 0.0
    %1172 = vmatpush.msra.mxu0 0.0
    %1173 = vmatpush.msra.mxu0 %v1158
    %1174 = vmatpush.msra.mxu0 %v1157
    %1175 = vmatpush.msra.mxu0 %v1156
    %1176 = vmatpush.msra.mxu0 %v1155
    %1177 = vmatmul.f32.gmra.mxu0 %v1159
    %v1178 = vpop.f32.mrf.mxu0
    %v1179 = vadd.f32 0.0, %v1178
    %1180 = vdwg.mxu0
    %v1181 = vadd.f32 %v1153, %v1179
    %v1182 = vmax.f32 %v1181, 0.0
    %v1183 = vld [vmem:[%s2 + $0x88] sm:$0xff]
    %v1184 = vld [vmem:[%s2 + $0x90] sm:$0xff]
    %v1185 = vld [vmem:[%s2 + $0x98] sm:$0xff]
    %v1186 = vld [vmem:[%s2 + $0xa0] sm:$0xff]
    %v1187 = vld [vmem:[%s2 + $0xa8] sm:$0x1]
    %v1188 = vperm.slane %v1187, 0
    %v1190 = vsel %vm113, %v1182, 0
    %1192 = vmatpush.msra.mxu0 0.0
    %1193 = vmatpush.msra.mxu0 0.0
    %1194 = vmatpush.msra.mxu0 0.0
    %1195 = vmatpush.msra.mxu0 0.0
    %1196 = vmatpush.msra.mxu0 0.0
    %1197 = vmatpush.msra.mxu0 0.0
    %1198 = vmatpush.msra.mxu0 0.0
    %1199 = vmatpush.msra.mxu0 0.0
    %1200 = vmatpush.msra.mxu0 0.0
    %1201 = vmatpush.msra.mxu0 0.0
    %1202 = vmatpush.msra.mxu0 0.0
    %1203 = vmatpush.msra.mxu0 0.0
    %1204 = vmatpush.msra.mxu0 %v1186
    %1205 = vmatpush.msra.mxu0 %v1185
    %1206 = vmatpush.msra.mxu0 %v1184
    %1207 = vmatpush.msra.mxu0 %v1183
    %1208 = vmatmul.f32.gmra.mxu0 %v1190
    %v1209 = vpop.f32.mrf.mxu0
    %v1210 = vadd.f32 %v1188, %v1209
    %1211 = vdwg.mxu0
    %v1212 = vmax.f32 %v1210, 0.0
    %v1213 = vld [vmem:[%s2 + $0xb0] sm:$0xff]
    %v1214 = vld [vmem:[%s2 + $0xb8] sm:$0xff]
    %v1215 = vld [vmem:[%s2 + $0xc0] sm:$0xff]
    %v1216 = vld [vmem:[%s2 + $0xc8] sm:$0xff]
    %v1217 = vld [vmem:[%s2 + $0xd0] sm:$0x1]
    %v1218 = vperm.slane %v1217, 0
    %v1220 = vsel %vm113, %v1212, 0
    %1222 = vmatpush.msra.mxu0 0.0
    %1223 = vmatpush.msra.mxu0 0.0
    %1224 = vmatpush.msra.mxu0 0.0
    %1225 = vmatpush.msra.mxu0 0.0
    %1226 = vmatpush.msra.mxu0 0.0
    %1227 = vmatpush.msra.mxu0 0.0
    %1228 = vmatpush.msra.mxu0 0.0
    %1229 = vmatpush.msra.mxu0 0.0
    %1230 = vmatpush.msra.mxu0 0.0
    %1231 = vmatpush.msra.mxu0 0.0
    %1232 = vmatpush.msra.mxu0 0.0
    %1233 = vmatpush.msra.mxu0 0.0
    %1234 = vmatpush.msra.mxu0 %v1216
    %1235 = vmatpush.msra.mxu0 %v1215
    %1236 = vmatpush.msra.mxu0 %v1214
    %1237 = vmatpush.msra.mxu0 %v1213
    %1238 = vmatmul.f32.gmra.mxu0 %v1220
    %v1239 = vpop.f32.mrf.mxu0
    %v1240 = vadd.f32 %v1218, %v1239
    %1241 = vdwg.mxu0
    %v1242 = vmax.f32 %v1240, 0.0
    %vm1243 = vcmp.ne.f32.partialorder %v1240, %v1240
    %v1244 = vadd.f32 %v1240, 0.0
    %v1245 = vand.u32 2147483647, %v1240
    %v1246 = vsub.f32 0.0, %v1245
    %v1247 = vmul.f32 %v1246, 1.442695
    %v1248 = vpow.pop %v1247
    %v1249 = vadd.f32 %v1248, 1.0
    %v1250 = vlog2.pop %v1249
    %v1251 = vmul.f32 %v1250, 0.6931472
    %v1252 = vmul.f32 -0.5, %v1248
    %v1253 = vadd.f32 %v1252, 1.0
    %v1254 = vmul.f32 %v1253, %v1248
    %v1255 = vand.u32 2147483647, %v1248
    %vm1256 = vcmp.lt.f32.partialorder %v1255, 0.0004427343
    %v1257 = vsel %vm1256, %v1254, %v1251
    %v1258 = vadd.f32 %v1242, %v1257
    %v1259 = vsel %vm1243, %v1244, %v1258
    %1261 = vrot.lane.b32.xlu0 %v1259, 112
    %v1262 = vpop.permute.xlu0 %1261
    %v1264 = vmul.f32 %v1154, %v1262
    %v1265 = vadd.f32 %v1264, %v1240
    %v1266 = vld [vmem:[%s2 + $0xd8] sm:$0xff]
    %v1267 = vld [vmem:[%s2 + $0xe0] sm:$0xff]
    %v1268 = vld [vmem:[%s2 + $0xe8] sm:$0x1]
    %v1269 = vperm.slane %v1268, 0
    %v1271 = vsel %vm385, %v1265, 0
    %1273 = vmatpush.msra.mxu0 0.0
    %1274 = vmatpush.msra.mxu0 0.0
    %1275 = vmatpush.msra.mxu0 0.0
    %1276 = vmatpush.msra.mxu0 0.0
    %1277 = vmatpush.msra.mxu0 0.0
    %1278 = vmatpush.msra.mxu0 0.0
    %1279 = vmatpush.msra.mxu0 0.0
    %1280 = vmatpush.msra.mxu0 0.0
    %1281 = vmatpush.msra.mxu0 0.0
    %1282 = vmatpush.msra.mxu0 0.0
    %1283 = vmatpush.msra.mxu0 0.0
    %1284 = vmatpush.msra.mxu0 0.0
    %1285 = vmatpush.msra.mxu0 0.0
    %1286 = vmatpush.msra.mxu0 0.0
    %1287 = vmatpush.msra.mxu0 %v1267
    %1288 = vmatpush.msra.mxu0 %v1266
    %1289 = vmatmul.f32.gmra.mxu0 %v1271
    %v1290 = vpop.f32.mrf.mxu0
    %v1291 = vadd.f32 %v1269, %v1290
    %1292 = vdwg.mxu0
    %v1293 = vmax.f32 %v1291, 0.0
    %v1294 = vld [vmem:[%s2 + $0xf0] sm:$0xff]
    %v1295 = vld [vmem:[%s2 + $0xf8] sm:$0xff]
    %v1296 = vld [vmem:[%s2 + $0x100] sm:$0xff]
    %v1297 = vld [vmem:[%s2 + $0x108] sm:$0xff]
    %v1299 = vsel %vm113, %v1293, 0
    %1301 = vmatpush.msra.mxu0 0.0
    %1302 = vmatpush.msra.mxu0 0.0
    %1303 = vmatpush.msra.mxu0 0.0
    %1304 = vmatpush.msra.mxu0 0.0
    %1305 = vmatpush.msra.mxu0 0.0
    %1306 = vmatpush.msra.mxu0 0.0
    %1307 = vmatpush.msra.mxu0 0.0
    %1308 = vmatpush.msra.mxu0 0.0
    %1309 = vmatpush.msra.mxu0 0.0
    %1310 = vmatpush.msra.mxu0 0.0
    %1311 = vmatpush.msra.mxu0 0.0
    %1312 = vmatpush.msra.mxu0 0.0
    %1313 = vmatpush.msra.mxu0 %v1297
    %1314 = vmatpush.msra.mxu0 %v1296
    %1315 = vmatpush.msra.mxu0 %v1295
    %1316 = vmatpush.msra.mxu0 %v1294
    %1317 = vmatmul.f32.gmra.mxu0 %v1299
    %v1318 = vpop.f32.mrf.mxu0
    %v1319 = vadd.f32 0.0, %v1318
    %1320 = vdwg.mxu0
    %1322 = vrot.lane.b32.xlu0 %v1319, 32
    %v1323 = vpop.permute.xlu0 %1322
    %v1325 = vadd.f32 %v1153, %v1323
    %v1326 = vadd.f32 %v1325, %v1179
    %v1327 = vxor.u32 %v1326, 2147483648
    %v1328 = vmul.f32 %v1327, 1.442695
    %v1329 = vpow.pop %v1328
    %v1330 = vadd.f32 %v1329, 1.0
    %v1331 = vrcp.pop %v1330
    %v1332 = vmul.f32 %v1330, %v1331
    %v1333 = vsub.f32 1.0, %v1332
    %v1334 = vmul.f32 %v1331, %v1333
    %v1335 = vadd.f32 %v1331, %v1334
    %vm1336 = vweird.f32 %v1330
    %vm1337 = vweird.f32 %v1331
    %vm1338 = vmor %vm1336, %vm1337
    %v1339 = vsel %vm1338, %v1331, %v1335
    %v1340 = vand.u32 2147483647, %v1330
    %vm1341 = vcmp.eq.f32.partialorder %v1340, 8.507059e+37
    %v1342 = vand.u32 %v1330, 2147483648
    %v1343 = vor.u32 1.1754944e-38, %v1342
    %v1344 = vsel %vm1341, %v1343, %v1339
    %v1345 = vmul.f32 1.0, %v1344
    %1347 = vrot.lane.b32.xlu0 %v1179, 64
    %v1348 = vpop.permute.xlu0 %1347
    %v1350 = vmul.f32 %v1345, %v1348
    %1352 = vrot.lane.b32.xlu0 %v1350, 64
    %v1353 = vpop.permute.xlu0 %1352
    %v1355 = vadd.f32 %v1325, %v1353
    %v1356 = vtanh.pop %v1355
    %v1357 = vsub.f32 1.0, %v1345
    %1359 = vrot.lane.b32.xlu0 %v1356, 96
    %v1360 = vpop.permute.xlu0 %1359
    %v1362 = vmul.f32 %v1357, %v1360
    %v1363 = vmul.f32 %v1345, %v1143
    %v1364 = vadd.f32 %v1362, %v1363
    %1366 = vrot.lane.b32.xlu0 %v1364, 64
    %v1367 = vpop.permute.xlu0 %1366
    %1369 = vst.msk [vmem:[#allocation3 + $0x28] sm:$0xff] %vm113, %v1367
    %1370 = vst.msk [vmem:[#allocation4 + $0x20] sm:$0xff] %vm385, %v1240
    %1371 = vst.msk [vmem:[#allocation5 + $0x20] sm:$0xff] %vm385, %v1262
    %1372 = vst.msk [vmem:[#allocation6 + $0x20] sm:$0xff] %vm385, %v1265
    %1373 = vst.msk [vmem:[#allocation7 + $0x20] sm:$0xff] %vm113, %v1293
    %v1374 = vld [vmem:[#allocation2 + $0x28] sm:$0xff]
    %v1375 = vld [vmem:[%s1 + $0x28] sm:$0xff]
    %v1376 = vld [vmem:[%s2 + $0x68] sm:$0xff]
    %v1377 = vld [vmem:[%s2 + $0x70] sm:$0xff]
    %v1378 = vld [vmem:[%s2 + $0x78] sm:$0xff]
    %v1379 = vld [vmem:[%s2 + $0x80] sm:$0xff]
    %v1380 = vsel %vm113, %v1367, 0
    %1382 = vmatpush.msra.mxu0 0.0
    %1383 = vmatpush.msra.mxu0 0.0
    %1384 = vmatpush.msra.mxu0 0.0
    %1385 = vmatpush.msra.mxu0 0.0
    %1386 = vmatpush.msra.mxu0 0.0
    %1387 = vmatpush.msra.mxu0 0.0
    %1388 = vmatpush.msra.mxu0 0.0
    %1389 = vmatpush.msra.mxu0 0.0
    %1390 = vmatpush.msra.mxu0 0.0
    %1391 = vmatpush.msra.mxu0 0.0
    %1392 = vmatpush.msra.mxu0 0.0
    %1393 = vmatpush.msra.mxu0 0.0
    %1394 = vmatpush.msra.mxu0 %v1379
    %1395 = vmatpush.msra.mxu0 %v1378
    %1396 = vmatpush.msra.mxu0 %v1377
    %1397 = vmatpush.msra.mxu0 %v1376
    %1398 = vmatmul.f32.gmra.mxu0 %v1380
    %v1399 = vpop.f32.mrf.mxu0
    %v1400 = vadd.f32 0.0, %v1399
    %1401 = vdwg.mxu0
    %v1402 = vadd.f32 %v1374, %v1400
    %v1403 = vmax.f32 %v1402, 0.0
    %v1404 = vld [vmem:[%s2 + $0x88] sm:$0xff]
    %v1405 = vld [vmem:[%s2 + $0x90] sm:$0xff]
    %v1406 = vld [vmem:[%s2 + $0x98] sm:$0xff]
    %v1407 = vld [vmem:[%s2 + $0xa0] sm:$0xff]
    %v1408 = vld [vmem:[%s2 + $0xa8] sm:$0x1]
    %v1409 = vperm.slane %v1408, 0
    %v1411 = vsel %vm113, %v1403, 0
    %1413 = vmatpush.msra.mxu0 0.0
    %1414 = vmatpush.msra.mxu0 0.0
    %1415 = vmatpush.msra.mxu0 0.0
    %1416 = vmatpush.msra.mxu0 0.0
    %1417 = vmatpush.msra.mxu0 0.0
    %1418 = vmatpush.msra.mxu0 0.0
    %1419 = vmatpush.msra.mxu0 0.0
    %1420 = vmatpush.msra.mxu0 0.0
    %1421 = vmatpush.msra.mxu0 0.0
    %1422 = vmatpush.msra.mxu0 0.0
    %1423 = vmatpush.msra.mxu0 0.0
    %1424 = vmatpush.msra.mxu0 0.0
    %1425 = vmatpush.msra.mxu0 %v1407
    %1426 = vmatpush.msra.mxu0 %v1406
    %1427 = vmatpush.msra.mxu0 %v1405
    %1428 = vmatpush.msra.mxu0 %v1404
    %1429 = vmatmul.f32.gmra.mxu0 %v1411
    %v1430 = vpop.f32.mrf.mxu0
    %v1431 = vadd.f32 %v1409, %v1430
    %1432 = vdwg.mxu0
    %v1433 = vmax.f32 %v1431, 0.0
    %v1434 = vld [vmem:[%s2 + $0xb0] sm:$0xff]
    %v1435 = vld [vmem:[%s2 + $0xb8] sm:$0xff]
    %v1436 = vld [vmem:[%s2 + $0xc0] sm:$0xff]
    %v1437 = vld [vmem:[%s2 + $0xc8] sm:$0xff]
    %v1438 = vld [vmem:[%s2 + $0xd0] sm:$0x1]
    %v1439 = vperm.slane %v1438, 0
    %v1441 = vsel %vm113, %v1433, 0
    %1443 = vmatpush.msra.mxu0 0.0
    %1444 = vmatpush.msra.mxu0 0.0
    %1445 = vmatpush.msra.mxu0 0.0
    %1446 = vmatpush.msra.mxu0 0.0
    %1447 = vmatpush.msra.mxu0 0.0
    %1448 = vmatpush.msra.mxu0 0.0
    %1449 = vmatpush.msra.mxu0 0.0
    %1450 = vmatpush.msra.mxu0 0.0
    %1451 = vmatpush.msra.mxu0 0.0
    %1452 = vmatpush.msra.mxu0 0.0
    %1453 = vmatpush.msra.mxu0 0.0
    %1454 = vmatpush.msra.mxu0 0.0
    %1455 = vmatpush.msra.mxu0 %v1437
    %1456 = vmatpush.msra.mxu0 %v1436
    %1457 = vmatpush.msra.mxu0 %v1435
    %1458 = vmatpush.msra.mxu0 %v1434
    %1459 = vmatmul.f32.gmra.mxu0 %v1441
    %v1460 = vpop.f32.mrf.mxu0
    %v1461 = vadd.f32 %v1439, %v1460
    %1462 = vdwg.mxu0
    %v1463 = vmax.f32 %v1461, 0.0
    %vm1464 = vcmp.ne.f32.partialorder %v1461, %v1461
    %v1465 = vadd.f32 %v1461, 0.0
    %v1466 = vand.u32 2147483647, %v1461
    %v1467 = vsub.f32 0.0, %v1466
    %v1468 = vmul.f32 %v1467, 1.442695
    %v1469 = vpow.pop %v1468
    %v1470 = vadd.f32 %v1469, 1.0
    %v1471 = vlog2.pop %v1470
    %v1472 = vmul.f32 %v1471, 0.6931472
    %v1473 = vmul.f32 -0.5, %v1469
    %v1474 = vadd.f32 %v1473, 1.0
    %v1475 = vmul.f32 %v1474, %v1469
    %v1476 = vand.u32 2147483647, %v1469
    %vm1477 = vcmp.lt.f32.partialorder %v1476, 0.0004427343
    %v1478 = vsel %vm1477, %v1475, %v1472
    %v1479 = vadd.f32 %v1463, %v1478
    %v1480 = vsel %vm1464, %v1465, %v1479
    %1482 = vrot.lane.b32.xlu0 %v1480, 112
    %v1483 = vpop.permute.xlu0 %1482
    %v1485 = vmul.f32 %v1375, %v1483
    %v1486 = vadd.f32 %v1485, %v1461
    %v1487 = vld [vmem:[%s2 + $0xd8] sm:$0xff]
    %v1488 = vld [vmem:[%s2 + $0xe0] sm:$0xff]
    %v1489 = vld [vmem:[%s2 + $0xe8] sm:$0x1]
    %v1490 = vperm.slane %v1489, 0
    %v1492 = vsel %vm385, %v1486, 0
    %1494 = vmatpush.msra.mxu0 0.0
    %1495 = vmatpush.msra.mxu0 0.0
    %1496 = vmatpush.msra.mxu0 0.0
    %1497 = vmatpush.msra.mxu0 0.0
    %1498 = vmatpush.msra.mxu0 0.0
    %1499 = vmatpush.msra.mxu0 0.0
    %1500 = vmatpush.msra.mxu0 0.0
    %1501 = vmatpush.msra.mxu0 0.0
    %1502 = vmatpush.msra.mxu0 0.0
    %1503 = vmatpush.msra.mxu0 0.0
    %1504 = vmatpush.msra.mxu0 0.0
    %1505 = vmatpush.msra.mxu0 0.0
    %1506 = vmatpush.msra.mxu0 0.0
    %1507 = vmatpush.msra.mxu0 0.0
    %1508 = vmatpush.msra.mxu0 %v1488
    %1509 = vmatpush.msra.mxu0 %v1487
    %1510 = vmatmul.f32.gmra.mxu0 %v1492
    %v1511 = vpop.f32.mrf.mxu0
    %v1512 = vadd.f32 %v1490, %v1511
    %1513 = vdwg.mxu0
    %v1514 = vmax.f32 %v1512, 0.0
    %v1515 = vld [vmem:[%s2 + $0xf0] sm:$0xff]
    %v1516 = vld [vmem:[%s2 + $0xf8] sm:$0xff]
    %v1517 = vld [vmem:[%s2 + $0x100] sm:$0xff]
    %v1518 = vld [vmem:[%s2 + $0x108] sm:$0xff]
    %v1520 = vsel %vm113, %v1514, 0
    %1522 = vmatpush.msra.mxu0 0.0
    %1523 = vmatpush.msra.mxu0 0.0
    %1524 = vmatpush.msra.mxu0 0.0
    %1525 = vmatpush.msra.mxu0 0.0
    %1526 = vmatpush.msra.mxu0 0.0
    %1527 = vmatpush.msra.mxu0 0.0
    %1528 = vmatpush.msra.mxu0 0.0
    %1529 = vmatpush.msra.mxu0 0.0
    %1530 = vmatpush.msra.mxu0 0.0
    %1531 = vmatpush.msra.mxu0 0.0
    %1532 = vmatpush.msra.mxu0 0.0
    %1533 = vmatpush.msra.mxu0 0.0
    %1534 = vmatpush.msra.mxu0 %v1518
    %1535 = vmatpush.msra.mxu0 %v1517
    %1536 = vmatpush.msra.mxu0 %v1516
    %1537 = vmatpush.msra.mxu0 %v1515
    %1538 = vmatmul.f32.gmra.mxu0 %v1520
    %v1539 = vpop.f32.mrf.mxu0
    %v1540 = vadd.f32 0.0, %v1539
    %1541 = vdwg.mxu0
    %1543 = vrot.lane.b32.xlu0 %v1540, 32
    %v1544 = vpop.permute.xlu0 %1543
    %v1546 = vadd.f32 %v1374, %v1544
    %v1547 = vadd.f32 %v1546, %v1400
    %v1548 = vxor.u32 %v1547, 2147483648
    %v1549 = vmul.f32 %v1548, 1.442695
    %v1550 = vpow.pop %v1549
    %v1551 = vadd.f32 %v1550, 1.0
    %v1552 = vrcp.pop %v1551
    %v1553 = vmul.f32 %v1551, %v1552
    %v1554 = vsub.f32 1.0, %v1553
    %v1555 = vmul.f32 %v1552, %v1554
    %v1556 = vadd.f32 %v1552, %v1555
    %vm1557 = vweird.f32 %v1551
    %vm1558 = vweird.f32 %v1552
    %vm1559 = vmor %vm1557, %vm1558
    %v1560 = vsel %vm1559, %v1552, %v1556
    %v1561 = vand.u32 2147483647, %v1551
    %vm1562 = vcmp.eq.f32.partialorder %v1561, 8.507059e+37
    %v1563 = vand.u32 %v1551, 2147483648
    %v1564 = vor.u32 1.1754944e-38, %v1563
    %v1565 = vsel %vm1562, %v1564, %v1560
    %v1566 = vmul.f32 1.0, %v1565
    %1568 = vrot.lane.b32.xlu0 %v1400, 64
    %v1569 = vpop.permute.xlu0 %1568
    %v1571 = vmul.f32 %v1566, %v1569
    %1573 = vrot.lane.b32.xlu0 %v1571, 64
    %v1574 = vpop.permute.xlu0 %1573
    %v1576 = vadd.f32 %v1546, %v1574
    %v1577 = vtanh.pop %v1576
    %v1578 = vsub.f32 1.0, %v1566
    %1580 = vrot.lane.b32.xlu0 %v1577, 96
    %v1581 = vpop.permute.xlu0 %1580
    %v1583 = vmul.f32 %v1578, %v1581
    %v1584 = vmul.f32 %v1566, %v1364
    %v1585 = vadd.f32 %v1583, %v1584
    %1587 = vrot.lane.b32.xlu0 %v1585, 64
    %v1588 = vpop.permute.xlu0 %1587
    %1590 = vst.msk [vmem:[#allocation3 + $0x30] sm:$0xff] %vm113, %v1588
    %1591 = vst.msk [vmem:[#allocation4 + $0x28] sm:$0xff] %vm385, %v1461
    %1592 = vst.msk [vmem:[#allocation5 + $0x28] sm:$0xff] %vm385, %v1483
    %1593 = vst.msk [vmem:[#allocation6 + $0x28] sm:$0xff] %vm385, %v1486
    %1594 = vst.msk [vmem:[#allocation7 + $0x28] sm:$0xff] %vm113, %v1514
    %v1595 = vld [vmem:[#allocation2 + $0x30] sm:$0xff]
    %v1596 = vld [vmem:[%s1 + $0x30] sm:$0xff]
    %v1597 = vld [vmem:[%s2 + $0x68] sm:$0xff]
    %v1598 = vld [vmem:[%s2 + $0x70] sm:$0xff]
    %v1599 = vld [vmem:[%s2 + $0x78] sm:$0xff]
    %v1600 = vld [vmem:[%s2 + $0x80] sm:$0xff]
    %v1601 = vsel %vm113, %v1588, 0
    %1603 = vmatpush.msra.mxu0 0.0
    %1604 = vmatpush.msra.mxu0 0.0
    %1605 = vmatpush.msra.mxu0 0.0
    %1606 = vmatpush.msra.mxu0 0.0
    %1607 = vmatpush.msra.mxu0 0.0
    %1608 = vmatpush.msra.mxu0 0.0
    %1609 = vmatpush.msra.mxu0 0.0
    %1610 = vmatpush.msra.mxu0 0.0
    %1611 = vmatpush.msra.mxu0 0.0
    %1612 = vmatpush.msra.mxu0 0.0
    %1613 = vmatpush.msra.mxu0 0.0
    %1614 = vmatpush.msra.mxu0 0.0
    %1615 = vmatpush.msra.mxu0 %v1600
    %1616 = vmatpush.msra.mxu0 %v1599
    %1617 = vmatpush.msra.mxu0 %v1598
    %1618 = vmatpush.msra.mxu0 %v1597
    %1619 = vmatmul.f32.gmra.mxu0 %v1601
    %v1620 = vpop.f32.mrf.mxu0
    %v1621 = vadd.f32 0.0, %v1620
    %1622 = vdwg.mxu0
    %v1623 = vadd.f32 %v1595, %v1621
    %v1624 = vmax.f32 %v1623, 0.0
    %v1625 = vld [vmem:[%s2 + $0x88] sm:$0xff]
    %v1626 = vld [vmem:[%s2 + $0x90] sm:$0xff]
    %v1627 = vld [vmem:[%s2 + $0x98] sm:$0xff]
    %v1628 = vld [vmem:[%s2 + $0xa0] sm:$0xff]
    %v1629 = vld [vmem:[%s2 + $0xa8] sm:$0x1]
    %v1630 = vperm.slane %v1629, 0
    %v1632 = vsel %vm113, %v1624, 0
    %1634 = vmatpush.msra.mxu0 0.0
    %1635 = vmatpush.msra.mxu0 0.0
    %1636 = vmatpush.msra.mxu0 0.0
    %1637 = vmatpush.msra.mxu0 0.0
    %1638 = vmatpush.msra.mxu0 0.0
    %1639 = vmatpush.msra.mxu0 0.0
    %1640 = vmatpush.msra.mxu0 0.0
    %1641 = vmatpush.msra.mxu0 0.0
    %1642 = vmatpush.msra.mxu0 0.0
    %1643 = vmatpush.msra.mxu0 0.0
    %1644 = vmatpush.msra.mxu0 0.0
    %1645 = vmatpush.msra.mxu0 0.0
    %1646 = vmatpush.msra.mxu0 %v1628
    %1647 = vmatpush.msra.mxu0 %v1627
    %1648 = vmatpush.msra.mxu0 %v1626
    %1649 = vmatpush.msra.mxu0 %v1625
    %1650 = vmatmul.f32.gmra.mxu0 %v1632
    %v1651 = vpop.f32.mrf.mxu0
    %v1652 = vadd.f32 %v1630, %v1651
    %1653 = vdwg.mxu0
    %v1654 = vmax.f32 %v1652, 0.0
    %v1655 = vld [vmem:[%s2 + $0xb0] sm:$0xff]
    %v1656 = vld [vmem:[%s2 + $0xb8] sm:$0xff]
    %v1657 = vld [vmem:[%s2 + $0xc0] sm:$0xff]
    %v1658 = vld [vmem:[%s2 + $0xc8] sm:$0xff]
    %v1659 = vld [vmem:[%s2 + $0xd0] sm:$0x1]
    %v1660 = vperm.slane %v1659, 0
    %v1662 = vsel %vm113, %v1654, 0
    %1664 = vmatpush.msra.mxu0 0.0
    %1665 = vmatpush.msra.mxu0 0.0
    %1666 = vmatpush.msra.mxu0 0.0
    %1667 = vmatpush.msra.mxu0 0.0
    %1668 = vmatpush.msra.mxu0 0.0
    %1669 = vmatpush.msra.mxu0 0.0
    %1670 = vmatpush.msra.mxu0 0.0
    %1671 = vmatpush.msra.mxu0 0.0
    %1672 = vmatpush.msra.mxu0 0.0
    %1673 = vmatpush.msra.mxu0 0.0
    %1674 = vmatpush.msra.mxu0 0.0
    %1675 = vmatpush.msra.mxu0 0.0
    %1676 = vmatpush.msra.mxu0 %v1658
    %1677 = vmatpush.msra.mxu0 %v1657
    %1678 = vmatpush.msra.mxu0 %v1656
    %1679 = vmatpush.msra.mxu0 %v1655
    %1680 = vmatmul.f32.gmra.mxu0 %v1662
    %v1681 = vpop.f32.mrf.mxu0
    %v1682 = vadd.f32 %v1660, %v1681
    %1683 = vdwg.mxu0
    %v1684 = vmax.f32 %v1682, 0.0
    %vm1685 = vcmp.ne.f32.partialorder %v1682, %v1682
    %v1686 = vadd.f32 %v1682, 0.0
    %v1687 = vand.u32 2147483647, %v1682
    %v1688 = vsub.f32 0.0, %v1687
    %v1689 = vmul.f32 %v1688, 1.442695
    %v1690 = vpow.pop %v1689
    %v1691 = vadd.f32 %v1690, 1.0
    %v1692 = vlog2.pop %v1691
    %v1693 = vmul.f32 %v1692, 0.6931472
    %v1694 = vmul.f32 -0.5, %v1690
    %v1695 = vadd.f32 %v1694, 1.0
    %v1696 = vmul.f32 %v1695, %v1690
    %v1697 = vand.u32 2147483647, %v1690
    %vm1698 = vcmp.lt.f32.partialorder %v1697, 0.0004427343
    %v1699 = vsel %vm1698, %v1696, %v1693
    %v1700 = vadd.f32 %v1684, %v1699
    %v1701 = vsel %vm1685, %v1686, %v1700
    %1703 = vrot.lane.b32.xlu0 %v1701, 112
    %v1704 = vpop.permute.xlu0 %1703
    %v1706 = vmul.f32 %v1596, %v1704
    %v1707 = vadd.f32 %v1706, %v1682
    %v1708 = vld [vmem:[%s2 + $0xd8] sm:$0xff]
    %v1709 = vld [vmem:[%s2 + $0xe0] sm:$0xff]
    %v1710 = vld [vmem:[%s2 + $0xe8] sm:$0x1]
    %v1711 = vperm.slane %v1710, 0
    %v1713 = vsel %vm385, %v1707, 0
    %1715 = vmatpush.msra.mxu0 0.0
    %1716 = vmatpush.msra.mxu0 0.0
    %1717 = vmatpush.msra.mxu0 0.0
    %1718 = vmatpush.msra.mxu0 0.0
    %1719 = vmatpush.msra.mxu0 0.0
    %1720 = vmatpush.msra.mxu0 0.0
    %1721 = vmatpush.msra.mxu0 0.0
    %1722 = vmatpush.msra.mxu0 0.0
    %1723 = vmatpush.msra.mxu0 0.0
    %1724 = vmatpush.msra.mxu0 0.0
    %1725 = vmatpush.msra.mxu0 0.0
    %1726 = vmatpush.msra.mxu0 0.0
    %1727 = vmatpush.msra.mxu0 0.0
    %1728 = vmatpush.msra.mxu0 0.0
    %1729 = vmatpush.msra.mxu0 %v1709
    %1730 = vmatpush.msra.mxu0 %v1708
    %1731 = vmatmul.f32.gmra.mxu0 %v1713
    %v1732 = vpop.f32.mrf.mxu0
    %v1733 = vadd.f32 %v1711, %v1732
    %1734 = vdwg.mxu0
    %v1735 = vmax.f32 %v1733, 0.0
    %v1736 = vld [vmem:[%s2 + $0xf0] sm:$0xff]
    %v1737 = vld [vmem:[%s2 + $0xf8] sm:$0xff]
    %v1738 = vld [vmem:[%s2 + $0x100] sm:$0xff]
    %v1739 = vld [vmem:[%s2 + $0x108] sm:$0xff]
    %v1741 = vsel %vm113, %v1735, 0
    %1743 = vmatpush.msra.mxu0 0.0
    %1744 = vmatpush.msra.mxu0 0.0
    %1745 = vmatpush.msra.mxu0 0.0
    %1746 = vmatpush.msra.mxu0 0.0
    %1747 = vmatpush.msra.mxu0 0.0
    %1748 = vmatpush.msra.mxu0 0.0
    %1749 = vmatpush.msra.mxu0 0.0
    %1750 = vmatpush.msra.mxu0 0.0
    %1751 = vmatpush.msra.mxu0 0.0
    %1752 = vmatpush.msra.mxu0 0.0
    %1753 = vmatpush.msra.mxu0 0.0
    %1754 = vmatpush.msra.mxu0 0.0
    %1755 = vmatpush.msra.mxu0 %v1739
    %1756 = vmatpush.msra.mxu0 %v1738
    %1757 = vmatpush.msra.mxu0 %v1737
    %1758 = vmatpush.msra.mxu0 %v1736
    %1759 = vmatmul.f32.gmra.mxu0 %v1741
    %v1760 = vpop.f32.mrf.mxu0
    %v1761 = vadd.f32 0.0, %v1760
    %1762 = vdwg.mxu0
    %1764 = vrot.lane.b32.xlu0 %v1761, 32
    %v1765 = vpop.permute.xlu0 %1764
    %v1767 = vadd.f32 %v1595, %v1765
    %v1768 = vadd.f32 %v1767, %v1621
    %v1769 = vxor.u32 %v1768, 2147483648
    %v1770 = vmul.f32 %v1769, 1.442695
    %v1771 = vpow.pop %v1770
    %v1772 = vadd.f32 %v1771, 1.0
    %v1773 = vrcp.pop %v1772
    %v1774 = vmul.f32 %v1772, %v1773
    %v1775 = vsub.f32 1.0, %v1774
    %v1776 = vmul.f32 %v1773, %v1775
    %v1777 = vadd.f32 %v1773, %v1776
    %vm1778 = vweird.f32 %v1772
    %vm1779 = vweird.f32 %v1773
    %vm1780 = vmor %vm1778, %vm1779
    %v1781 = vsel %vm1780, %v1773, %v1777
    %v1782 = vand.u32 2147483647, %v1772
    %vm1783 = vcmp.eq.f32.partialorder %v1782, 8.507059e+37
    %v1784 = vand.u32 %v1772, 2147483648
    %v1785 = vor.u32 1.1754944e-38, %v1784
    %v1786 = vsel %vm1783, %v1785, %v1781
    %v1787 = vmul.f32 1.0, %v1786
    %1789 = vrot.lane.b32.xlu0 %v1621, 64
    %v1790 = vpop.permute.xlu0 %1789
    %v1792 = vmul.f32 %v1787, %v1790
    %1794 = vrot.lane.b32.xlu0 %v1792, 64
    %v1795 = vpop.permute.xlu0 %1794
    %v1797 = vadd.f32 %v1767, %v1795
    %v1798 = vtanh.pop %v1797
    %v1799 = vsub.f32 1.0, %v1787
    %1801 = vrot.lane.b32.xlu0 %v1798, 96
    %v1802 = vpop.permute.xlu0 %1801
    %v1804 = vmul.f32 %v1799, %v1802
    %v1805 = vmul.f32 %v1787, %v1585
    %v1806 = vadd.f32 %v1804, %v1805
    %1808 = vrot.lane.b32.xlu0 %v1806, 64
    %v1809 = vpop.permute.xlu0 %1808
    %1811 = vst.msk [vmem:[#allocation3 + $0x38] sm:$0xff] %vm113, %v1809
    %1812 = vst.msk [vmem:[#allocation4 + $0x30] sm:$0xff] %vm385, %v1682
    %1813 = vst.msk [vmem:[#allocation5 + $0x30] sm:$0xff] %vm385, %v1704
    %1814 = vst.msk [vmem:[#allocation6 + $0x30] sm:$0xff] %vm385, %v1707
    %1815 = vst.msk [vmem:[#allocation7 + $0x30] sm:$0xff] %vm113, %v1735
    %v1816 = vld [vmem:[#allocation2 + $0x38] sm:$0xff]
    %v1817 = vld [vmem:[%s1 + $0x38] sm:$0xff]
    %v1818 = vld [vmem:[%s2 + $0x68] sm:$0xff]
    %v1819 = vld [vmem:[%s2 + $0x70] sm:$0xff]
    %v1820 = vld [vmem:[%s2 + $0x78] sm:$0xff]
    %v1821 = vld [vmem:[%s2 + $0x80] sm:$0xff]
    %v1822 = vsel %vm113, %v1809, 0
    %1824 = vmatpush.msra.mxu0 0.0
    %1825 = vmatpush.msra.mxu0 0.0
    %1826 = vmatpush.msra.mxu0 0.0
    %1827 = vmatpush.msra.mxu0 0.0
    %1828 = vmatpush.msra.mxu0 0.0
    %1829 = vmatpush.msra.mxu0 0.0
    %1830 = vmatpush.msra.mxu0 0.0
    %1831 = vmatpush.msra.mxu0 0.0
    %1832 = vmatpush.msra.mxu0 0.0
    %1833 = vmatpush.msra.mxu0 0.0
    %1834 = vmatpush.msra.mxu0 0.0
    %1835 = vmatpush.msra.mxu0 0.0
    %1836 = vmatpush.msra.mxu0 %v1821
    %1837 = vmatpush.msra.mxu0 %v1820
    %1838 = vmatpush.msra.mxu0 %v1819
    %1839 = vmatpush.msra.mxu0 %v1818
    %1840 = vmatmul.f32.gmra.mxu0 %v1822
    %v1841 = vpop.f32.mrf.mxu0
    %v1842 = vadd.f32 0.0, %v1841
    %1843 = vdwg.mxu0
    %v1844 = vadd.f32 %v1816, %v1842
    %v1845 = vmax.f32 %v1844, 0.0
    %v1846 = vld [vmem:[%s2 + $0x88] sm:$0xff]
    %v1847 = vld [vmem:[%s2 + $0x90] sm:$0xff]
    %v1848 = vld [vmem:[%s2 + $0x98] sm:$0xff]
    %v1849 = vld [vmem:[%s2 + $0xa0] sm:$0xff]
    %v1850 = vld [vmem:[%s2 + $0xa8] sm:$0x1]
    %v1851 = vperm.slane %v1850, 0
    %v1853 = vsel %vm113, %v1845, 0
    %1855 = vmatpush.msra.mxu0 0.0
    %1856 = vmatpush.msra.mxu0 0.0
    %1857 = vmatpush.msra.mxu0 0.0
    %1858 = vmatpush.msra.mxu0 0.0
    %1859 = vmatpush.msra.mxu0 0.0
    %1860 = vmatpush.msra.mxu0 0.0
    %1861 = vmatpush.msra.mxu0 0.0
    %1862 = vmatpush.msra.mxu0 0.0
    %1863 = vmatpush.msra.mxu0 0.0
    %1864 = vmatpush.msra.mxu0 0.0
    %1865 = vmatpush.msra.mxu0 0.0
    %1866 = vmatpush.msra.mxu0 0.0
    %1867 = vmatpush.msra.mxu0 %v1849
    %1868 = vmatpush.msra.mxu0 %v1848
    %1869 = vmatpush.msra.mxu0 %v1847
    %1870 = vmatpush.msra.mxu0 %v1846
    %1871 = vmatmul.f32.gmra.mxu0 %v1853
    %v1872 = vpop.f32.mrf.mxu0
    %v1873 = vadd.f32 %v1851, %v1872
    %1874 = vdwg.mxu0
    %v1875 = vmax.f32 %v1873, 0.0
    %v1876 = vld [vmem:[%s2 + $0xb0] sm:$0xff]
    %v1877 = vld [vmem:[%s2 + $0xb8] sm:$0xff]
    %v1878 = vld [vmem:[%s2 + $0xc0] sm:$0xff]
    %v1879 = vld [vmem:[%s2 + $0xc8] sm:$0xff]
    %v1880 = vld [vmem:[%s2 + $0xd0] sm:$0x1]
    %v1881 = vperm.slane %v1880, 0
    %v1883 = vsel %vm113, %v1875, 0
    %1885 = vmatpush.msra.mxu0 0.0
    %1886 = vmatpush.msra.mxu0 0.0
    %1887 = vmatpush.msra.mxu0 0.0
    %1888 = vmatpush.msra.mxu0 0.0
    %1889 = vmatpush.msra.mxu0 0.0
    %1890 = vmatpush.msra.mxu0 0.0
    %1891 = vmatpush.msra.mxu0 0.0
    %1892 = vmatpush.msra.mxu0 0.0
    %1893 = vmatpush.msra.mxu0 0.0
    %1894 = vmatpush.msra.mxu0 0.0
    %1895 = vmatpush.msra.mxu0 0.0
    %1896 = vmatpush.msra.mxu0 0.0
    %1897 = vmatpush.msra.mxu0 %v1879
    %1898 = vmatpush.msra.mxu0 %v1878
    %1899 = vmatpush.msra.mxu0 %v1877
    %1900 = vmatpush.msra.mxu0 %v1876
    %1901 = vmatmul.f32.gmra.mxu0 %v1883
    %v1902 = vpop.f32.mrf.mxu0
    %v1903 = vadd.f32 %v1881, %v1902
    %1904 = vdwg.mxu0
    %v1905 = vmax.f32 %v1903, 0.0
    %vm1906 = vcmp.ne.f32.partialorder %v1903, %v1903
    %v1907 = vadd.f32 %v1903, 0.0
    %v1908 = vand.u32 2147483647, %v1903
    %v1909 = vsub.f32 0.0, %v1908
    %v1910 = vmul.f32 %v1909, 1.442695
    %v1911 = vpow.pop %v1910
    %v1912 = vadd.f32 %v1911, 1.0
    %v1913 = vlog2.pop %v1912
    %v1914 = vmul.f32 %v1913, 0.6931472
    %v1915 = vmul.f32 -0.5, %v1911
    %v1916 = vadd.f32 %v1915, 1.0
    %v1917 = vmul.f32 %v1916, %v1911
    %v1918 = vand.u32 2147483647, %v1911
    %vm1919 = vcmp.lt.f32.partialorder %v1918, 0.0004427343
    %v1920 = vsel %vm1919, %v1917, %v1914
    %v1921 = vadd.f32 %v1905, %v1920
    %v1922 = vsel %vm1906, %v1907, %v1921
    %1924 = vrot.lane.b32.xlu0 %v1922, 112
    %v1925 = vpop.permute.xlu0 %1924
    %v1927 = vmul.f32 %v1817, %v1925
    %v1928 = vadd.f32 %v1927, %v1903
    %v1929 = vld [vmem:[%s2 + $0xd8] sm:$0xff]
    %v1930 = vld [vmem:[%s2 + $0xe0] sm:$0xff]
    %v1931 = vld [vmem:[%s2 + $0xe8] sm:$0x1]
    %v1932 = vperm.slane %v1931, 0
    %v1934 = vsel %vm385, %v1928, 0
    %1936 = vmatpush.msra.mxu0 0.0
    %1937 = vmatpush.msra.mxu0 0.0
    %1938 = vmatpush.msra.mxu0 0.0
    %1939 = vmatpush.msra.mxu0 0.0
    %1940 = vmatpush.msra.mxu0 0.0
    %1941 = vmatpush.msra.mxu0 0.0
    %1942 = vmatpush.msra.mxu0 0.0
    %1943 = vmatpush.msra.mxu0 0.0
    %1944 = vmatpush.msra.mxu0 0.0
    %1945 = vmatpush.msra.mxu0 0.0
    %1946 = vmatpush.msra.mxu0 0.0
    %1947 = vmatpush.msra.mxu0 0.0
    %1948 = vmatpush.msra.mxu0 0.0
    %1949 = vmatpush.msra.mxu0 0.0
    %1950 = vmatpush.msra.mxu0 %v1930
    %1951 = vmatpush.msra.mxu0 %v1929
    %1952 = vmatmul.f32.gmra.mxu0 %v1934
    %v1953 = vpop.f32.mrf.mxu0
    %v1954 = vadd.f32 %v1932, %v1953
    %1955 = vdwg.mxu0
    %v1956 = vmax.f32 %v1954, 0.0
    %v1957 = vld [vmem:[%s2 + $0xf0] sm:$0xff]
    %v1958 = vld [vmem:[%s2 + $0xf8] sm:$0xff]
    %v1959 = vld [vmem:[%s2 + $0x100] sm:$0xff]
    %v1960 = vld [vmem:[%s2 + $0x108] sm:$0xff]
    %v1962 = vsel %vm113, %v1956, 0
    %1964 = vmatpush.msra.mxu0 0.0
    %1965 = vmatpush.msra.mxu0 0.0
    %1966 = vmatpush.msra.mxu0 0.0
    %1967 = vmatpush.msra.mxu0 0.0
    %1968 = vmatpush.msra.mxu0 0.0
    %1969 = vmatpush.msra.mxu0 0.0
    %1970 = vmatpush.msra.mxu0 0.0
    %1971 = vmatpush.msra.mxu0 0.0
    %1972 = vmatpush.msra.mxu0 0.0
    %1973 = vmatpush.msra.mxu0 0.0
    %1974 = vmatpush.msra.mxu0 0.0
    %1975 = vmatpush.msra.mxu0 0.0
    %1976 = vmatpush.msra.mxu0 %v1960
    %1977 = vmatpush.msra.mxu0 %v1959
    %1978 = vmatpush.msra.mxu0 %v1958
    %1979 = vmatpush.msra.mxu0 %v1957
    %1980 = vmatmul.f32.gmra.mxu0 %v1962
    %v1981 = vpop.f32.mrf.mxu0
    %v1982 = vadd.f32 0.0, %v1981
    %1983 = vdwg.mxu0
    %1985 = vrot.lane.b32.xlu0 %v1982, 32
    %v1986 = vpop.permute.xlu0 %1985
    %v1988 = vadd.f32 %v1816, %v1986
    %v1989 = vadd.f32 %v1988, %v1842
    %v1990 = vxor.u32 %v1989, 2147483648
    %v1991 = vmul.f32 %v1990, 1.442695
    %v1992 = vpow.pop %v1991
    %v1993 = vadd.f32 %v1992, 1.0
    %v1994 = vrcp.pop %v1993
    %v1995 = vmul.f32 %v1993, %v1994
    %v1996 = vsub.f32 1.0, %v1995
    %v1997 = vmul.f32 %v1994, %v1996
    %v1998 = vadd.f32 %v1994, %v1997
    %vm1999 = vweird.f32 %v1993
    %vm2000 = vweird.f32 %v1994
    %vm2001 = vmor %vm1999, %vm2000
    %v2002 = vsel %vm2001, %v1994, %v1998
    %v2003 = vand.u32 2147483647, %v1993
    %vm2004 = vcmp.eq.f32.partialorder %v2003, 8.507059e+37
    %v2005 = vand.u32 %v1993, 2147483648
    %v2006 = vor.u32 1.1754944e-38, %v2005
    %v2007 = vsel %vm2004, %v2006, %v2002
    %v2008 = vmul.f32 1.0, %v2007
    %2010 = vrot.lane.b32.xlu0 %v1842, 64
    %v2011 = vpop.permute.xlu0 %2010
    %v2013 = vmul.f32 %v2008, %v2011
    %2015 = vrot.lane.b32.xlu0 %v2013, 64
    %v2016 = vpop.permute.xlu0 %2015
    %v2018 = vadd.f32 %v1988, %v2016
    %v2019 = vtanh.pop %v2018
    %v2020 = vsub.f32 1.0, %v2008
    %2022 = vrot.lane.b32.xlu0 %v2019, 96
    %v2023 = vpop.permute.xlu0 %2022
    %v2025 = vmul.f32 %v2020, %v2023
    %v2026 = vmul.f32 %v2008, %v1806
    %v2027 = vadd.f32 %v2025, %v2026
    %2029 = vrot.lane.b32.xlu0 %v2027, 64
    %v2030 = vpop.permute.xlu0 %2029
    %2032 = vst.msk [vmem:[#allocation3 + $0x40] sm:$0xff] %vm113, %v2030
    %2033 = vst.msk [vmem:[#allocation4 + $0x38] sm:$0xff] %vm385, %v1903
    %2034 = vst.msk [vmem:[#allocation5 + $0x38] sm:$0xff] %vm385, %v1925
    %2035 = vst.msk [vmem:[#allocation6 + $0x38] sm:$0xff] %vm385, %v1928
    %2036 = vst.msk [vmem:[#allocation7 + $0x38] sm:$0xff] %vm113, %v1956
    %v2037 = vld [vmem:[#allocation3] sm:$0xff]
    %v2038 = vld [vmem:[#allocation3 + $0x8] sm:$0xff]
    %v2039 = vld [vmem:[#allocation3 + $0x10] sm:$0xff]
    %v2040 = vld [vmem:[#allocation3 + $0x18] sm:$0xff]
    %v2041 = vld [vmem:[#allocation3 + $0x20] sm:$0xff]
    %v2042 = vld [vmem:[#allocation3 + $0x28] sm:$0xff]
    %v2043 = vld [vmem:[#allocation3 + $0x30] sm:$0xff]
    %v2044 = vld [vmem:[#allocation3 + $0x38] sm:$0xff]
    %v2045 = vld [vmem:[#allocation3 + $0x40] sm:$0xff]
    %v2046 = vld [vmem:[#allocation4] sm:$0xff]
    %v2047 = vld [vmem:[#allocation4 + $0x8] sm:$0xff]
    %v2048 = vld [vmem:[#allocation4 + $0x10] sm:$0xff]
    %v2049 = vld [vmem:[#allocation4 + $0x18] sm:$0xff]
    %v2050 = vld [vmem:[#allocation4 + $0x20] sm:$0xff]
    %v2051 = vld [vmem:[#allocation4 + $0x28] sm:$0xff]
    %v2052 = vld [vmem:[#allocation4 + $0x30] sm:$0xff]
    %v2053 = vld [vmem:[#allocation4 + $0x38] sm:$0xff]
    %v2054 = vld [vmem:[#allocation5] sm:$0xff]
    %v2055 = vld [vmem:[#allocation5 + $0x8] sm:$0xff]
    %v2056 = vld [vmem:[#allocation5 + $0x10] sm:$0xff]
    %v2057 = vld [vmem:[#allocation5 + $0x18] sm:$0xff]
    %v2058 = vld [vmem:[#allocation5 + $0x20] sm:$0xff]
    %v2059 = vld [vmem:[#allocation5 + $0x28] sm:$0xff]
    %v2060 = vld [vmem:[#allocation5 + $0x30] sm:$0xff]
    %v2061 = vld [vmem:[#allocation5 + $0x38] sm:$0xff]
    %v2062 = vld [vmem:[#allocation6] sm:$0xff]
    %v2063 = vld [vmem:[#allocation6 + $0x8] sm:$0xff]
    %v2064 = vld [vmem:[#allocation6 + $0x10] sm:$0xff]
    %v2065 = vld [vmem:[#allocation6 + $0x18] sm:$0xff]
    %v2066 = vld [vmem:[#allocation6 + $0x20] sm:$0xff]
    %v2067 = vld [vmem:[#allocation6 + $0x28] sm:$0xff]
    %v2068 = vld [vmem:[#allocation6 + $0x30] sm:$0xff]
    %v2069 = vld [vmem:[#allocation6 + $0x38] sm:$0xff]
    %v2070 = vld [vmem:[#allocation7] sm:$0xff]
    %v2071 = vld [vmem:[#allocation7 + $0x8] sm:$0xff]
    %v2072 = vld [vmem:[#allocation7 + $0x10] sm:$0xff]
    %v2073 = vld [vmem:[#allocation7 + $0x18] sm:$0xff]
    %v2074 = vld [vmem:[#allocation7 + $0x20] sm:$0xff]
    %v2075 = vld [vmem:[#allocation7 + $0x28] sm:$0xff]
    %v2076 = vld [vmem:[#allocation7 + $0x30] sm:$0xff]
    %v2077 = vld [vmem:[#allocation7 + $0x38] sm:$0xff]
    %v2078 = vld [vmem:[%s0] sm:$0xff]
    %v2079 = vld [vmem:[%s0 + $0x8] sm:$0xff]
    %v2080 = vld [vmem:[%s0 + $0x10] sm:$0xff]
    %v2081 = vld [vmem:[%s0 + $0x18] sm:$0xff]
    %v2082 = vld [vmem:[%s0 + $0x20] sm:$0xff]
    %v2083 = vld [vmem:[%s0 + $0x28] sm:$0xff]
    %v2084 = vld [vmem:[%s0 + $0x30] sm:$0xff]
    %v2085 = vld [vmem:[%s0 + $0x38] sm:$0xff]
    %v2086 = vld [vmem:[%s2 + $0x110] sm:$0xff]
    %v2087 = vld [vmem:[%s2 + $0x118] sm:$0xff]
    %v2088 = vld [vmem:[%s2 + $0x120] sm:$0xff]
    %v2089 = vld [vmem:[%s2 + $0x128] sm:$0xff]
    %v2090 = vld [vmem:[%s2 + $0x130] sm:$0x1]
    %v2091 = vperm.slane %v2090, 0
    %v2093 = vsel %vm113, %v2037, 0
    %v2096 = vsel %vm113, %v2038, 0
    %v2099 = vsel %vm113, %v2039, 0
    %v2102 = vsel %vm113, %v2040, 0
    %v2105 = vsel %vm113, %v2041, 0
    %v2108 = vsel %vm113, %v2042, 0
    %v2111 = vsel %vm113, %v2043, 0
    %v2114 = vsel %vm113, %v2044, 0
    %2116 = vmatpush.msra.mxu0 0.0
    %2117 = vmatpush.msra.mxu0 0.0
    %2118 = vmatpush.msra.mxu0 0.0
    %2119 = vmatpush.msra.mxu0 0.0
    %2120 = vmatpush.msra.mxu0 0.0
    %2121 = vmatpush.msra.mxu0 0.0
    %2122 = vmatpush.msra.mxu0 0.0
    %2123 = vmatpush.msra.mxu0 0.0
    %2124 = vmatpush.msra.mxu0 0.0
    %2125 = vmatpush.msra.mxu0 0.0
    %2126 = vmatpush.msra.mxu0 0.0
    %2127 = vmatpush.msra.mxu0 0.0
    %2128 = vmatpush.msra.mxu0 %v2089
    %2129 = vmatpush.msra.mxu0 %v2088
    %2130 = vmatpush.msra.mxu0 %v2087
    %2131 = vmatpush.msra.mxu0 %v2086
    %2132 = vmatmul.f32.gmra.mxu0 %v2093
    %v2133 = vpop.f32.mrf.mxu0
    %v2134 = vadd.f32 %v2091, %v2133
    %2135 = vmatmul.f32.gmra.mxu0 %v2096
    %v2136 = vpop.f32.mrf.mxu0
    %v2137 = vadd.f32 %v2091, %v2136
    %2138 = vmatmul.f32.gmra.mxu0 %v2099
    %v2139 = vpop.f32.mrf.mxu0
    %v2140 = vadd.f32 %v2091, %v2139
    %2141 = vmatmul.f32.gmra.mxu0 %v2102
    %v2142 = vpop.f32.mrf.mxu0
    %v2143 = vadd.f32 %v2091, %v2142
    %2144 = vmatmul.f32.gmra.mxu0 %v2105
    %v2145 = vpop.f32.mrf.mxu0
    %v2146 = vadd.f32 %v2091, %v2145
    %2147 = vmatmul.f32.gmra.mxu0 %v2108
    %v2148 = vpop.f32.mrf.mxu0
    %v2149 = vadd.f32 %v2091, %v2148
    %2150 = vmatmul.f32.gmra.mxu0 %v2111
    %v2151 = vpop.f32.mrf.mxu0
    %v2152 = vadd.f32 %v2091, %v2151
    %2153 = vmatmul.f32.gmra.mxu0 %v2114
    %v2154 = vpop.f32.mrf.mxu0
    %v2155 = vadd.f32 %v2091, %v2154
    %2156 = vdwg.mxu0
    %v2157 = vmax.f32 %v2134, 0.0
    %v2158 = vmax.f32 %v2137, 0.0
    %v2159 = vmax.f32 %v2140, 0.0
    %v2160 = vmax.f32 %v2143, 0.0
    %v2161 = vmax.f32 %v2146, 0.0
    %v2162 = vmax.f32 %v2149, 0.0
    %v2163 = vmax.f32 %v2152, 0.0
    %v2164 = vmax.f32 %v2155, 0.0
    %v2165 = vld [vmem:[%s2 + $0x138] sm:$0xff]
    %v2166 = vld [vmem:[%s2 + $0x140] sm:$0xff]
    %v2167 = vld [vmem:[%s2 + $0x148] sm:$0xff]
    %v2168 = vld [vmem:[%s2 + $0x150] sm:$0xff]
    %v2169 = vld [vmem:[%s2 + $0x158] sm:$0x1]
    %v2170 = vperm.slane %v2169, 0
    %v2172 = vsel %vm113, %v2157, 0
    %v2175 = vsel %vm113, %v2158, 0
    %v2178 = vsel %vm113, %v2159, 0
    %v2181 = vsel %vm113, %v2160, 0
    %v2184 = vsel %vm113, %v2161, 0
    %v2187 = vsel %vm113, %v2162, 0
    %v2190 = vsel %vm113, %v2163, 0
    %v2193 = vsel %vm113, %v2164, 0
    %2195 = vmatpush.msra.mxu0 0.0
    %2196 = vmatpush.msra.mxu0 0.0
    %2197 = vmatpush.msra.mxu0 0.0
    %2198 = vmatpush.msra.mxu0 0.0
    %2199 = vmatpush.msra.mxu0 0.0
    %2200 = vmatpush.msra.mxu0 0.0
    %2201 = vmatpush.msra.mxu0 0.0
    %2202 = vmatpush.msra.mxu0 0.0
    %2203 = vmatpush.msra.mxu0 0.0
    %2204 = vmatpush.msra.mxu0 0.0
    %2205 = vmatpush.msra.mxu0 0.0
    %2206 = vmatpush.msra.mxu0 0.0
    %2207 = vmatpush.msra.mxu0 %v2168
    %2208 = vmatpush.msra.mxu0 %v2167
    %2209 = vmatpush.msra.mxu0 %v2166
    %2210 = vmatpush.msra.mxu0 %v2165
    %2211 = vmatmul.f32.gmra.mxu0 %v2172
    %v2212 = vpop.f32.mrf.mxu0
    %v2213 = vadd.f32 %v2170, %v2212
    %2214 = vmatmul.f32.gmra.mxu0 %v2175
    %v2215 = vpop.f32.mrf.mxu0
    %v2216 = vadd.f32 %v2170, %v2215
    %2217 = vmatmul.f32.gmra.mxu0 %v2178
    %v2218 = vpop.f32.mrf.mxu0
    %v2219 = vadd.f32 %v2170, %v2218
    %2220 = vmatmul.f32.gmra.mxu0 %v2181
    %v2221 = vpop.f32.mrf.mxu0
    %v2222 = vadd.f32 %v2170, %v2221
    %2223 = vmatmul.f32.gmra.mxu0 %v2184
    %v2224 = vpop.f32.mrf.mxu0
    %v2225 = vadd.f32 %v2170, %v2224
    %2226 = vmatmul.f32.gmra.mxu0 %v2187
    %v2227 = vpop.f32.mrf.mxu0
    %v2228 = vadd.f32 %v2170, %v2227
    %2229 = vmatmul.f32.gmra.mxu0 %v2190
    %v2230 = vpop.f32.mrf.mxu0
    %v2231 = vadd.f32 %v2170, %v2230
    %2232 = vmatmul.f32.gmra.mxu0 %v2193
    %v2233 = vpop.f32.mrf.mxu0
    %v2234 = vadd.f32 %v2170, %v2233
    %2235 = vdwg.mxu0
    %v2236 = vmax.f32 %v2213, 0.0
    %v2237 = vmax.f32 %v2216, 0.0
    %v2238 = vmax.f32 %v2219, 0.0
    %v2239 = vmax.f32 %v2222, 0.0
    %v2240 = vmax.f32 %v2225, 0.0
    %v2241 = vmax.f32 %v2228, 0.0
    %v2242 = vmax.f32 %v2231, 0.0
    %v2243 = vmax.f32 %v2234, 0.0
    %vm2244 = vcmp.ne.f32.partialorder %v2213, %v2213
    %vm2245 = vcmp.ne.f32.partialorder %v2216, %v2216
    %vm2246 = vcmp.ne.f32.partialorder %v2219, %v2219
    %vm2247 = vcmp.ne.f32.partialorder %v2222, %v2222
    %vm2248 = vcmp.ne.f32.partialorder %v2225, %v2225
    %vm2249 = vcmp.ne.f32.partialorder %v2228, %v2228
    %vm2250 = vcmp.ne.f32.partialorder %v2231, %v2231
    %vm2251 = vcmp.ne.f32.partialorder %v2234, %v2234
    %v2252 = vadd.f32 %v2213, 0.0
    %v2253 = vadd.f32 %v2216, 0.0
    %v2254 = vadd.f32 %v2219, 0.0
    %v2255 = vadd.f32 %v2222, 0.0
    %v2256 = vadd.f32 %v2225, 0.0
    %v2257 = vadd.f32 %v2228, 0.0
    %v2258 = vadd.f32 %v2231, 0.0
    %v2259 = vadd.f32 %v2234, 0.0
    %v2260 = vand.u32 2147483647, %v2213
    %v2261 = vand.u32 2147483647, %v2216
    %v2262 = vand.u32 2147483647, %v2219
    %v2263 = vand.u32 2147483647, %v2222
    %v2264 = vand.u32 2147483647, %v2225
    %v2265 = vand.u32 2147483647, %v2228
    %v2266 = vand.u32 2147483647, %v2231
    %v2267 = vand.u32 2147483647, %v2234
    %v2268 = vsub.f32 0.0, %v2260
    %v2269 = vsub.f32 0.0, %v2261
    %v2270 = vsub.f32 0.0, %v2262
    %v2271 = vsub.f32 0.0, %v2263
    %v2272 = vsub.f32 0.0, %v2264
    %v2273 = vsub.f32 0.0, %v2265
    %v2274 = vsub.f32 0.0, %v2266
    %v2275 = vsub.f32 0.0, %v2267
    %v2276 = vmul.f32 %v2268, 1.442695
    %v2277 = vpow.pop %v2276
    %v2278 = vmul.f32 %v2269, 1.442695
    %v2279 = vpow.pop %v2278
    %v2280 = vmul.f32 %v2270, 1.442695
    %v2281 = vpow.pop %v2280
    %v2282 = vmul.f32 %v2271, 1.442695
    %v2283 = vpow.pop %v2282
    %v2284 = vmul.f32 %v2272, 1.442695
    %v2285 = vpow.pop %v2284
    %v2286 = vmul.f32 %v2273, 1.442695
    %v2287 = vpow.pop %v2286
    %v2288 = vmul.f32 %v2274, 1.442695
    %v2289 = vpow.pop %v2288
    %v2290 = vmul.f32 %v2275, 1.442695
    %v2291 = vpow.pop %v2290
    %v2292 = vadd.f32 %v2277, 1.0
    %v2293 = vlog2.pop %v2292
    %v2294 = vmul.f32 %v2293, 0.6931472
    %v2295 = vmul.f32 -0.5, %v2277
    %v2296 = vadd.f32 %v2295, 1.0
    %v2297 = vmul.f32 %v2296, %v2277
    %v2298 = vand.u32 2147483647, %v2277
    %vm2299 = vcmp.lt.f32.partialorder %v2298, 0.0004427343
    %v2300 = vsel %vm2299, %v2297, %v2294
    %v2301 = vadd.f32 %v2279, 1.0
    %v2302 = vlog2.pop %v2301
    %v2303 = vmul.f32 %v2302, 0.6931472
    %v2304 = vmul.f32 -0.5, %v2279
    %v2305 = vadd.f32 %v2304, 1.0
    %v2306 = vmul.f32 %v2305, %v2279
    %v2307 = vand.u32 2147483647, %v2279
    %vm2308 = vcmp.lt.f32.partialorder %v2307, 0.0004427343
    %v2309 = vsel %vm2308, %v2306, %v2303
    %v2310 = vadd.f32 %v2281, 1.0
    %v2311 = vlog2.pop %v2310
    %v2312 = vmul.f32 %v2311, 0.6931472
    %v2313 = vmul.f32 -0.5, %v2281
    %v2314 = vadd.f32 %v2313, 1.0
    %v2315 = vmul.f32 %v2314, %v2281
    %v2316 = vand.u32 2147483647, %v2281
    %vm2317 = vcmp.lt.f32.partialorder %v2316, 0.0004427343
    %v2318 = vsel %vm2317, %v2315, %v2312
    %v2319 = vadd.f32 %v2283, 1.0
    %v2320 = vlog2.pop %v2319
    %v2321 = vmul.f32 %v2320, 0.6931472
    %v2322 = vmul.f32 -0.5, %v2283
    %v2323 = vadd.f32 %v2322, 1.0
    %v2324 = vmul.f32 %v2323, %v2283
    %v2325 = vand.u32 2147483647, %v2283
    %vm2326 = vcmp.lt.f32.partialorder %v2325, 0.0004427343
    %v2327 = vsel %vm2326, %v2324, %v2321
    %v2328 = vadd.f32 %v2285, 1.0
    %v2329 = vlog2.pop %v2328
    %v2330 = vmul.f32 %v2329, 0.6931472
    %v2331 = vmul.f32 -0.5, %v2285
    %v2332 = vadd.f32 %v2331, 1.0
    %v2333 = vmul.f32 %v2332, %v2285
    %v2334 = vand.u32 2147483647, %v2285
    %vm2335 = vcmp.lt.f32.partialorder %v2334, 0.0004427343
    %v2336 = vsel %vm2335, %v2333, %v2330
    %v2337 = vadd.f32 %v2287, 1.0
    %v2338 = vlog2.pop %v2337
    %v2339 = vmul.f32 %v2338, 0.6931472
    %v2340 = vmul.f32 -0.5, %v2287
    %v2341 = vadd.f32 %v2340, 1.0
    %v2342 = vmul.f32 %v2341, %v2287
    %v2343 = vand.u32 2147483647, %v2287
    %vm2344 = vcmp.lt.f32.partialorder %v2343, 0.0004427343
    %v2345 = vsel %vm2344, %v2342, %v2339
    %v2346 = vadd.f32 %v2289, 1.0
    %v2347 = vlog2.pop %v2346
    %v2348 = vmul.f32 %v2347, 0.6931472
    %v2349 = vmul.f32 -0.5, %v2289
    %v2350 = vadd.f32 %v2349, 1.0
    %v2351 = vmul.f32 %v2350, %v2289
    %v2352 = vand.u32 2147483647, %v2289
    %vm2353 = vcmp.lt.f32.partialorder %v2352, 0.0004427343
    %v2354 = vsel %vm2353, %v2351, %v2348
    %v2355 = vadd.f32 %v2291, 1.0
    %v2356 = vlog2.pop %v2355
    %v2357 = vmul.f32 %v2356, 0.6931472
    %v2358 = vmul.f32 -0.5, %v2291
    %v2359 = vadd.f32 %v2358, 1.0
    %v2360 = vmul.f32 %v2359, %v2291
    %v2361 = vand.u32 2147483647, %v2291
    %vm2362 = vcmp.lt.f32.partialorder %v2361, 0.0004427343
    %v2363 = vsel %vm2362, %v2360, %v2357
    %v2364 = vadd.f32 %v2236, %v2300
    %v2365 = vadd.f32 %v2237, %v2309
    %v2366 = vadd.f32 %v2238, %v2318
    %v2367 = vadd.f32 %v2239, %v2327
    %v2368 = vadd.f32 %v2240, %v2336
    %v2369 = vadd.f32 %v2241, %v2345
    %v2370 = vadd.f32 %v2242, %v2354
    %v2371 = vadd.f32 %v2243, %v2363
    %v2372 = vsel %vm2244, %v2252, %v2364
    %v2373 = vsel %vm2245, %v2253, %v2365
    %v2374 = vsel %vm2246, %v2254, %v2366
    %v2375 = vsel %vm2247, %v2255, %v2367
    %v2376 = vsel %vm2248, %v2256, %v2368
    %v2377 = vsel %vm2249, %v2257, %v2369
    %v2378 = vsel %vm2250, %v2258, %v2370
    %v2379 = vsel %vm2251, %v2259, %v2371
    %v2380 = vld [vmem:[%s2 + $0x160] sm:$0xff]
    %v2381 = vld [vmem:[%s2 + $0x168] sm:$0xff]
    %v2382 = vld [vmem:[%s2 + $0x170] sm:$0xff]
    %v2383 = vld [vmem:[%s2 + $0x178] sm:$0xff]
    %v2384 = vld [vmem:[%s2 + $0x180] sm:$0xff]
    %v2385 = vld [vmem:[%s2 + $0x188] sm:$0xff]
    %v2386 = vld [vmem:[%s2 + $0x190] sm:$0xff]
    %v2387 = vld [vmem:[%s2 + $0x198] sm:$0xff]
    %2388 = vmatpush.msra.mxu0 0.0
    %2389 = vmatpush.msra.mxu0 0.0
    %2390 = vmatpush.msra.mxu0 0.0
    %2391 = vmatpush.msra.mxu0 0.0
    %2392 = vmatpush.msra.mxu0 0.0
    %2393 = vmatpush.msra.mxu0 0.0
    %2394 = vmatpush.msra.mxu0 0.0
    %2395 = vmatpush.msra.mxu0 0.0
    %2396 = vmatpush.msra.mxu0 0.0
    %2397 = vmatpush.msra.mxu0 0.0
    %2398 = vmatpush.msra.mxu0 0.0
    %2399 = vmatpush.msra.mxu0 0.0
    %2400 = vmatpush.msra.mxu0 %v2387
    %2401 = vmatpush.msra.mxu0 %v2386
    %2402 = vmatpush.msra.mxu0 %v2385
    %2403 = vmatpush.msra.mxu0 %v2384
    %2404 = vmatmul.f32.gmra.mxu0 %v2093
    %v2405 = vpop.f32.mrf.mxu0
    %v2406 = vadd.f32 0.0, %v2405
    %2407 = vmatmul.f32.gmra.mxu0 %v2096
    %v2408 = vpop.f32.mrf.mxu0
    %v2409 = vadd.f32 0.0, %v2408
    %2410 = vmatmul.f32.gmra.mxu0 %v2099
    %v2411 = vpop.f32.mrf.mxu0
    %v2412 = vadd.f32 0.0, %v2411
    %2413 = vmatmul.f32.gmra.mxu0 %v2102
    %v2414 = vpop.f32.mrf.mxu0
    %v2415 = vadd.f32 0.0, %v2414
    %2416 = vmatmul.f32.gmra.mxu0 %v2105
    %v2417 = vpop.f32.mrf.mxu0
    %v2418 = vadd.f32 0.0, %v2417
    %2419 = vmatmul.f32.gmra.mxu0 %v2108
    %v2420 = vpop.f32.mrf.mxu0
    %v2421 = vadd.f32 0.0, %v2420
    %2422 = vmatmul.f32.gmra.mxu0 %v2111
    %v2423 = vpop.f32.mrf.mxu0
    %v2424 = vadd.f32 0.0, %v2423
    %2425 = vmatmul.f32.gmra.mxu0 %v2114
    %v2426 = vpop.f32.mrf.mxu0
    %v2427 = vadd.f32 0.0, %v2426
    %2428 = vdwg.mxu0
    %v2430 = vsel %vm113, %v2070, 0
    %v2433 = vsel %vm113, %v2071, 0
    %v2436 = vsel %vm113, %v2072, 0
    %v2439 = vsel %vm113, %v2073, 0
    %v2442 = vsel %vm113, %v2074, 0
    %v2445 = vsel %vm113, %v2075, 0
    %v2448 = vsel %vm113, %v2076, 0
    %v2451 = vsel %vm113, %v2077, 0
    %2453 = vmatpush.msra.mxu0 0.0
    %2454 = vmatpush.msra.mxu0 0.0
    %2455 = vmatpush.msra.mxu0 0.0
    %2456 = vmatpush.msra.mxu0 0.0
    %2457 = vmatpush.msra.mxu0 0.0
    %2458 = vmatpush.msra.mxu0 0.0
    %2459 = vmatpush.msra.mxu0 0.0
    %2460 = vmatpush.msra.mxu0 0.0
    %2461 = vmatpush.msra.mxu0 0.0
    %2462 = vmatpush.msra.mxu0 0.0
    %2463 = vmatpush.msra.mxu0 0.0
    %2464 = vmatpush.msra.mxu0 0.0
    %2465 = vmatpush.msra.mxu0 %v2383
    %2466 = vmatpush.msra.mxu0 %v2382
    %2467 = vmatpush.msra.mxu0 %v2381
    %2468 = vmatpush.msra.mxu0 %v2380
    %2469 = vmatmul.f32.gmra.mxu0 %v2430
    %v2470 = vpop.f32.mrf.mxu0
    %v2471 = vadd.f32 %v2406, %v2470
    %2472 = vmatmul.f32.gmra.mxu0 %v2433
    %v2473 = vpop.f32.mrf.mxu0
    %v2474 = vadd.f32 %v2409, %v2473
    %2475 = vmatmul.f32.gmra.mxu0 %v2436
    %v2476 = vpop.f32.mrf.mxu0
    %v2477 = vadd.f32 %v2412, %v2476
    %2478 = vmatmul.f32.gmra.mxu0 %v2439
    %v2479 = vpop.f32.mrf.mxu0
    %v2480 = vadd.f32 %v2415, %v2479
    %2481 = vmatmul.f32.gmra.mxu0 %v2442
    %v2482 = vpop.f32.mrf.mxu0
    %v2483 = vadd.f32 %v2418, %v2482
    %2484 = vmatmul.f32.gmra.mxu0 %v2445
    %v2485 = vpop.f32.mrf.mxu0
    %v2486 = vadd.f32 %v2421, %v2485
    %2487 = vmatmul.f32.gmra.mxu0 %v2448
    %v2488 = vpop.f32.mrf.mxu0
    %v2489 = vadd.f32 %v2424, %v2488
    %2490 = vmatmul.f32.gmra.mxu0 %v2451
    %v2491 = vpop.f32.mrf.mxu0
    %v2492 = vadd.f32 %v2427, %v2491
    %2493 = vdwg.mxu0
    %v2494 = vld [vmem:[%s2 + $0x1a0] sm:$0x1]
    %v2495 = vperm.slane %v2494, 0
    %v2496 = vadd.f32 %v2471, %v2495
    %v2497 = vadd.f32 %v2474, %v2495
    %v2498 = vadd.f32 %v2477, %v2495
    %v2499 = vadd.f32 %v2480, %v2495
    %v2500 = vadd.f32 %v2483, %v2495
    %v2501 = vadd.f32 %v2486, %v2495
    %v2502 = vadd.f32 %v2489, %v2495
    %v2503 = vadd.f32 %v2492, %v2495
    %v2504 = vmax.f32 %v2496, 0.0
    %v2505 = vmax.f32 %v2497, 0.0
    %v2506 = vmax.f32 %v2498, 0.0
    %v2507 = vmax.f32 %v2499, 0.0
    %v2508 = vmax.f32 %v2500, 0.0
    %v2509 = vmax.f32 %v2501, 0.0
    %v2510 = vmax.f32 %v2502, 0.0
    %v2511 = vmax.f32 %v2503, 0.0
    %v2512 = vld [vmem:[%s2 + $0x1a8] sm:$0xff]
    %v2513 = vld [vmem:[%s2 + $0x1b0] sm:$0xff]
    %v2514 = vld [vmem:[%s2 + $0x1b8] sm:$0xff]
    %v2515 = vld [vmem:[%s2 + $0x1c0] sm:$0xff]
    %v2516 = vld [vmem:[%s2 + $0x1c8] sm:$0x1]
    %v2517 = vperm.slane %v2516, 0
    %v2519 = vsel %vm113, %v2504, 0
    %v2522 = vsel %vm113, %v2505, 0
    %v2525 = vsel %vm113, %v2506, 0
    %v2528 = vsel %vm113, %v2507, 0
    %v2531 = vsel %vm113, %v2508, 0
    %v2534 = vsel %vm113, %v2509, 0
    %v2537 = vsel %vm113, %v2510, 0
    %v2540 = vsel %vm113, %v2511, 0
    %2542 = vmatpush.msra.mxu0 0.0
    %2543 = vmatpush.msra.mxu0 0.0
    %2544 = vmatpush.msra.mxu0 0.0
    %2545 = vmatpush.msra.mxu0 0.0
    %2546 = vmatpush.msra.mxu0 0.0
    %2547 = vmatpush.msra.mxu0 0.0
    %2548 = vmatpush.msra.mxu0 0.0
    %2549 = vmatpush.msra.mxu0 0.0
    %2550 = vmatpush.msra.mxu0 0.0
    %2551 = vmatpush.msra.mxu0 0.0
    %2552 = vmatpush.msra.mxu0 0.0
    %2553 = vmatpush.msra.mxu0 0.0
    %2554 = vmatpush.msra.mxu0 %v2515
    %2555 = vmatpush.msra.mxu0 %v2514
    %2556 = vmatpush.msra.mxu0 %v2513
    %2557 = vmatpush.msra.mxu0 %v2512
    %2558 = vmatmul.f32.gmra.mxu0 %v2519
    %v2559 = vpop.f32.mrf.mxu0
    %v2560 = vadd.f32 %v2517, %v2559
    %2561 = vmatmul.f32.gmra.mxu0 %v2522
    %v2562 = vpop.f32.mrf.mxu0
    %v2563 = vadd.f32 %v2517, %v2562
    %2564 = vmatmul.f32.gmra.mxu0 %v2525
    %v2565 = vpop.f32.mrf.mxu0
    %v2566 = vadd.f32 %v2517, %v2565
    %2567 = vmatmul.f32.gmra.mxu0 %v2528
    %v2568 = vpop.f32.mrf.mxu0
    %v2569 = vadd.f32 %v2517, %v2568
    %2570 = vmatmul.f32.gmra.mxu0 %v2531
    %v2571 = vpop.f32.mrf.mxu0
    %v2572 = vadd.f32 %v2517, %v2571
    %2573 = vmatmul.f32.gmra.mxu0 %v2534
    %v2574 = vpop.f32.mrf.mxu0
    %v2575 = vadd.f32 %v2517, %v2574
    %2576 = vmatmul.f32.gmra.mxu0 %v2537
    %v2577 = vpop.f32.mrf.mxu0
    %v2578 = vadd.f32 %v2517, %v2577
    %2579 = vmatmul.f32.gmra.mxu0 %v2540
    %v2580 = vpop.f32.mrf.mxu0
    %v2581 = vadd.f32 %v2517, %v2580
    %2582 = vdwg.mxu0
    %v2583 = vmax.f32 %v2560, 0.0
    %v2584 = vmax.f32 %v2563, 0.0
    %v2585 = vmax.f32 %v2566, 0.0
    %v2586 = vmax.f32 %v2569, 0.0
    %v2587 = vmax.f32 %v2572, 0.0
    %v2588 = vmax.f32 %v2575, 0.0
    %v2589 = vmax.f32 %v2578, 0.0
    %v2590 = vmax.f32 %v2581, 0.0
    %v2591 = vld [vmem:[%s2 + $0x1d0] sm:$0xff]
    %v2592 = vld [vmem:[%s2 + $0x1d8] sm:$0xff]
    %v2593 = vld [vmem:[%s2 + $0x1e0] sm:$0xff]
    %v2594 = vld [vmem:[%s2 + $0x1e8] sm:$0xff]
    %v2595 = vld [vmem:[%s2 + $0x1f0] sm:$0x1]
    %v2596 = vperm.slane %v2595, 0
    %v2598 = vsel %vm113, %v2583, 0
    %v2601 = vsel %vm113, %v2584, 0
    %v2604 = vsel %vm113, %v2585, 0
    %v2607 = vsel %vm113, %v2586, 0
    %v2610 = vsel %vm113, %v2587, 0
    %v2613 = vsel %vm113, %v2588, 0
    %v2616 = vsel %vm113, %v2589, 0
    %v2619 = vsel %vm113, %v2590, 0
    %2621 = vmatpush.msra.mxu0 0.0
    %2622 = vmatpush.msra.mxu0 0.0
    %2623 = vmatpush.msra.mxu0 0.0
    %2624 = vmatpush.msra.mxu0 0.0
    %2625 = vmatpush.msra.mxu0 0.0
    %2626 = vmatpush.msra.mxu0 0.0
    %2627 = vmatpush.msra.mxu0 0.0
    %2628 = vmatpush.msra.mxu0 0.0
    %2629 = vmatpush.msra.mxu0 0.0
    %2630 = vmatpush.msra.mxu0 0.0
    %2631 = vmatpush.msra.mxu0 0.0
    %2632 = vmatpush.msra.mxu0 0.0
    %2633 = vmatpush.msra.mxu0 %v2594
    %2634 = vmatpush.msra.mxu0 %v2593
    %2635 = vmatpush.msra.mxu0 %v2592
    %2636 = vmatpush.msra.mxu0 %v2591
    %2637 = vmatmul.f32.gmra.mxu0 %v2598
    %v2638 = vpop.f32.mrf.mxu0
    %v2639 = vadd.f32 %v2596, %v2638
    %2640 = vmatmul.f32.gmra.mxu0 %v2601
    %v2641 = vpop.f32.mrf.mxu0
    %v2642 = vadd.f32 %v2596, %v2641
    %2643 = vmatmul.f32.gmra.mxu0 %v2604
    %v2644 = vpop.f32.mrf.mxu0
    %v2645 = vadd.f32 %v2596, %v2644
    %2646 = vmatmul.f32.gmra.mxu0 %v2607
    %v2647 = vpop.f32.mrf.mxu0
    %v2648 = vadd.f32 %v2596, %v2647
    %2649 = vmatmul.f32.gmra.mxu0 %v2610
    %v2650 = vpop.f32.mrf.mxu0
    %v2651 = vadd.f32 %v2596, %v2650
    %2652 = vmatmul.f32.gmra.mxu0 %v2613
    %v2653 = vpop.f32.mrf.mxu0
    %v2654 = vadd.f32 %v2596, %v2653
    %2655 = vmatmul.f32.gmra.mxu0 %v2616
    %v2656 = vpop.f32.mrf.mxu0
    %v2657 = vadd.f32 %v2596, %v2656
    %2658 = vmatmul.f32.gmra.mxu0 %v2619
    %v2659 = vpop.f32.mrf.mxu0
    %v2660 = vadd.f32 %v2596, %v2659
    %2661 = vdwg.mxu0
    %v2662 = vmax.f32 %v2639, 0.0
    %v2663 = vmax.f32 %v2642, 0.0
    %v2664 = vmax.f32 %v2645, 0.0
    %v2665 = vmax.f32 %v2648, 0.0
    %v2666 = vmax.f32 %v2651, 0.0
    %v2667 = vmax.f32 %v2654, 0.0
    %v2668 = vmax.f32 %v2657, 0.0
    %v2669 = vmax.f32 %v2660, 0.0
    %v2670 = vld [vmem:[%s2 + $0x1f8] sm:$0xff]
    %v2671 = vld [vmem:[%s2 + $0x200] sm:$0xf]
    %v2672 = vld [vmem:[%s2 + $0x208] sm:$0x1]
    %v2673 = vperm.slane %v2672, 0
    %v2675 = vsel %vm29, %v2662, 0
    %v2678 = vsel %vm29, %v2663, 0
    %v2681 = vsel %vm29, %v2664, 0
    %v2684 = vsel %vm29, %v2665, 0
    %v2687 = vsel %vm29, %v2666, 0
    %v2690 = vsel %vm29, %v2667, 0
    %v2693 = vsel %vm29, %v2668, 0
    %v2696 = vsel %vm29, %v2669, 0
    %v2699 = vsel %vm54, %v2671, 0
    %2701 = vmatpush.msra.mxu0 0.0
    %2702 = vmatpush.msra.mxu0 0.0
    %2703 = vmatpush.msra.mxu0 0.0
    %2704 = vmatpush.msra.mxu0 0.0
    %2705 = vmatpush.msra.mxu0 0.0
    %2706 = vmatpush.msra.mxu0 0.0
    %2707 = vmatpush.msra.mxu0 0.0
    %2708 = vmatpush.msra.mxu0 0.0
    %2709 = vmatpush.msra.mxu0 0.0
    %2710 = vmatpush.msra.mxu0 0.0
    %2711 = vmatpush.msra.mxu0 0.0
    %2712 = vmatpush.msra.mxu0 0.0
    %2713 = vmatpush.msra.mxu0 0.0
    %2714 = vmatpush.msra.mxu0 0.0
    %2715 = vmatpush.msra.mxu0 %v2699
    %2716 = vmatpush.msra.mxu0 %v2670
    %2717 = vmatmul.f32.gmra.mxu0 %v2675
    %v2718 = vpop.f32.mrf.mxu0
    %v2719 = vadd.f32 %v2673, %v2718
    %2720 = vmatmul.f32.gmra.mxu0 %v2678
    %v2721 = vpop.f32.mrf.mxu0
    %v2722 = vadd.f32 %v2673, %v2721
    %2723 = vmatmul.f32.gmra.mxu0 %v2681
    %v2724 = vpop.f32.mrf.mxu0
    %v2725 = vadd.f32 %v2673, %v2724
    %2726 = vmatmul.f32.gmra.mxu0 %v2684
    %v2727 = vpop.f32.mrf.mxu0
    %v2728 = vadd.f32 %v2673, %v2727
    %2729 = vmatmul.f32.gmra.mxu0 %v2687
    %v2730 = vpop.f32.mrf.mxu0
    %v2731 = vadd.f32 %v2673, %v2730
    %2732 = vmatmul.f32.gmra.mxu0 %v2690
    %v2733 = vpop.f32.mrf.mxu0
    %v2734 = vadd.f32 %v2673, %v2733
    %2735 = vmatmul.f32.gmra.mxu0 %v2693
    %v2736 = vpop.f32.mrf.mxu0
    %v2737 = vadd.f32 %v2673, %v2736
    %2738 = vmatmul.f32.gmra.mxu0 %v2696
    %v2739 = vpop.f32.mrf.mxu0
    %v2740 = vadd.f32 %v2673, %v2739
    %2741 = vdwg.mxu0
    %vm2742 = vcmp.ne.f32.partialorder %v2639, %v2639
    %vm2743 = vcmp.ne.f32.partialorder %v2642, %v2642
    %vm2744 = vcmp.ne.f32.partialorder %v2645, %v2645
    %vm2745 = vcmp.ne.f32.partialorder %v2648, %v2648
    %vm2746 = vcmp.ne.f32.partialorder %v2651, %v2651
    %vm2747 = vcmp.ne.f32.partialorder %v2654, %v2654
    %vm2748 = vcmp.ne.f32.partialorder %v2657, %v2657
    %vm2749 = vcmp.ne.f32.partialorder %v2660, %v2660
    %v2750 = vadd.f32 %v2639, 0.0
    %v2751 = vadd.f32 %v2642, 0.0
    %v2752 = vadd.f32 %v2645, 0.0
    %v2753 = vadd.f32 %v2648, 0.0
    %v2754 = vadd.f32 %v2651, 0.0
    %v2755 = vadd.f32 %v2654, 0.0
    %v2756 = vadd.f32 %v2657, 0.0
    %v2757 = vadd.f32 %v2660, 0.0
    %v2758 = vand.u32 2147483647, %v2639
    %v2759 = vand.u32 2147483647, %v2642
    %v2760 = vand.u32 2147483647, %v2645
    %v2761 = vand.u32 2147483647, %v2648
    %v2762 = vand.u32 2147483647, %v2651
    %v2763 = vand.u32 2147483647, %v2654
    %v2764 = vand.u32 2147483647, %v2657
    %v2765 = vand.u32 2147483647, %v2660
    %v2766 = vsub.f32 0.0, %v2758
    %v2767 = vsub.f32 0.0, %v2759
    %v2768 = vsub.f32 0.0, %v2760
    %v2769 = vsub.f32 0.0, %v2761
    %v2770 = vsub.f32 0.0, %v2762
    %v2771 = vsub.f32 0.0, %v2763
    %v2772 = vsub.f32 0.0, %v2764
    %v2773 = vsub.f32 0.0, %v2765
    %v2774 = vmul.f32 %v2766, 1.442695
    %v2775 = vpow.pop %v2774
    %v2776 = vmul.f32 %v2767, 1.442695
    %v2777 = vpow.pop %v2776
    %v2778 = vmul.f32 %v2768, 1.442695
    %v2779 = vpow.pop %v2778
    %v2780 = vmul.f32 %v2769, 1.442695
    %v2781 = vpow.pop %v2780
    %v2782 = vmul.f32 %v2770, 1.442695
    %v2783 = vpow.pop %v2782
    %v2784 = vmul.f32 %v2771, 1.442695
    %v2785 = vpow.pop %v2784
    %v2786 = vmul.f32 %v2772, 1.442695
    %v2787 = vpow.pop %v2786
    %v2788 = vmul.f32 %v2773, 1.442695
    %v2789 = vpow.pop %v2788
    %v2790 = vadd.f32 %v2775, 1.0
    %v2791 = vlog2.pop %v2790
    %v2792 = vmul.f32 %v2791, 0.6931472
    %v2793 = vmul.f32 -0.5, %v2775
    %v2794 = vadd.f32 %v2793, 1.0
    %v2795 = vmul.f32 %v2794, %v2775
    %v2796 = vand.u32 2147483647, %v2775
    %vm2797 = vcmp.lt.f32.partialorder %v2796, 0.0004427343
    %v2798 = vsel %vm2797, %v2795, %v2792
    %v2799 = vadd.f32 %v2777, 1.0
    %v2800 = vlog2.pop %v2799
    %v2801 = vmul.f32 %v2800, 0.6931472
    %v2802 = vmul.f32 -0.5, %v2777
    %v2803 = vadd.f32 %v2802, 1.0
    %v2804 = vmul.f32 %v2803, %v2777
    %v2805 = vand.u32 2147483647, %v2777
    %vm2806 = vcmp.lt.f32.partialorder %v2805, 0.0004427343
    %v2807 = vsel %vm2806, %v2804, %v2801
    %v2808 = vadd.f32 %v2779, 1.0
    %v2809 = vlog2.pop %v2808
    %v2810 = vmul.f32 %v2809, 0.6931472
    %v2811 = vmul.f32 -0.5, %v2779
    %v2812 = vadd.f32 %v2811, 1.0
    %v2813 = vmul.f32 %v2812, %v2779
    %v2814 = vand.u32 2147483647, %v2779
    %vm2815 = vcmp.lt.f32.partialorder %v2814, 0.0004427343
    %v2816 = vsel %vm2815, %v2813, %v2810
    %v2817 = vadd.f32 %v2781, 1.0
    %v2818 = vlog2.pop %v2817
    %v2819 = vmul.f32 %v2818, 0.6931472
    %v2820 = vmul.f32 -0.5, %v2781
    %v2821 = vadd.f32 %v2820, 1.0
    %v2822 = vmul.f32 %v2821, %v2781
    %v2823 = vand.u32 2147483647, %v2781
    %vm2824 = vcmp.lt.f32.partialorder %v2823, 0.0004427343
    %v2825 = vsel %vm2824, %v2822, %v2819
    %v2826 = vadd.f32 %v2783, 1.0
    %v2827 = vlog2.pop %v2826
    %v2828 = vmul.f32 %v2827, 0.6931472
    %v2829 = vmul.f32 -0.5, %v2783
    %v2830 = vadd.f32 %v2829, 1.0
    %v2831 = vmul.f32 %v2830, %v2783
    %v2832 = vand.u32 2147483647, %v2783
    %vm2833 = vcmp.lt.f32.partialorder %v2832, 0.0004427343
    %v2834 = vsel %vm2833, %v2831, %v2828
    %v2835 = vadd.f32 %v2785, 1.0
    %v2836 = vlog2.pop %v2835
    %v2837 = vmul.f32 %v2836, 0.6931472
    %v2838 = vmul.f32 -0.5, %v2785
    %v2839 = vadd.f32 %v2838, 1.0
    %v2840 = vmul.f32 %v2839, %v2785
    %v2841 = vand.u32 2147483647, %v2785
    %vm2842 = vcmp.lt.f32.partialorder %v2841, 0.0004427343
    %v2843 = vsel %vm2842, %v2840, %v2837
    %v2844 = vadd.f32 %v2787, 1.0
    %v2845 = vlog2.pop %v2844
    %v2846 = vmul.f32 %v2845, 0.6931472
    %v2847 = vmul.f32 -0.5, %v2787
    %v2848 = vadd.f32 %v2847, 1.0
    %v2849 = vmul.f32 %v2848, %v2787
    %v2850 = vand.u32 2147483647, %v2787
    %vm2851 = vcmp.lt.f32.partialorder %v2850, 0.0004427343
    %v2852 = vsel %vm2851, %v2849, %v2846
    %v2853 = vadd.f32 %v2789, 1.0
    %v2854 = vlog2.pop %v2853
    %v2855 = vmul.f32 %v2854, 0.6931472
    %v2856 = vmul.f32 -0.5, %v2789
    %v2857 = vadd.f32 %v2856, 1.0
    %v2858 = vmul.f32 %v2857, %v2789
    %v2859 = vand.u32 2147483647, %v2789
    %vm2860 = vcmp.lt.f32.partialorder %v2859, 0.0004427343
    %v2861 = vsel %vm2860, %v2858, %v2855
    %v2862 = vadd.f32 %v2662, %v2798
    %v2863 = vadd.f32 %v2663, %v2807
    %v2864 = vadd.f32 %v2664, %v2816
    %v2865 = vadd.f32 %v2665, %v2825
    %v2866 = vadd.f32 %v2666, %v2834
    %v2867 = vadd.f32 %v2667, %v2843
    %v2868 = vadd.f32 %v2668, %v2852
    %v2869 = vadd.f32 %v2669, %v2861
    %v2870 = vsel %vm2742, %v2750, %v2862
    %v2871 = vsel %vm2743, %v2751, %v2863
    %v2872 = vsel %vm2744, %v2752, %v2864
    %v2873 = vsel %vm2745, %v2753, %v2865
    %v2874 = vsel %vm2746, %v2754, %v2866
    %v2875 = vsel %vm2747, %v2755, %v2867
    %v2876 = vsel %vm2748, %v2756, %v2868
    %v2877 = vsel %vm2749, %v2757, %v2869
    %v2878 = vmax.f32 %v2054, 1e-09
    %v2879 = vmax.f32 %v2055, 1e-09
    %v2880 = vmax.f32 %v2056, 1e-09
    %v2881 = vmax.f32 %v2057, 1e-09
    %v2882 = vmax.f32 %v2058, 1e-09
    %v2883 = vmax.f32 %v2059, 1e-09
    %v2884 = vmax.f32 %v2060, 1e-09
    %v2885 = vmax.f32 %v2061, 1e-09
    %v2886 = vmax.f32 %v2372, 1e-09
    %v2887 = vmax.f32 %v2373, 1e-09
    %v2888 = vmax.f32 %v2374, 1e-09
    %v2889 = vmax.f32 %v2375, 1e-09
    %v2890 = vmax.f32 %v2376, 1e-09
    %v2891 = vmax.f32 %v2377, 1e-09
    %v2892 = vmax.f32 %v2378, 1e-09
    %v2893 = vmax.f32 %v2379, 1e-09
    %v2894 = vmul.f32 %v2878, %v2878
    %v2895 = vmul.f32 %v2879, %v2879
    %v2896 = vmul.f32 %v2880, %v2880
    %v2897 = vmul.f32 %v2881, %v2881
    %v2898 = vmul.f32 %v2882, %v2882
    %v2899 = vmul.f32 %v2883, %v2883
    %v2900 = vmul.f32 %v2884, %v2884
    %v2901 = vmul.f32 %v2885, %v2885
    %v2902 = vmul.f32 %v2886, %v2886
    %v2903 = vmul.f32 %v2887, %v2887
    %v2904 = vmul.f32 %v2888, %v2888
    %v2905 = vmul.f32 %v2889, %v2889
    %v2906 = vmul.f32 %v2890, %v2890
    %v2907 = vmul.f32 %v2891, %v2891
    %v2908 = vmul.f32 %v2892, %v2892
    %v2909 = vmul.f32 %v2893, %v2893
    %v2910 = vrcp.pop %v2902
    %v2911 = vmul.f32 %v2902, %v2910
    %v2912 = vsub.f32 1.0, %v2911
    %v2913 = vmul.f32 %v2910, %v2912
    %v2914 = vadd.f32 %v2910, %v2913
    %vm2915 = vweird.f32 %v2902
    %vm2916 = vweird.f32 %v2910
    %vm2917 = vmor %vm2915, %vm2916
    %v2918 = vsel %vm2917, %v2910, %v2914
    %v2919 = vand.u32 2147483647, %v2902
    %vm2920 = vcmp.eq.f32.partialorder %v2919, 8.507059e+37
    %v2921 = vand.u32 %v2902, 2147483648
    %v2922 = vor.u32 1.1754944e-38, %v2921
    %v2923 = vsel %vm2920, %v2922, %v2918
    %v2924 = vrcp.pop %v2903
    %v2925 = vmul.f32 %v2903, %v2924
    %v2926 = vsub.f32 1.0, %v2925
    %v2927 = vmul.f32 %v2924, %v2926
    %v2928 = vadd.f32 %v2924, %v2927
    %vm2929 = vweird.f32 %v2903
    %vm2930 = vweird.f32 %v2924
    %vm2931 = vmor %vm2929, %vm2930
    %v2932 = vsel %vm2931, %v2924, %v2928
    %v2933 = vand.u32 2147483647, %v2903
    %vm2934 = vcmp.eq.f32.partialorder %v2933, 8.507059e+37
    %v2935 = vand.u32 %v2903, 2147483648
    %v2936 = vor.u32 1.1754944e-38, %v2935
    %v2937 = vsel %vm2934, %v2936, %v2932
    %v2938 = vrcp.pop %v2904
    %v2939 = vmul.f32 %v2904, %v2938
    %v2940 = vsub.f32 1.0, %v2939
    %v2941 = vmul.f32 %v2938, %v2940
    %v2942 = vadd.f32 %v2938, %v2941
    %vm2943 = vweird.f32 %v2904
    %vm2944 = vweird.f32 %v2938
    %vm2945 = vmor %vm2943, %vm2944
    %v2946 = vsel %vm2945, %v2938, %v2942
    %v2947 = vand.u32 2147483647, %v2904
    %vm2948 = vcmp.eq.f32.partialorder %v2947, 8.507059e+37
    %v2949 = vand.u32 %v2904, 2147483648
    %v2950 = vor.u32 1.1754944e-38, %v2949
    %v2951 = vsel %vm2948, %v2950, %v2946
    %v2952 = vrcp.pop %v2905
    %v2953 = vmul.f32 %v2905, %v2952
    %v2954 = vsub.f32 1.0, %v2953
    %v2955 = vmul.f32 %v2952, %v2954
    %v2956 = vadd.f32 %v2952, %v2955
    %vm2957 = vweird.f32 %v2905
    %vm2958 = vweird.f32 %v2952
    %vm2959 = vmor %vm2957, %vm2958
    %v2960 = vsel %vm2959, %v2952, %v2956
    %v2961 = vand.u32 2147483647, %v2905
    %vm2962 = vcmp.eq.f32.partialorder %v2961, 8.507059e+37
    %v2963 = vand.u32 %v2905, 2147483648
    %v2964 = vor.u32 1.1754944e-38, %v2963
    %v2965 = vsel %vm2962, %v2964, %v2960
    %v2966 = vrcp.pop %v2906
    %v2967 = vmul.f32 %v2906, %v2966
    %v2968 = vsub.f32 1.0, %v2967
    %v2969 = vmul.f32 %v2966, %v2968
    %v2970 = vadd.f32 %v2966, %v2969
    %vm2971 = vweird.f32 %v2906
    %vm2972 = vweird.f32 %v2966
    %vm2973 = vmor %vm2971, %vm2972
    %v2974 = vsel %vm2973, %v2966, %v2970
    %v2975 = vand.u32 2147483647, %v2906
    %vm2976 = vcmp.eq.f32.partialorder %v2975, 8.507059e+37
    %v2977 = vand.u32 %v2906, 2147483648
    %v2978 = vor.u32 1.1754944e-38, %v2977
    %v2979 = vsel %vm2976, %v2978, %v2974
    %v2980 = vrcp.pop %v2907
    %v2981 = vmul.f32 %v2907, %v2980
    %v2982 = vsub.f32 1.0, %v2981
    %v2983 = vmul.f32 %v2980, %v2982
    %v2984 = vadd.f32 %v2980, %v2983
    %vm2985 = vweird.f32 %v2907
    %vm2986 = vweird.f32 %v2980
    %vm2987 = vmor %vm2985, %vm2986
    %v2988 = vsel %vm2987, %v2980, %v2984
    %v2989 = vand.u32 2147483647, %v2907
    %vm2990 = vcmp.eq.f32.partialorder %v2989, 8.507059e+37
    %v2991 = vand.u32 %v2907, 2147483648
    %v2992 = vor.u32 1.1754944e-38, %v2991
    %v2993 = vsel %vm2990, %v2992, %v2988
    %v2994 = vrcp.pop %v2908
    %v2995 = vmul.f32 %v2908, %v2994
    %v2996 = vsub.f32 1.0, %v2995
    %v2997 = vmul.f32 %v2994, %v2996
    %v2998 = vadd.f32 %v2994, %v2997
    %vm2999 = vweird.f32 %v2908
    %vm3000 = vweird.f32 %v2994
    %vm3001 = vmor %vm2999, %vm3000
    %v3002 = vsel %vm3001, %v2994, %v2998
    %v3003 = vand.u32 2147483647, %v2908
    %vm3004 = vcmp.eq.f32.partialorder %v3003, 8.507059e+37
    %v3005 = vand.u32 %v2908, 2147483648
    %v3006 = vor.u32 1.1754944e-38, %v3005
    %v3007 = vsel %vm3004, %v3006, %v3002
    %v3008 = vrcp.pop %v2909
    %v3009 = vmul.f32 %v2909, %v3008
    %v3010 = vsub.f32 1.0, %v3009
    %v3011 = vmul.f32 %v3008, %v3010
    %v3012 = vadd.f32 %v3008, %v3011
    %vm3013 = vweird.f32 %v2909
    %vm3014 = vweird.f32 %v3008
    %vm3015 = vmor %vm3013, %vm3014
    %v3016 = vsel %vm3015, %v3008, %v3012
    %v3017 = vand.u32 2147483647, %v2909
    %vm3018 = vcmp.eq.f32.partialorder %v3017, 8.507059e+37
    %v3019 = vand.u32 %v2909, 2147483648
    %v3020 = vor.u32 1.1754944e-38, %v3019
    %v3021 = vsel %vm3018, %v3020, %v3016
    %v3022 = vrcp.pop %v2894
    %v3023 = vmul.f32 %v2894, %v3022
    %v3024 = vsub.f32 1.0, %v3023
    %v3025 = vmul.f32 %v3022, %v3024
    %v3026 = vadd.f32 %v3022, %v3025
    %vm3027 = vweird.f32 %v2894
    %vm3028 = vweird.f32 %v3022
    %vm3029 = vmor %vm3027, %vm3028
    %v3030 = vsel %vm3029, %v3022, %v3026
    %v3031 = vand.u32 2147483647, %v2894
    %vm3032 = vcmp.eq.f32.partialorder %v3031, 8.507059e+37
    %v3033 = vand.u32 %v2894, 2147483648
    %v3034 = vor.u32 1.1754944e-38, %v3033
    %v3035 = vsel %vm3032, %v3034, %v3030
    %v3036 = vrcp.pop %v2895
    %v3037 = vmul.f32 %v2895, %v3036
    %v3038 = vsub.f32 1.0, %v3037
    %v3039 = vmul.f32 %v3036, %v3038
    %v3040 = vadd.f32 %v3036, %v3039
    %vm3041 = vweird.f32 %v2895
    %vm3042 = vweird.f32 %v3036
    %vm3043 = vmor %vm3041, %vm3042
    %v3044 = vsel %vm3043, %v3036, %v3040
    %v3045 = vand.u32 2147483647, %v2895
    %vm3046 = vcmp.eq.f32.partialorder %v3045, 8.507059e+37
    %v3047 = vand.u32 %v2895, 2147483648
    %v3048 = vor.u32 1.1754944e-38, %v3047
    %v3049 = vsel %vm3046, %v3048, %v3044
    %v3050 = vrcp.pop %v2896
    %v3051 = vmul.f32 %v2896, %v3050
    %v3052 = vsub.f32 1.0, %v3051
    %v3053 = vmul.f32 %v3050, %v3052
    %v3054 = vadd.f32 %v3050, %v3053
    %vm3055 = vweird.f32 %v2896
    %vm3056 = vweird.f32 %v3050
    %vm3057 = vmor %vm3055, %vm3056
    %v3058 = vsel %vm3057, %v3050, %v3054
    %v3059 = vand.u32 2147483647, %v2896
    %vm3060 = vcmp.eq.f32.partialorder %v3059, 8.507059e+37
    %v3061 = vand.u32 %v2896, 2147483648
    %v3062 = vor.u32 1.1754944e-38, %v3061
    %v3063 = vsel %vm3060, %v3062, %v3058
    %v3064 = vrcp.pop %v2897
    %v3065 = vmul.f32 %v2897, %v3064
    %v3066 = vsub.f32 1.0, %v3065
    %v3067 = vmul.f32 %v3064, %v3066
    %v3068 = vadd.f32 %v3064, %v3067
    %vm3069 = vweird.f32 %v2897
    %vm3070 = vweird.f32 %v3064
    %vm3071 = vmor %vm3069, %vm3070
    %v3072 = vsel %vm3071, %v3064, %v3068
    %v3073 = vand.u32 2147483647, %v2897
    %vm3074 = vcmp.eq.f32.partialorder %v3073, 8.507059e+37
    %v3075 = vand.u32 %v2897, 2147483648
    %v3076 = vor.u32 1.1754944e-38, %v3075
    %v3077 = vsel %vm3074, %v3076, %v3072
    %v3078 = vrcp.pop %v2898
    %v3079 = vmul.f32 %v2898, %v3078
    %v3080 = vsub.f32 1.0, %v3079
    %v3081 = vmul.f32 %v3078, %v3080
    %v3082 = vadd.f32 %v3078, %v3081
    %vm3083 = vweird.f32 %v2898
    %vm3084 = vweird.f32 %v3078
    %vm3085 = vmor %vm3083, %vm3084
    %v3086 = vsel %vm3085, %v3078, %v3082
    %v3087 = vand.u32 2147483647, %v2898
    %vm3088 = vcmp.eq.f32.partialorder %v3087, 8.507059e+37
    %v3089 = vand.u32 %v2898, 2147483648
    %v3090 = vor.u32 1.1754944e-38, %v3089
    %v3091 = vsel %vm3088, %v3090, %v3086
    %v3092 = vrcp.pop %v2899
    %v3093 = vmul.f32 %v2899, %v3092
    %v3094 = vsub.f32 1.0, %v3093
    %v3095 = vmul.f32 %v3092, %v3094
    %v3096 = vadd.f32 %v3092, %v3095
    %vm3097 = vweird.f32 %v2899
    %vm3098 = vweird.f32 %v3092
    %vm3099 = vmor %vm3097, %vm3098
    %v3100 = vsel %vm3099, %v3092, %v3096
    %v3101 = vand.u32 2147483647, %v2899
    %vm3102 = vcmp.eq.f32.partialorder %v3101, 8.507059e+37
    %v3103 = vand.u32 %v2899, 2147483648
    %v3104 = vor.u32 1.1754944e-38, %v3103
    %v3105 = vsel %vm3102, %v3104, %v3100
    %v3106 = vrcp.pop %v2900
    %v3107 = vmul.f32 %v2900, %v3106
    %v3108 = vsub.f32 1.0, %v3107
    %v3109 = vmul.f32 %v3106, %v3108
    %v3110 = vadd.f32 %v3106, %v3109
    %vm3111 = vweird.f32 %v2900
    %vm3112 = vweird.f32 %v3106
    %vm3113 = vmor %vm3111, %vm3112
    %v3114 = vsel %vm3113, %v3106, %v3110
    %v3115 = vand.u32 2147483647, %v2900
    %vm3116 = vcmp.eq.f32.partialorder %v3115, 8.507059e+37
    %v3117 = vand.u32 %v2900, 2147483648
    %v3118 = vor.u32 1.1754944e-38, %v3117
    %v3119 = vsel %vm3116, %v3118, %v3114
    %v3120 = vrcp.pop %v2901
    %v3121 = vmul.f32 %v2901, %v3120
    %v3122 = vsub.f32 1.0, %v3121
    %v3123 = vmul.f32 %v3120, %v3122
    %v3124 = vadd.f32 %v3120, %v3123
    %vm3125 = vweird.f32 %v2901
    %vm3126 = vweird.f32 %v3120
    %vm3127 = vmor %vm3125, %vm3126
    %v3128 = vsel %vm3127, %v3120, %v3124
    %v3129 = vand.u32 2147483647, %v2901
    %vm3130 = vcmp.eq.f32.partialorder %v3129, 8.507059e+37
    %v3131 = vand.u32 %v2901, 2147483648
    %v3132 = vor.u32 1.1754944e-38, %v3131
    %v3133 = vsel %vm3130, %v3132, %v3128
    %3142 = vrot.lane.b32.xlu0 %v3035, 16
    %v3143 = vpop.permute.xlu0 %3142
    %3144 = vrot.lane.b32.xlu0 %v3049, 16
    %v3145 = vpop.permute.xlu0 %3144
    %3146 = vrot.lane.b32.xlu0 %v3063, 16
    %v3147 = vpop.permute.xlu0 %3146
    %3148 = vrot.lane.b32.xlu0 %v3077, 16
    %v3149 = vpop.permute.xlu0 %3148
    %3150 = vrot.lane.b32.xlu0 %v3091, 16
    %v3151 = vpop.permute.xlu0 %3150
    %3152 = vrot.lane.b32.xlu0 %v3105, 16
    %v3153 = vpop.permute.xlu0 %3152
    %3154 = vrot.lane.b32.xlu0 %v3119, 16
    %v3155 = vpop.permute.xlu0 %3154
    %3156 = vrot.lane.b32.xlu0 %v3133, 16
    %v3157 = vpop.permute.xlu0 %3156
    %v3166 = vmul.f32 %v2902, %v3143
    %v3167 = vmul.f32 %v2903, %v3145
    %v3168 = vmul.f32 %v2904, %v3147
    %v3169 = vmul.f32 %v2905, %v3149
    %v3170 = vmul.f32 %v2906, %v3151
    %v3171 = vmul.f32 %v2907, %v3153
    %v3172 = vmul.f32 %v2908, %v3155
    %v3173 = vmul.f32 %v2909, %v3157
    %v3174 = vlog2.pop %v3166
    %v3175 = vmul.f32 %v3174, 0.6931472
    %v3176 = vlog2.pop %v3167
    %v3177 = vmul.f32 %v3176, 0.6931472
    %v3178 = vlog2.pop %v3168
    %v3179 = vmul.f32 %v3178, 0.6931472
    %v3180 = vlog2.pop %v3169
    %v3181 = vmul.f32 %v3180, 0.6931472
    %v3182 = vlog2.pop %v3170
    %v3183 = vmul.f32 %v3182, 0.6931472
    %v3184 = vlog2.pop %v3171
    %v3185 = vmul.f32 %v3184, 0.6931472
    %v3186 = vlog2.pop %v3172
    %v3187 = vmul.f32 %v3186, 0.6931472
    %v3188 = vlog2.pop %v3173
    %v3189 = vmul.f32 %v3188, 0.6931472
    %v3190 = vsub.f32 %v2046, %v2213
    %v3191 = vsub.f32 %v2047, %v2216
    %v3192 = vsub.f32 %v2048, %v2219
    %v3193 = vsub.f32 %v2049, %v2222
    %v3194 = vsub.f32 %v2050, %v2225
    %v3195 = vsub.f32 %v2051, %v2228
    %v3196 = vsub.f32 %v2052, %v2231
    %v3197 = vsub.f32 %v2053, %v2234
    %v3198 = vmul.f32 %v3190, %v3190
    %v3199 = vmul.f32 %v3191, %v3191
    %v3200 = vmul.f32 %v3192, %v3192
    %v3201 = vmul.f32 %v3193, %v3193
    %v3202 = vmul.f32 %v3194, %v3194
    %v3203 = vmul.f32 %v3195, %v3195
    %v3204 = vmul.f32 %v3196, %v3196
    %v3205 = vmul.f32 %v3197, %v3197
    %v3206 = vadd.f32 %v2894, %v3198
    %v3207 = vadd.f32 %v2895, %v3199
    %v3208 = vadd.f32 %v2896, %v3200
    %v3209 = vadd.f32 %v2897, %v3201
    %v3210 = vadd.f32 %v2898, %v3202
    %v3211 = vadd.f32 %v2899, %v3203
    %v3212 = vadd.f32 %v2900, %v3204
    %v3213 = vadd.f32 %v2901, %v3205
    %3222 = vrot.lane.b32.xlu0 %v2923, 112
    %v3223 = vpop.permute.xlu0 %3222
    %3224 = vrot.lane.b32.xlu0 %v2937, 112
    %v3225 = vpop.permute.xlu0 %3224
    %3226 = vrot.lane.b32.xlu0 %v2951, 112
    %v3227 = vpop.permute.xlu0 %3226
    %3228 = vrot.lane.b32.xlu0 %v2965, 112
    %v3229 = vpop.permute.xlu0 %3228
    %3230 = vrot.lane.b32.xlu0 %v2979, 112
    %v3231 = vpop.permute.xlu0 %3230
    %3232 = vrot.lane.b32.xlu0 %v2993, 112
    %v3233 = vpop.permute.xlu0 %3232
    %3234 = vrot.lane.b32.xlu0 %v3007, 112
    %v3235 = vpop.permute.xlu0 %3234
    %3236 = vrot.lane.b32.xlu0 %v3021, 112
    %v3237 = vpop.permute.xlu0 %3236
    %v3246 = vmul.f32 %v3206, %v3223
    %v3247 = vmul.f32 %v3207, %v3225
    %v3248 = vmul.f32 %v3208, %v3227
    %v3249 = vmul.f32 %v3209, %v3229
    %v3250 = vmul.f32 %v3210, %v3231
    %v3251 = vmul.f32 %v3211, %v3233
    %v3252 = vmul.f32 %v3212, %v3235
    %v3253 = vmul.f32 %v3213, %v3237
    %3262 = vrot.lane.b32.xlu0 %v3246, 16
    %v3263 = vpop.permute.xlu0 %3262
    %3264 = vrot.lane.b32.xlu0 %v3247, 16
    %v3265 = vpop.permute.xlu0 %3264
    %3266 = vrot.lane.b32.xlu0 %v3248, 16
    %v3267 = vpop.permute.xlu0 %3266
    %3268 = vrot.lane.b32.xlu0 %v3249, 16
    %v3269 = vpop.permute.xlu0 %3268
    %3270 = vrot.lane.b32.xlu0 %v3250, 16
    %v3271 = vpop.permute.xlu0 %3270
    %3272 = vrot.lane.b32.xlu0 %v3251, 16
    %v3273 = vpop.permute.xlu0 %3272
    %3274 = vrot.lane.b32.xlu0 %v3252, 16
    %v3275 = vpop.permute.xlu0 %3274
    %3276 = vrot.lane.b32.xlu0 %v3253, 16
    %v3277 = vpop.permute.xlu0 %3276
    %v3286 = vadd.f32 %v3175, %v3263
    %v3287 = vadd.f32 %v3177, %v3265
    %v3288 = vadd.f32 %v3179, %v3267
    %v3289 = vadd.f32 %v3181, %v3269
    %v3290 = vadd.f32 %v3183, %v3271
    %v3291 = vadd.f32 %v3185, %v3273
    %v3292 = vadd.f32 %v3187, %v3275
    %v3293 = vadd.f32 %v3189, %v3277
    %v3294 = vsub.f32 %v3286, 1.0
    %v3295 = vsub.f32 %v3287, 1.0
    %v3296 = vsub.f32 %v3288, 1.0
    %v3297 = vsub.f32 %v3289, 1.0
    %v3298 = vsub.f32 %v3290, 1.0
    %v3299 = vsub.f32 %v3291, 1.0
    %v3300 = vsub.f32 %v3292, 1.0
    %v3301 = vsub.f32 %v3293, 1.0
    %v3302 = vmul.f32 %v2870, 2.0
    %v3303 = vmul.f32 %v2871, 2.0
    %v3304 = vmul.f32 %v2872, 2.0
    %v3305 = vmul.f32 %v2873, 2.0
    %v3306 = vmul.f32 %v2874, 2.0
    %v3307 = vmul.f32 %v2875, 2.0
    %v3308 = vmul.f32 %v2876, 2.0
    %v3309 = vmul.f32 %v2877, 2.0
    %v3310 = vmul.f32 %v3302, %v2870
    %v3311 = vmul.f32 %v3303, %v2871
    %v3312 = vmul.f32 %v3304, %v2872
    %v3313 = vmul.f32 %v3305, %v2873
    %v3314 = vmul.f32 %v3306, %v2874
    %v3315 = vmul.f32 %v3307, %v2875
    %v3316 = vmul.f32 %v3308, %v2876
    %v3317 = vmul.f32 %v3309, %v2877
    %v3318 = vrcp.pop %v3310
    %v3319 = vmul.f32 %v3310, %v3318
    %v3320 = vsub.f32 1.0, %v3319
    %v3321 = vmul.f32 %v3318, %v3320
    %v3322 = vadd.f32 %v3318, %v3321
    %vm3323 = vweird.f32 %v3310
    %vm3324 = vweird.f32 %v3318
    %vm3325 = vmor %vm3323, %vm3324
    %v3326 = vsel %vm3325, %v3318, %v3322
    %v3327 = vand.u32 2147483647, %v3310
    %vm3328 = vcmp.eq.f32.partialorder %v3327, 8.507059e+37
    %v3329 = vand.u32 %v3310, 2147483648
    %v3330 = vor.u32 1.1754944e-38, %v3329
    %v3331 = vsel %vm3328, %v3330, %v3326
    %v3332 = vrcp.pop %v3311
    %v3333 = vmul.f32 %v3311, %v3332
    %v3334 = vsub.f32 1.0, %v3333
    %v3335 = vmul.f32 %v3332, %v3334
    %v3336 = vadd.f32 %v3332, %v3335
    %vm3337 = vweird.f32 %v3311
    %vm3338 = vweird.f32 %v3332
    %vm3339 = vmor %vm3337, %vm3338
    %v3340 = vsel %vm3339, %v3332, %v3336
    %v3341 = vand.u32 2147483647, %v3311
    %vm3342 = vcmp.eq.f32.partialorder %v3341, 8.507059e+37
    %v3343 = vand.u32 %v3311, 2147483648
    %v3344 = vor.u32 1.1754944e-38, %v3343
    %v3345 = vsel %vm3342, %v3344, %v3340
    %v3346 = vrcp.pop %v3312
    %v3347 = vmul.f32 %v3312, %v3346
    %v3348 = vsub.f32 1.0, %v3347
    %v3349 = vmul.f32 %v3346, %v3348
    %v3350 = vadd.f32 %v3346, %v3349
    %vm3351 = vweird.f32 %v3312
    %vm3352 = vweird.f32 %v3346
    %vm3353 = vmor %vm3351, %vm3352
    %v3354 = vsel %vm3353, %v3346, %v3350
    %v3355 = vand.u32 2147483647, %v3312
    %vm3356 = vcmp.eq.f32.partialorder %v3355, 8.507059e+37
    %v3357 = vand.u32 %v3312, 2147483648
    %v3358 = vor.u32 1.1754944e-38, %v3357
    %v3359 = vsel %vm3356, %v3358, %v3354
    %v3360 = vrcp.pop %v3313
    %v3361 = vmul.f32 %v3313, %v3360
    %v3362 = vsub.f32 1.0, %v3361
    %v3363 = vmul.f32 %v3360, %v3362
    %v3364 = vadd.f32 %v3360, %v3363
    %vm3365 = vweird.f32 %v3313
    %vm3366 = vweird.f32 %v3360
    %vm3367 = vmor %vm3365, %vm3366
    %v3368 = vsel %vm3367, %v3360, %v3364
    %v3369 = vand.u32 2147483647, %v3313
    %vm3370 = vcmp.eq.f32.partialorder %v3369, 8.507059e+37
    %v3371 = vand.u32 %v3313, 2147483648
    %v3372 = vor.u32 1.1754944e-38, %v3371
    %v3373 = vsel %vm3370, %v3372, %v3368
    %v3374 = vrcp.pop %v3314
    %v3375 = vmul.f32 %v3314, %v3374
    %v3376 = vsub.f32 1.0, %v3375
    %v3377 = vmul.f32 %v3374, %v3376
    %v3378 = vadd.f32 %v3374, %v3377
    %vm3379 = vweird.f32 %v3314
    %vm3380 = vweird.f32 %v3374
    %vm3381 = vmor %vm3379, %vm3380
    %v3382 = vsel %vm3381, %v3374, %v3378
    %v3383 = vand.u32 2147483647, %v3314
    %vm3384 = vcmp.eq.f32.partialorder %v3383, 8.507059e+37
    %v3385 = vand.u32 %v3314, 2147483648
    %v3386 = vor.u32 1.1754944e-38, %v3385
    %v3387 = vsel %vm3384, %v3386, %v3382
    %v3388 = vrcp.pop %v3315
    %v3389 = vmul.f32 %v3315, %v3388
    %v3390 = vsub.f32 1.0, %v3389
    %v3391 = vmul.f32 %v3388, %v3390
    %v3392 = vadd.f32 %v3388, %v3391
    %vm3393 = vweird.f32 %v3315
    %vm3394 = vweird.f32 %v3388
    %vm3395 = vmor %vm3393, %vm3394
    %v3396 = vsel %vm3395, %v3388, %v3392
    %v3397 = vand.u32 2147483647, %v3315
    %vm3398 = vcmp.eq.f32.partialorder %v3397, 8.507059e+37
    %v3399 = vand.u32 %v3315, 2147483648
    %v3400 = vor.u32 1.1754944e-38, %v3399
    %v3401 = vsel %vm3398, %v3400, %v3396
    %v3402 = vrcp.pop %v3316
    %v3403 = vmul.f32 %v3316, %v3402
    %v3404 = vsub.f32 1.0, %v3403
    %v3405 = vmul.f32 %v3402, %v3404
    %v3406 = vadd.f32 %v3402, %v3405
    %vm3407 = vweird.f32 %v3316
    %vm3408 = vweird.f32 %v3402
    %vm3409 = vmor %vm3407, %vm3408
    %v3410 = vsel %vm3409, %v3402, %v3406
    %v3411 = vand.u32 2147483647, %v3316
    %vm3412 = vcmp.eq.f32.partialorder %v3411, 8.507059e+37
    %v3413 = vand.u32 %v3316, 2147483648
    %v3414 = vor.u32 1.1754944e-38, %v3413
    %v3415 = vsel %vm3412, %v3414, %v3410
    %v3416 = vrcp.pop %v3317
    %v3417 = vmul.f32 %v3317, %v3416
    %v3418 = vsub.f32 1.0, %v3417
    %v3419 = vmul.f32 %v3416, %v3418
    %v3420 = vadd.f32 %v3416, %v3419
    %vm3421 = vweird.f32 %v3317
    %vm3422 = vweird.f32 %v3416
    %vm3423 = vmor %vm3421, %vm3422
    %v3424 = vsel %vm3423, %v3416, %v3420
    %v3425 = vand.u32 2147483647, %v3317
    %vm3426 = vcmp.eq.f32.partialorder %v3425, 8.507059e+37
    %v3427 = vand.u32 %v3317, 2147483648
    %v3428 = vor.u32 1.1754944e-38, %v3427
    %v3429 = vsel %vm3426, %v3428, %v3424
    %v3430 = vadd.f32 %v2870, 1e-05
    %v3431 = vadd.f32 %v2871, 1e-05
    %v3432 = vadd.f32 %v2872, 1e-05
    %v3433 = vadd.f32 %v2873, 1e-05
    %v3434 = vadd.f32 %v2874, 1e-05
    %v3435 = vadd.f32 %v2875, 1e-05
    %v3436 = vadd.f32 %v2876, 1e-05
    %v3437 = vadd.f32 %v2877, 1e-05
    %v3438 = vlog2.pop %v3430
    %v3439 = vmul.f32 %v3438, 0.6931472
    %v3440 = vlog2.pop %v3431
    %v3441 = vmul.f32 %v3440, 0.6931472
    %v3442 = vlog2.pop %v3432
    %v3443 = vmul.f32 %v3442, 0.6931472
    %v3444 = vlog2.pop %v3433
    %v3445 = vmul.f32 %v3444, 0.6931472
    %v3446 = vlog2.pop %v3434
    %v3447 = vmul.f32 %v3446, 0.6931472
    %v3448 = vlog2.pop %v3435
    %v3449 = vmul.f32 %v3448, 0.6931472
    %v3450 = vlog2.pop %v3436
    %v3451 = vmul.f32 %v3450, 0.6931472
    %v3452 = vlog2.pop %v3437
    %v3453 = vmul.f32 %v3452, 0.6931472
    %v3454 = vadd.f32 %v3439, 0.9189385
    %v3455 = vadd.f32 %v3441, 0.9189385
    %v3456 = vadd.f32 %v3443, 0.9189385
    %v3457 = vadd.f32 %v3445, 0.9189385
    %v3458 = vadd.f32 %v3447, 0.9189385
    %v3459 = vadd.f32 %v3449, 0.9189385
    %v3460 = vadd.f32 %v3451, 0.9189385
    %v3461 = vadd.f32 %v3453, 0.9189385
    %v3462 = vsub.f32 %v2078, %v2719
    %v3463 = vsub.f32 %v2079, %v2722
    %v3464 = vsub.f32 %v2080, %v2725
    %v3465 = vsub.f32 %v2081, %v2728
    %v3466 = vsub.f32 %v2082, %v2731
    %v3467 = vsub.f32 %v2083, %v2734
    %v3468 = vsub.f32 %v2084, %v2737
    %v3469 = vsub.f32 %v2085, %v2740
    %v3470 = vmul.f32 %v3462, %v3462
    %v3471 = vmul.f32 %v3463, %v3463
    %v3472 = vmul.f32 %v3464, %v3464
    %v3473 = vmul.f32 %v3465, %v3465
    %v3474 = vmul.f32 %v3466, %v3466
    %v3475 = vmul.f32 %v3467, %v3467
    %v3476 = vmul.f32 %v3468, %v3468
    %v3477 = vmul.f32 %v3469, %v3469
    %3486 = vrot.lane.b32.xlu0 %v3331, 116
    %v3487 = vpop.permute.xlu0 %3486
    %3488 = vrot.lane.b32.xlu0 %v3345, 116
    %v3489 = vpop.permute.xlu0 %3488
    %3490 = vrot.lane.b32.xlu0 %v3359, 116
    %v3491 = vpop.permute.xlu0 %3490
    %3492 = vrot.lane.b32.xlu0 %v3373, 116
    %v3493 = vpop.permute.xlu0 %3492
    %3494 = vrot.lane.b32.xlu0 %v3387, 116
    %v3495 = vpop.permute.xlu0 %3494
    %3496 = vrot.lane.b32.xlu0 %v3401, 116
    %v3497 = vpop.permute.xlu0 %3496
    %3498 = vrot.lane.b32.xlu0 %v3415, 116
    %v3499 = vpop.permute.xlu0 %3498
    %3500 = vrot.lane.b32.xlu0 %v3429, 116
    %v3501 = vpop.permute.xlu0 %3500
    %v3510 = vmul.f32 %v3470, %v3487
    %v3511 = vmul.f32 %v3471, %v3489
    %v3512 = vmul.f32 %v3472, %v3491
    %v3513 = vmul.f32 %v3473, %v3493
    %v3514 = vmul.f32 %v3474, %v3495
    %v3515 = vmul.f32 %v3475, %v3497
    %v3516 = vmul.f32 %v3476, %v3499
    %v3517 = vmul.f32 %v3477, %v3501
    %3526 = vrot.lane.b32.xlu0 %v3510, 12
    %v3527 = vpop.permute.xlu0 %3526
    %3528 = vrot.lane.b32.xlu0 %v3511, 12
    %v3529 = vpop.permute.xlu0 %3528
    %3530 = vrot.lane.b32.xlu0 %v3512, 12
    %v3531 = vpop.permute.xlu0 %3530
    %3532 = vrot.lane.b32.xlu0 %v3513, 12
    %v3533 = vpop.permute.xlu0 %3532
    %3534 = vrot.lane.b32.xlu0 %v3514, 12
    %v3535 = vpop.permute.xlu0 %3534
    %3536 = vrot.lane.b32.xlu0 %v3515, 12
    %v3537 = vpop.permute.xlu0 %3536
    %3538 = vrot.lane.b32.xlu0 %v3516, 12
    %v3539 = vpop.permute.xlu0 %3538
    %3540 = vrot.lane.b32.xlu0 %v3517, 12
    %v3541 = vpop.permute.xlu0 %3540
    %v3550 = vadd.f32 %v3454, %v3527
    %v3551 = vadd.f32 %v3455, %v3529
    %v3552 = vadd.f32 %v3456, %v3531
    %v3553 = vadd.f32 %v3457, %v3533
    %v3554 = vadd.f32 %v3458, %v3535
    %v3555 = vadd.f32 %v3459, %v3537
    %v3556 = vadd.f32 %v3460, %v3539
    %v3557 = vadd.f32 %v3461, %v3541
    %v3558 = vsub.f32 %v2719, %v2078
    %v3559 = vsub.f32 %v2722, %v2079
    %v3560 = vsub.f32 %v2725, %v2080
    %v3561 = vsub.f32 %v2728, %v2081
    %v3562 = vsub.f32 %v2731, %v2082
    %v3563 = vsub.f32 %v2734, %v2083
    %v3564 = vsub.f32 %v2737, %v2084
    %v3565 = vsub.f32 %v2740, %v2085
    %v3566 = vmul.f32 %v3558, %v3558
    %v3567 = vmul.f32 %v3559, %v3559
    %v3568 = vmul.f32 %v3560, %v3560
    %v3569 = vmul.f32 %v3561, %v3561
    %v3570 = vmul.f32 %v3562, %v3562
    %v3571 = vmul.f32 %v3563, %v3563
    %v3572 = vmul.f32 %v3564, %v3564
    %v3573 = vmul.f32 %v3565, %v3565
    %v3574 = vlaneseq
    %v3575 = vshrl.u32 %v3574, 7
    %v3576 = vadd.s32 %v3575, 8
    %v3577 = vadd.s32 %v3575, 16
    %v3578 = vadd.s32 %v3575, 24
    %v3579 = vadd.s32 %v3575, 32
    %v3580 = vadd.s32 %v3575, 40
    %v3581 = vadd.s32 %v3575, 48
    %v3582 = vadd.s32 %v3575, 56
    %v3583 = vand.u32 %v3575, 7
    %v3584 = vand.u32 %v3576, 7
    %v3585 = vand.u32 %v3577, 7
    %v3586 = vand.u32 %v3578, 7
    %v3587 = vand.u32 %v3579, 7
    %v3588 = vand.u32 %v3580, 7
    %v3589 = vand.u32 %v3581, 7
    %v3590 = vand.u32 %v3582, 7
    %vm3591 = vcmp.lt.s32.totalorder %v3583, 2
    %vm3592 = vcmp.lt.s32.totalorder %v3584, 2
    %vm3593 = vcmp.lt.s32.totalorder %v3585, 2
    %vm3594 = vcmp.lt.s32.totalorder %v3586, 2
    %vm3595 = vcmp.lt.s32.totalorder %v3587, 2
    %vm3596 = vcmp.lt.s32.totalorder %v3588, 2
    %vm3597 = vcmp.lt.s32.totalorder %v3589, 2
    %vm3598 = vcmp.lt.s32.totalorder %v3590, 2
    %v3599 = vsel %vm3591, 1, 0
    %v3600 = vsel %vm3592, 1, 0
    %v3601 = vsel %vm3593, 1, 0
    %v3602 = vsel %vm3594, 1, 0
    %v3603 = vsel %vm3595, 1, 0
    %v3604 = vsel %vm3596, 1, 0
    %v3605 = vsel %vm3597, 1, 0
    %v3606 = vsel %vm3598, 1, 0
    %v3607 = vcvt.s32.f32 %v3599
    %v3608 = vcvt.s32.f32 %v3600
    %v3609 = vcvt.s32.f32 %v3601
    %v3610 = vcvt.s32.f32 %v3602
    %v3611 = vcvt.s32.f32 %v3603
    %v3612 = vcvt.s32.f32 %v3604
    %v3613 = vcvt.s32.f32 %v3605
    %v3614 = vcvt.s32.f32 %v3606
    %v3615 = vmul.f32 %v3294, %v3607
    %v3616 = vmul.f32 %v3295, %v3608
    %v3617 = vmul.f32 %v3296, %v3609
    %v3618 = vmul.f32 %v3297, %v3610
    %v3619 = vmul.f32 %v3298, %v3611
    %v3620 = vmul.f32 %v3299, %v3612
    %v3621 = vmul.f32 %v3300, %v3613
    %v3622 = vmul.f32 %v3301, %v3614
    %3631 = vrot.lane.b32.xlu0 %v3615, 112
    %v3632 = vpop.permute.xlu0 %3631
    %3633 = vrot.lane.b32.xlu0 %v3616, 112
    %v3634 = vpop.permute.xlu0 %3633
    %3635 = vrot.lane.b32.xlu0 %v3617, 112
    %v3636 = vpop.permute.xlu0 %3635
    %3637 = vrot.lane.b32.xlu0 %v3618, 112
    %v3638 = vpop.permute.xlu0 %3637
    %3639 = vrot.lane.b32.xlu0 %v3619, 112
    %v3640 = vpop.permute.xlu0 %3639
    %3641 = vrot.lane.b32.xlu0 %v3620, 112
    %v3642 = vpop.permute.xlu0 %3641
    %3643 = vrot.lane.b32.xlu0 %v3621, 112
    %v3644 = vpop.permute.xlu0 %3643
    %3645 = vrot.lane.b32.xlu0 %v3622, 112
    %v3646 = vpop.permute.xlu0 %3645
    %v3655 = vsel %vm385, %v3632, 0.0
    %v3656 = vsel %vm385, %v3634, 0.0
    %v3657 = vadd.f32 %v3655, %v3656
    %v3658 = vsel %vm385, %v3636, 0.0
    %v3659 = vadd.f32 %v3657, %v3658
    %v3660 = vsel %vm385, %v3638, 0.0
    %v3661 = vadd.f32 %v3659, %v3660
    %v3662 = vsel %vm385, %v3640, 0.0
    %v3663 = vadd.f32 %v3661, %v3662
    %v3664 = vsel %vm385, %v3642, 0.0
    %v3665 = vadd.f32 %v3663, %v3664
    %v3666 = vsel %vm385, %v3644, 0.0
    %v3667 = vadd.f32 %v3665, %v3666
    %v3668 = vsel %vm385, %v3646, 0.0
    %v3669 = vadd.f32 %v3667, %v3668
    %3670 = vadd.xlane.f32.xlu0 %v3669
    %v3671 = vpop.xlane.xlu0 %3670
    %v3672 = vrot.slane %v3671, 4
    %v3673 = vadd.f32 %v3671, %v3672
    %v3674 = vrot.slane %v3673, 2
    %v3675 = vadd.f32 %v3673, %v3674
    %v3676 = vrot.slane %v3675, 1
    %v3677 = vadd.f32 %v3675, %v3676
    %s3678 = vtos %v3677
    %s3679 = smul.f32 %s3678, 0.5
    %s3680 = scalar_lea.smem [#allocation8], 0
    %3681 = sst [smem:[%s3680]] %s3679
    %v3682 = vmul.f32 %v3550, %v3607
    %v3683 = vmul.f32 %v3551, %v3608
    %v3684 = vmul.f32 %v3552, %v3609
    %v3685 = vmul.f32 %v3553, %v3610
    %v3686 = vmul.f32 %v3554, %v3611
    %v3687 = vmul.f32 %v3555, %v3612
    %v3688 = vmul.f32 %v3556, %v3613
    %v3689 = vmul.f32 %v3557, %v3614
    %3698 = vrot.lane.b32.xlu0 %v3682, 116
    %v3699 = vpop.permute.xlu0 %3698
    %3700 = vrot.lane.b32.xlu0 %v3683, 116
    %v3701 = vpop.permute.xlu0 %3700
    %3702 = vrot.lane.b32.xlu0 %v3684, 116
    %v3703 = vpop.permute.xlu0 %3702
    %3704 = vrot.lane.b32.xlu0 %v3685, 116
    %v3705 = vpop.permute.xlu0 %3704
    %3706 = vrot.lane.b32.xlu0 %v3686, 116
    %v3707 = vpop.permute.xlu0 %3706
    %3708 = vrot.lane.b32.xlu0 %v3687, 116
    %v3709 = vpop.permute.xlu0 %3708
    %3710 = vrot.lane.b32.xlu0 %v3688, 116
    %v3711 = vpop.permute.xlu0 %3710
    %3712 = vrot.lane.b32.xlu0 %v3689, 116
    %v3713 = vpop.permute.xlu0 %3712
    %v3722 = vsel %vm29, %v3699, 0.0
    %v3723 = vsel %vm29, %v3701, 0.0
    %v3724 = vadd.f32 %v3722, %v3723
    %v3725 = vsel %vm29, %v3703, 0.0
    %v3726 = vadd.f32 %v3724, %v3725
    %v3727 = vsel %vm29, %v3705, 0.0
    %v3728 = vadd.f32 %v3726, %v3727
    %v3729 = vsel %vm29, %v3707, 0.0
    %v3730 = vadd.f32 %v3728, %v3729
    %v3731 = vsel %vm29, %v3709, 0.0
    %v3732 = vadd.f32 %v3730, %v3731
    %v3733 = vsel %vm29, %v3711, 0.0
    %v3734 = vadd.f32 %v3732, %v3733
    %v3735 = vsel %vm29, %v3713, 0.0
    %v3736 = vadd.f32 %v3734, %v3735
    %3737 = vadd.xlane.f32.xlu0 %v3736
    %v3738 = vpop.xlane.xlu0 %3737
    %v3739 = vrot.slane %v3738, 4
    %v3740 = vadd.f32 %v3738, %v3739
    %v3741 = vrot.slane %v3740, 2
    %v3742 = vadd.f32 %v3740, %v3741
    %v3743 = vrot.slane %v3742, 1
    %v3744 = vadd.f32 %v3742, %v3743
    %s3745 = vtos %v3744
    %s3746 = scalar_lea.smem [#allocation8], 1
    %3747 = sst [smem:[%s3746]] %s3745
    %v3748 = vmul.f32 %v3566, %v3607
    %v3749 = vmul.f32 %v3567, %v3608
    %v3750 = vmul.f32 %v3568, %v3609
    %v3751 = vmul.f32 %v3569, %v3610
    %v3752 = vmul.f32 %v3570, %v3611
    %v3753 = vmul.f32 %v3571, %v3612
    %v3754 = vmul.f32 %v3572, %v3613
    %v3755 = vmul.f32 %v3573, %v3614
    %v3756 = vsel %vm29, %v3748, 0.0
    %v3757 = vsel %vm29, %v3749, 0.0
    %v3758 = vadd.f32 %v3756, %v3757
    %v3759 = vsel %vm29, %v3750, 0.0
    %v3760 = vadd.f32 %v3758, %v3759
    %v3761 = vsel %vm29, %v3751, 0.0
    %v3762 = vadd.f32 %v3760, %v3761
    %v3763 = vsel %vm29, %v3752, 0.0
    %v3764 = vadd.f32 %v3762, %v3763
    %v3765 = vsel %vm29, %v3753, 0.0
    %v3766 = vadd.f32 %v3764, %v3765
    %v3767 = vsel %vm29, %v3754, 0.0
    %v3768 = vadd.f32 %v3766, %v3767
    %v3769 = vsel %vm29, %v3755, 0.0
    %v3770 = vadd.f32 %v3768, %v3769
    %3771 = vadd.xlane.f32.xlu0 %v3770
    %v3772 = vpop.xlane.xlu0 %3771
    %v3773 = vrot.slane %v3772, 4
    %v3774 = vadd.f32 %v3772, %v3773
    %v3775 = vrot.slane %v3774, 2
    %v3776 = vadd.f32 %v3774, %v3775
    %v3777 = vrot.slane %v3776, 1
    %v3778 = vadd.f32 %v3776, %v3777
    %s3779 = vtos %v3778
    %s3780 = scalar_lea.smem [#allocation8], 2
    %3781 = sst [smem:[%s3780]] %s3779
    %3790 = vrot.lane.b32.xlu0 %v2046, 32
    %v3791 = vpop.permute.xlu0 %3790
    %3792 = vrot.lane.b32.xlu0 %v2047, 32
    %v3793 = vpop.permute.xlu0 %3792
    %3794 = vrot.lane.b32.xlu0 %v2048, 32
    %v3795 = vpop.permute.xlu0 %3794
    %3796 = vrot.lane.b32.xlu0 %v2049, 32
    %v3797 = vpop.permute.xlu0 %3796
    %3798 = vrot.lane.b32.xlu0 %v2050, 32
    %v3799 = vpop.permute.xlu0 %3798
    %3800 = vrot.lane.b32.xlu0 %v2051, 32
    %v3801 = vpop.permute.xlu0 %3800
    %3802 = vrot.lane.b32.xlu0 %v2052, 32
    %v3803 = vpop.permute.xlu0 %3802
    %3804 = vrot.lane.b32.xlu0 %v2053, 32
    %v3805 = vpop.permute.xlu0 %3804
    %3822 = vrot.lane.b32.xlu0 %v2054, 48
    %v3823 = vpop.permute.xlu0 %3822
    %3824 = vrot.lane.b32.xlu0 %v2055, 48
    %v3825 = vpop.permute.xlu0 %3824
    %3826 = vrot.lane.b32.xlu0 %v2056, 48
    %v3827 = vpop.permute.xlu0 %3826
    %3828 = vrot.lane.b32.xlu0 %v2057, 48
    %v3829 = vpop.permute.xlu0 %3828
    %3830 = vrot.lane.b32.xlu0 %v2058, 48
    %v3831 = vpop.permute.xlu0 %3830
    %3832 = vrot.lane.b32.xlu0 %v2059, 48
    %v3833 = vpop.permute.xlu0 %3832
    %3834 = vrot.lane.b32.xlu0 %v2060, 48
    %v3835 = vpop.permute.xlu0 %3834
    %3836 = vrot.lane.b32.xlu0 %v2061, 48
    %v3837 = vpop.permute.xlu0 %3836
    %3854 = vrot.lane.b32.xlu0 %v2062, 64
    %v3855 = vpop.permute.xlu0 %3854
    %3856 = vrot.lane.b32.xlu0 %v2063, 64
    %v3857 = vpop.permute.xlu0 %3856
    %3858 = vrot.lane.b32.xlu0 %v2064, 64
    %v3859 = vpop.permute.xlu0 %3858
    %3860 = vrot.lane.b32.xlu0 %v2065, 64
    %v3861 = vpop.permute.xlu0 %3860
    %3862 = vrot.lane.b32.xlu0 %v2066, 64
    %v3863 = vpop.permute.xlu0 %3862
    %3864 = vrot.lane.b32.xlu0 %v2067, 64
    %v3865 = vpop.permute.xlu0 %3864
    %3866 = vrot.lane.b32.xlu0 %v2068, 64
    %v3867 = vpop.permute.xlu0 %3866
    %3868 = vrot.lane.b32.xlu0 %v2069, 64
    %v3869 = vpop.permute.xlu0 %3868
    %3886 = vrot.lane.b32.xlu0 %v2719, 80
    %v3887 = vpop.permute.xlu0 %3886
    %3888 = vrot.lane.b32.xlu0 %v2722, 80
    %v3889 = vpop.permute.xlu0 %3888
    %3890 = vrot.lane.b32.xlu0 %v2725, 80
    %v3891 = vpop.permute.xlu0 %3890
    %3892 = vrot.lane.b32.xlu0 %v2728, 80
    %v3893 = vpop.permute.xlu0 %3892
    %3894 = vrot.lane.b32.xlu0 %v2731, 80
    %v3895 = vpop.permute.xlu0 %3894
    %3896 = vrot.lane.b32.xlu0 %v2734, 80
    %v3897 = vpop.permute.xlu0 %3896
    %3898 = vrot.lane.b32.xlu0 %v2737, 80
    %v3899 = vpop.permute.xlu0 %3898
    %3900 = vrot.lane.b32.xlu0 %v2740, 80
    %v3901 = vpop.permute.xlu0 %3900
    %3918 = vrot.lane.b32.xlu0 %v2870, 80
    %v3919 = vpop.permute.xlu0 %3918
    %3920 = vrot.lane.b32.xlu0 %v2871, 80
    %v3921 = vpop.permute.xlu0 %3920
    %3922 = vrot.lane.b32.xlu0 %v2872, 80
    %v3923 = vpop.permute.xlu0 %3922
    %3924 = vrot.lane.b32.xlu0 %v2873, 80
    %v3925 = vpop.permute.xlu0 %3924
    %3926 = vrot.lane.b32.xlu0 %v2874, 80
    %v3927 = vpop.permute.xlu0 %3926
    %3928 = vrot.lane.b32.xlu0 %v2875, 80
    %v3929 = vpop.permute.xlu0 %3928
    %3930 = vrot.lane.b32.xlu0 %v2876, 80
    %v3931 = vpop.permute.xlu0 %3930
    %3932 = vrot.lane.b32.xlu0 %v2877, 80
    %v3933 = vpop.permute.xlu0 %3932
    %3950 = vrot.lane.b32.xlu0 %v3294, 88
    %v3951 = vpop.permute.xlu0 %3950
    %3952 = vrot.lane.b32.xlu0 %v3295, 88
    %v3953 = vpop.permute.xlu0 %3952
    %3954 = vrot.lane.b32.xlu0 %v3296, 88
    %v3955 = vpop.permute.xlu0 %3954
    %3956 = vrot.lane.b32.xlu0 %v3297, 88
    %v3957 = vpop.permute.xlu0 %3956
    %3958 = vrot.lane.b32.xlu0 %v3298, 88
    %v3959 = vpop.permute.xlu0 %3958
    %3960 = vrot.lane.b32.xlu0 %v3299, 88
    %v3961 = vpop.permute.xlu0 %3960
    %3962 = vrot.lane.b32.xlu0 %v3300, 88
    %v3963 = vpop.permute.xlu0 %3962
    %3964 = vrot.lane.b32.xlu0 %v3301, 88
    %v3965 = vpop.permute.xlu0 %3964
    %v3974 = vsel %vm113, %v2038, %v3791
    %v3975 = vsel %vm113, %v2039, %v3793
    %v3976 = vsel %vm113, %v2040, %v3795
    %v3977 = vsel %vm113, %v2041, %v3797
    %v3978 = vsel %vm113, %v2042, %v3799
    %v3979 = vsel %vm113, %v2043, %v3801
    %v3980 = vsel %vm113, %v2044, %v3803
    %v3981 = vsel %vm113, %v2045, %v3805
    %vm3982 = vcmask 392192
    %v3983 = vsel %vm3982, %v3974, %v3823
    %v3984 = vsel %vm3982, %v3975, %v3825
    %v3985 = vsel %vm3982, %v3976, %v3827
    %v3986 = vsel %vm3982, %v3977, %v3829
    %v3987 = vsel %vm3982, %v3978, %v3831
    %v3988 = vsel %vm3982, %v3979, %v3833
    %v3989 = vsel %vm3982, %v3980, %v3835
    %v3990 = vsel %vm3982, %v3981, %v3837
    %vm3991 = vcmask 523264
    %v3992 = vsel %vm3991, %v3983, %v3855
    %v3993 = vsel %vm3991, %v3984, %v3857
    %v3994 = vsel %vm3991, %v3985, %v3859
    %v3995 = vsel %vm3991, %v3986, %v3861
    %v3996 = vsel %vm3991, %v3987, %v3863
    %v3997 = vsel %vm3991, %v3988, %v3865
    %v3998 = vsel %vm3991, %v3989, %v3867
    %v3999 = vsel %vm3991, %v3990, %v3869
    %vm4000 = vcmask 654336
    %v4001 = vsel %vm4000, %v3992, %v3887
    %v4002 = vsel %vm4000, %v3993, %v3889
    %v4003 = vsel %vm4000, %v3994, %v3891
    %v4004 = vsel %vm4000, %v3995, %v3893
    %v4005 = vsel %vm4000, %v3996, %v3895
    %v4006 = vsel %vm4000, %v3997, %v3897
    %v4007 = vsel %vm4000, %v3998, %v3899
    %v4008 = vsel %vm4000, %v3999, %v3901
    %vm4009 = vcmask 752640
    %v4010 = vsel %vm4009, %v4001, %v3919
    %v4011 = vsel %vm4009, %v4002, %v3921
    %v4012 = vsel %vm4009, %v4003, %v3923
    %v4013 = vsel %vm4009, %v4004, %v3925
    %v4014 = vsel %vm4009, %v4005, %v3927
    %v4015 = vsel %vm4009, %v4006, %v3929
    %v4016 = vsel %vm4009, %v4007, %v3931
    %v4017 = vsel %vm4009, %v4008, %v3933
    %vm4018 = vcmask 850944
    %v4019 = vsel %vm4018, %v4010, %v3951
    %v4020 = vsel %vm4018, %v4011, %v3953
    %v4021 = vsel %vm4018, %v4012, %v3955
    %v4022 = vsel %vm4018, %v4013, %v3957
    %v4023 = vsel %vm4018, %v4014, %v3959
    %v4024 = vsel %vm4018, %v4015, %v3961
    %v4025 = vsel %vm4018, %v4016, %v3963
    %v4026 = vsel %vm4018, %v4017, %v3965
    %vm4027 = vcmask 982016
    %v4028 = vsel %vm4027, %v4019, 0.0
    %v4029 = vsel %vm4027, %v4020, 0.0
    %v4030 = vsel %vm4027, %v4021, 0.0
    %v4031 = vsel %vm4027, %v4022, 0.0
    %v4032 = vsel %vm4027, %v4023, 0.0
    %v4033 = vsel %vm4027, %v4024, 0.0
    %v4034 = vsel %vm4027, %v4025, 0.0
    %v4035 = vsel %vm4027, %v4026, 0.0
    %4036 = vst [vmem:[%s3] sm:$0xff] %v4028
    %4037 = vst [vmem:[%s3 + $0x8] sm:$0xff] %v4029
    %4038 = vst [vmem:[%s3 + $0x10] sm:$0xff] %v4030
    %4039 = vst [vmem:[%s3 + $0x18] sm:$0xff] %v4031
    %4040 = vst [vmem:[%s3 + $0x20] sm:$0xff] %v4032
    %4041 = vst [vmem:[%s3 + $0x28] sm:$0xff] %v4033
    %4042 = vst [vmem:[%s3 + $0x30] sm:$0xff] %v4034
    %4043 = vst [vmem:[%s3 + $0x38] sm:$0xff] %v4035
    // Predicated region
    $region14: #{vrnn_forward.1} parent=1 // pred_check
      _
    $region15: #{vrnn_forward.1} parent=1 // pred_check_branch
      %4045 = sbr.rel (0) target = $region17
    $region16: #{vrnn_forward.1} parent=1 // pred_region
      _
    $region17: #{vrnn_forward.1} parent=1 // pred_fallthru
      _
    // Predicated region
    $region18: #{vrnn_forward.1} parent=1 // pred_check
      _
    $region19: #{vrnn_forward.1} parent=1 // pred_check_branch
      %4047 = sbr.rel (0) target = $region21
    $region20: #{vrnn_forward.1} parent=1 // pred_region
      %4049 = vsyncadd [#allocation9], 0
      %s4051 = sshll.u32 %s4, 4
      %s4052 = int_to_ptr.hbm [resolvable:$true] %s4051
      %4054 = dma.smem_to_hbm [#allocation8], 16, %s4052, [#allocation9]
    $region21: #{vrnn_forward.1} parent=1 // pred_fallthru
      _
    // Predicated region
    $region22: #{vrnn_forward.1} parent=1 // pred_check
      _
    $region23: #{vrnn_forward.1} parent=1 // pred_check_branch
      %4056 = sbr.rel (0) target = $region25
    $region24: #{vrnn_forward.1} parent=1 // pred_region
      _
    $region25: #{vrnn_forward.1} parent=1 // pred_fallthru
      _
    // Predicated region
    $region26: #{vrnn_forward.1} parent=1 // pred_check
      _
    $region27: #{vrnn_forward.1} parent=1 // pred_check_branch
      %4058 = sbr.rel (0) target = $region29
    $region28: #{vrnn_forward.1} parent=1 // pred_region
      %4060 = dma.done [#allocation9], 16
    $region29: #{vrnn_forward.1} parent=1 // pred_fallthru
      _
    %4061 = sfence
    %4062 = vsyncpa [#allocation9], 1

</llo_original>
